<compile_context>
chip_gen: v7x
topology: tpu7x:2x2x1
jax: 0.10.0
libtpu: 0.0.40
codegen_flags: <defaults>
</compile_context>

<pallas_src>
import jax
import jax.numpy as jnp
from jax.experimental import pallas as pl
from jax.experimental.pallas import tpu as pltpu


def _log_sigmoid(x):
    # single-branch, numerically stable log(sigmoid(x))
    return jnp.minimum(x, 0.0) - jnp.log1p(jnp.exp(-jnp.abs(x)))


def _w2v_kernel(tgt_ref, ctx_ref, neg_ref,        # SMEM int32 indices: (B,), (B,), (B*K,)
                wt_hbm, wc_hbm,                   # HBM tables: (V, E) each
                out_ref,                          # VMEM (1, 1) f32
                emb_t_buf, emb_c_buf, emb_n_buf,  # VMEM scratch: (B,E), (B,E), (K,B,E)
                sem_t, sem_c, sem_n):             # DMA semaphores: (B,), (B,), (B,K)
    B, E = emb_t_buf.shape
    K = emb_n_buf.shape[0]

    # ---- issue all row-gather DMAs (tables stay in HBM; only needed rows move) ----
    copies = []
    for b in range(B):
        cp = pltpu.make_async_copy(
            wt_hbm.at[pl.ds(tgt_ref[b], 1), :],
            emb_t_buf.at[pl.ds(b, 1), :],
            sem_t.at[b])
        cp.start()
        copies.append(cp)
    for b in range(B):
        cp = pltpu.make_async_copy(
            wc_hbm.at[pl.ds(ctx_ref[b], 1), :],
            emb_c_buf.at[pl.ds(b, 1), :],
            sem_c.at[b])
        cp.start()
        copies.append(cp)
    for b in range(B):
        for k in range(K):
            cp = pltpu.make_async_copy(
                wc_hbm.at[pl.ds(neg_ref[b * K + k], 1), :],
                emb_n_buf.at[k, pl.ds(b, 1), :],
                sem_n.at[b, k])
            cp.start()
            copies.append(cp)
    for cp in copies:
        cp.wait()

    # ---- compute: pure VPU / XLU / EUP, no MXU, no masking ----
    emb_t = emb_t_buf[...].astype(jnp.float32)                        # (B, E)
    emb_c = emb_c_buf[...].astype(jnp.float32)                        # (B, E)
    emb_n = emb_n_buf[...].astype(jnp.float32)                        # (K, B, E)

    # positive term
    pos_dot = jnp.sum(emb_t * emb_c, axis=1, keepdims=True)           # (B, 1)
    pos = jnp.sum(_log_sigmoid(pos_dot))

    # negative term: sum_k <emb_n[b,k], emb_t[b]> == <sum_k emb_n[b,k], emb_t[b]>
    emb_n_sum = jnp.sum(emb_n, axis=0)                                # (B, E)  (K VPU adds)
    neg_dot = jnp.sum(emb_n_sum * emb_t, axis=1, keepdims=True)       # (B, 1)
    neg = jnp.sum(_log_sigmoid(-neg_dot))

    out_ref[...] = jnp.reshape(-(pos + neg), (1, 1)).astype(jnp.float32)


def word2vec_loss(target_word, context_word, negative_example, w_target, w_context):
    """target_word/context_word: (B,) int; negative_example: (B, K) int;
       w_target/w_context: (V, E) float tables (kept in native dtype).
       Returns scalar float32 loss."""
    B = target_word.shape[0]
    K = negative_example.shape[1]
    V, E = w_target.shape

    tgt = target_word.reshape(B).astype(jnp.int32)
    ctx = context_word.reshape(B).astype(jnp.int32)
    neg = negative_example.reshape(B * K).astype(jnp.int32)

    out = pl.pallas_call(
        _w2v_kernel,
        out_shape=jax.ShapeDtypeStruct((1, 1), jnp.float32),
        in_specs=[
            pl.BlockSpec(memory_space=pltpu.MemorySpace.SMEM),   # target indices
            pl.BlockSpec(memory_space=pltpu.MemorySpace.SMEM),   # context indices
            pl.BlockSpec(memory_space=pltpu.MemorySpace.SMEM),   # negative indices
            pl.BlockSpec(memory_space=pl.ANY),                   # target table (stays in HBM)
            pl.BlockSpec(memory_space=pl.ANY),                   # context table (stays in HBM)
        ],
        out_specs=pl.BlockSpec(memory_space=pltpu.MemorySpace.VMEM),
        scratch_shapes=[
            pltpu.VMEM((B, E), w_target.dtype),    # gathered target rows
            pltpu.VMEM((B, E), w_context.dtype),   # gathered context rows
            pltpu.VMEM((K, B, E), w_context.dtype),  # gathered negative rows
            pltpu.SemaphoreType.DMA((B,)),
            pltpu.SemaphoreType.DMA((B,)),
            pltpu.SemaphoreType.DMA((B, K)),
        ],
    )(tgt, ctx, neg, w_target, w_context)
    return out[0, 0]


def _reference_loss(tgt, ctx, neg, wt, wc):
    emb_t = wt[tgt]                                    # (B, E)
    emb_c = wc[ctx]                                    # (B, E)
    pos = jnp.sum(jax.nn.log_sigmoid(jnp.sum(emb_t * emb_c, axis=1)))
    emb_n = wc[neg]                                    # (B, K, E)
    d = jnp.einsum("bke,be->bk", emb_n, emb_t)
    negterm = jnp.sum(jax.nn.log_sigmoid(-jnp.sum(d, axis=1)))
    return -(pos + negterm)


if __name__ == "__main__":
    key = jax.random.PRNGKey(0)
    k_wt, k_wc, k_t, k_c, k_n = jax.random.split(key, 5)

    VOCAB, EMB = 256, 128   # E multiple of 128 -> lane-dense rows / stores
    B, K = 8, 4

    # nn.Embedding default init: N(0, 1)
    w_target = jax.random.normal(k_wt, (VOCAB, EMB), dtype=jnp.float32)
    w_context = jax.random.normal(k_wc, (VOCAB, EMB), dtype=jnp.float32)

    target_word = jax.random.randint(k_t, (B,), 0, VOCAB, dtype=jnp.int32)
    context_word = jax.random.randint(k_c, (B,), 0, VOCAB, dtype=jnp.int32)
    negative_example = jax.random.randint(k_n, (B, K), 0, VOCAB, dtype=jnp.int32)

    loss = word2vec_loss(target_word, context_word, negative_example,
                         w_target, w_context)
    jax.block_until_ready(loss)

    ref = _reference_loss(target_word, context_word, negative_example,
                          w_target, w_context)
    assert jnp.allclose(loss, ref, rtol=1e-5, atol=1e-4), (loss, ref)

    print("KERNEL_OK")
</pallas_src>

<mosaic_0001>
module attributes {stable_mosaic.version = 11 : i64} {
  func.func @_w2v_kernel(%arg0: memref<8xi32, #tpu.memory_space<smem>>, %arg1: memref<8xi32, #tpu.memory_space<smem>>, %arg2: memref<32xi32, #tpu.memory_space<smem>>, %arg3: memref<256x128xf32, #tpu.memory_space<any>>, %arg4: memref<256x128xf32, #tpu.memory_space<any>>, %arg5: memref<1x1xf32, #tpu.memory_space<vmem>>, %arg6: memref<8x128xf32, #tpu.memory_space<vmem>>, %arg7: memref<8x128xf32, #tpu.memory_space<vmem>>, %arg8: memref<4x8x128xf32, #tpu.memory_space<vmem>>, %arg9: memref<8x!tpu.dma_semaphore, #tpu.memory_space<semaphore_mem>>, %arg10: memref<8x!tpu.dma_semaphore, #tpu.memory_space<semaphore_mem>>, %arg11: memref<8x4x!tpu.dma_semaphore, #tpu.memory_space<semaphore_mem>>) attributes {dimension_semantics = [], scalar_prefetch = 0 : i64, scratch_operands = 6 : i64, tpu.core_type = #tpu.core_type<tc>} {
    %c0 = arith.constant 0 : index
    %0 = memref.load %arg0[%c0] : memref<8xi32, #tpu.memory_space<smem>>
    %c0_i32 = arith.constant 0 : i32
    %c0_i32_0 = arith.constant 0 : i32
    %1 = tpu.memref_slice %arg3[%0, %c0_i32_0] : memref<256x128xf32, #tpu.memory_space<any>> -> memref<1x128xf32, #tpu.memory_space<any>>
    %c0_i32_1 = arith.constant 0 : i32
    %c0_i32_2 = arith.constant 0 : i32
    %2 = tpu.memref_slice %arg6[%c0_i32_1, %c0_i32_2] : memref<8x128xf32, #tpu.memory_space<vmem>> -> memref<1x128xf32, #tpu.memory_space<vmem>>
    %3 = tpu.memref_slice %arg9[%c0_i32] : memref<8x!tpu.dma_semaphore, #tpu.memory_space<semaphore_mem>> -> memref<1x!tpu.dma_semaphore, #tpu.memory_space<semaphore_mem>>
    %4 = tpu.memref_squeeze %3 : memref<1x!tpu.dma_semaphore, #tpu.memory_space<semaphore_mem>> -> memref<!tpu.dma_semaphore, #tpu.memory_space<semaphore_mem>>
    tpu.enqueue_dma source(%1 : memref<1x128xf32, #tpu.memory_space<any>>) target(%2 : memref<1x128xf32, #tpu.memory_space<vmem>>) target_semaphore(%4 : memref<!tpu.dma_semaphore, #tpu.memory_space<semaphore_mem>>)
    %c1 = arith.constant 1 : index
    %5 = memref.load %arg0[%c1] : memref<8xi32, #tpu.memory_space<smem>>
    %c1_i32 = arith.constant 1 : i32
    %c0_i32_3 = arith.constant 0 : i32
    %6 = tpu.memref_slice %arg3[%5, %c0_i32_3] : memref<256x128xf32, #tpu.memory_space<any>> -> memref<1x128xf32, #tpu.memory_space<any>>
    %c1_i32_4 = arith.constant 1 : i32
    %c0_i32_5 = arith.constant 0 : i32
    %7 = tpu.memref_slice %arg6[%c1_i32_4, %c0_i32_5] : memref<8x128xf32, #tpu.memory_space<vmem>> -> memref<1x128xf32, #tpu.memory_space<vmem>>
    %8 = tpu.memref_slice %arg9[%c1_i32] : memref<8x!tpu.dma_semaphore, #tpu.memory_space<semaphore_mem>> -> memref<1x!tpu.dma_semaphore, #tpu.memory_space<semaphore_mem>>
    %9 = tpu.memref_squeeze %8 : memref<1x!tpu.dma_semaphore, #tpu.memory_space<semaphore_mem>> -> memref<!tpu.dma_semaphore, #tpu.memory_space<semaphore_mem>>
    tpu.enqueue_dma source(%6 : memref<1x128xf32, #tpu.memory_space<any>>) target(%7 : memref<1x128xf32, #tpu.memory_space<vmem>>) target_semaphore(%9 : memref<!tpu.dma_semaphore, #tpu.memory_space<semaphore_mem>>)
    %c2 = arith.constant 2 : index
    %10 = memref.load %arg0[%c2] : memref<8xi32, #tpu.memory_space<smem>>
    %c2_i32 = arith.constant 2 : i32
    %c0_i32_6 = arith.constant 0 : i32
    %11 = tpu.memref_slice %arg3[%10, %c0_i32_6] : memref<256x128xf32, #tpu.memory_space<any>> -> memref<1x128xf32, #tpu.memory_space<any>>
    %c2_i32_7 = arith.constant 2 : i32
    %c0_i32_8 = arith.constant 0 : i32
    %12 = tpu.memref_slice %arg6[%c2_i32_7, %c0_i32_8] : memref<8x128xf32, #tpu.memory_space<vmem>> -> memref<1x128xf32, #tpu.memory_space<vmem>>
    %13 = tpu.memref_slice %arg9[%c2_i32] : memref<8x!tpu.dma_semaphore, #tpu.memory_space<semaphore_mem>> -> memref<1x!tpu.dma_semaphore, #tpu.memory_space<semaphore_mem>>
    %14 = tpu.memref_squeeze %13 : memref<1x!tpu.dma_semaphore, #tpu.memory_space<semaphore_mem>> -> memref<!tpu.dma_semaphore, #tpu.memory_space<semaphore_mem>>
    tpu.enqueue_dma source(%11 : memref<1x128xf32, #tpu.memory_space<any>>) target(%12 : memref<1x128xf32, #tpu.memory_space<vmem>>) target_semaphore(%14 : memref<!tpu.dma_semaphore, #tpu.memory_space<semaphore_mem>>)
    %c3 = arith.constant 3 : index
    %15 = memref.load %arg0[%c3] : memref<8xi32, #tpu.memory_space<smem>>
    %c3_i32 = arith.constant 3 : i32
    %c0_i32_9 = arith.constant 0 : i32
    %16 = tpu.memref_slice %arg3[%15, %c0_i32_9] : memref<256x128xf32, #tpu.memory_space<any>> -> memref<1x128xf32, #tpu.memory_space<any>>
    %c3_i32_10 = arith.constant 3 : i32
    %c0_i32_11 = arith.constant 0 : i32
    %17 = tpu.memref_slice %arg6[%c3_i32_10, %c0_i32_11] : memref<8x128xf32, #tpu.memory_space<vmem>> -> memref<1x128xf32, #tpu.memory_space<vmem>>
    %18 = tpu.memref_slice %arg9[%c3_i32] : memref<8x!tpu.dma_semaphore, #tpu.memory_space<semaphore_mem>> -> memref<1x!tpu.dma_semaphore, #tpu.memory_space<semaphore_mem>>
    %19 = tpu.memref_squeeze %18 : memref<1x!tpu.dma_semaphore, #tpu.memory_space<semaphore_mem>> -> memref<!tpu.dma_semaphore, #tpu.memory_space<semaphore_mem>>
    tpu.enqueue_dma source(%16 : memref<1x128xf32, #tpu.memory_space<any>>) target(%17 : memref<1x128xf32, #tpu.memory_space<vmem>>) target_semaphore(%19 : memref<!tpu.dma_semaphore, #tpu.memory_space<semaphore_mem>>)
    %c4 = arith.constant 4 : index
    %20 = memref.load %arg0[%c4] : memref<8xi32, #tpu.memory_space<smem>>
    %c4_i32 = arith.constant 4 : i32
    %c0_i32_12 = arith.constant 0 : i32
    %21 = tpu.memref_slice %arg3[%20, %c0_i32_12] : memref<256x128xf32, #tpu.memory_space<any>> -> memref<1x128xf32, #tpu.memory_space<any>>
    %c4_i32_13 = arith.constant 4 : i32
    %c0_i32_14 = arith.constant 0 : i32
    %22 = tpu.memref_slice %arg6[%c4_i32_13, %c0_i32_14] : memref<8x128xf32, #tpu.memory_space<vmem>> -> memref<1x128xf32, #tpu.memory_space<vmem>>
    %23 = tpu.memref_slice %arg9[%c4_i32] : memref<8x!tpu.dma_semaphore, #tpu.memory_space<semaphore_mem>> -> memref<1x!tpu.dma_semaphore, #tpu.memory_space<semaphore_mem>>
    %24 = tpu.memref_squeeze %23 : memref<1x!tpu.dma_semaphore, #tpu.memory_space<semaphore_mem>> -> memref<!tpu.dma_semaphore, #tpu.memory_space<semaphore_mem>>
    tpu.enqueue_dma source(%21 : memref<1x128xf32, #tpu.memory_space<any>>) target(%22 : memref<1x128xf32, #tpu.memory_space<vmem>>) target_semaphore(%24 : memref<!tpu.dma_semaphore, #tpu.memory_space<semaphore_mem>>)
    %c5 = arith.constant 5 : index
    %25 = memref.load %arg0[%c5] : memref<8xi32, #tpu.memory_space<smem>>
    %c5_i32 = arith.constant 5 : i32
    %c0_i32_15 = arith.constant 0 : i32
    %26 = tpu.memref_slice %arg3[%25, %c0_i32_15] : memref<256x128xf32, #tpu.memory_space<any>> -> memref<1x128xf32, #tpu.memory_space<any>>
    %c5_i32_16 = arith.constant 5 : i32
    %c0_i32_17 = arith.constant 0 : i32
    %27 = tpu.memref_slice %arg6[%c5_i32_16, %c0_i32_17] : memref<8x128xf32, #tpu.memory_space<vmem>> -> memref<1x128xf32, #tpu.memory_space<vmem>>
    %28 = tpu.memref_slice %arg9[%c5_i32] : memref<8x!tpu.dma_semaphore, #tpu.memory_space<semaphore_mem>> -> memref<1x!tpu.dma_semaphore, #tpu.memory_space<semaphore_mem>>
    %29 = tpu.memref_squeeze %28 : memref<1x!tpu.dma_semaphore, #tpu.memory_space<semaphore_mem>> -> memref<!tpu.dma_semaphore, #tpu.memory_space<semaphore_mem>>
    tpu.enqueue_dma source(%26 : memref<1x128xf32, #tpu.memory_space<any>>) target(%27 : memref<1x128xf32, #tpu.memory_space<vmem>>) target_semaphore(%29 : memref<!tpu.dma_semaphore, #tpu.memory_space<semaphore_mem>>)
    %c6 = arith.constant 6 : index
    %30 = memref.load %arg0[%c6] : memref<8xi32, #tpu.memory_space<smem>>
    %c6_i32 = arith.constant 6 : i32
    %c0_i32_18 = arith.constant 0 : i32
    %31 = tpu.memref_slice %arg3[%30, %c0_i32_18] : memref<256x128xf32, #tpu.memory_space<any>> -> memref<1x128xf32, #tpu.memory_space<any>>
    %c6_i32_19 = arith.constant 6 : i32
    %c0_i32_20 = arith.constant 0 : i32
    %32 = tpu.memref_slice %arg6[%c6_i32_19, %c0_i32_20] : memref<8x128xf32, #tpu.memory_space<vmem>> -> memref<1x128xf32, #tpu.memory_space<vmem>>
    %33 = tpu.memref_slice %arg9[%c6_i32] : memref<8x!tpu.dma_semaphore, #tpu.memory_space<semaphore_mem>> -> memref<1x!tpu.dma_semaphore, #tpu.memory_space<semaphore_mem>>
    %34 = tpu.memref_squeeze %33 : memref<1x!tpu.dma_semaphore, #tpu.memory_space<semaphore_mem>> -> memref<!tpu.dma_semaphore, #tpu.memory_space<semaphore_mem>>
    tpu.enqueue_dma source(%31 : memref<1x128xf32, #tpu.memory_space<any>>) target(%32 : memref<1x128xf32, #tpu.memory_space<vmem>>) target_semaphore(%34 : memref<!tpu.dma_semaphore, #tpu.memory_space<semaphore_mem>>)
    %c7 = arith.constant 7 : index
    %35 = memref.load %arg0[%c7] : memref<8xi32, #tpu.memory_space<smem>>
    %c7_i32 = arith.constant 7 : i32
    %c0_i32_21 = arith.constant 0 : i32
    %36 = tpu.memref_slice %arg3[%35, %c0_i32_21] : memref<256x128xf32, #tpu.memory_space<any>> -> memref<1x128xf32, #tpu.memory_space<any>>
    %c7_i32_22 = arith.constant 7 : i32
    %c0_i32_23 = arith.constant 0 : i32
    %37 = tpu.memref_slice %arg6[%c7_i32_22, %c0_i32_23] : memref<8x128xf32, #tpu.memory_space<vmem>> -> memref<1x128xf32, #tpu.memory_space<vmem>>
    %38 = tpu.memref_slice %arg9[%c7_i32] : memref<8x!tpu.dma_semaphore, #tpu.memory_space<semaphore_mem>> -> memref<1x!tpu.dma_semaphore, #tpu.memory_space<semaphore_mem>>
    %39 = tpu.memref_squeeze %38 : memref<1x!tpu.dma_semaphore, #tpu.memory_space<semaphore_mem>> -> memref<!tpu.dma_semaphore, #tpu.memory_space<semaphore_mem>>
    tpu.enqueue_dma source(%36 : memref<1x128xf32, #tpu.memory_space<any>>) target(%37 : memref<1x128xf32, #tpu.memory_space<vmem>>) target_semaphore(%39 : memref<!tpu.dma_semaphore, #tpu.memory_space<semaphore_mem>>)
    %c0_24 = arith.constant 0 : index
    %40 = memref.load %arg1[%c0_24] : memref<8xi32, #tpu.memory_space<smem>>
    %c0_i32_25 = arith.constant 0 : i32
    %c0_i32_26 = arith.constant 0 : i32
    %41 = tpu.memref_slice %arg4[%40, %c0_i32_26] : memref<256x128xf32, #tpu.memory_space<any>> -> memref<1x128xf32, #tpu.memory_space<any>>
    %c0_i32_27 = arith.constant 0 : i32
    %c0_i32_28 = arith.constant 0 : i32
    %42 = tpu.memref_slice %arg7[%c0_i32_27, %c0_i32_28] : memref<8x128xf32, #tpu.memory_space<vmem>> -> memref<1x128xf32, #tpu.memory_space<vmem>>
    %43 = tpu.memref_slice %arg10[%c0_i32_25] : memref<8x!tpu.dma_semaphore, #tpu.memory_space<semaphore_mem>> -> memref<1x!tpu.dma_semaphore, #tpu.memory_space<semaphore_mem>>
    %44 = tpu.memref_squeeze %43 : memref<1x!tpu.dma_semaphore, #tpu.memory_space<semaphore_mem>> -> memref<!tpu.dma_semaphore, #tpu.memory_space<semaphore_mem>>
    tpu.enqueue_dma source(%41 : memref<1x128xf32, #tpu.memory_space<any>>) target(%42 : memref<1x128xf32, #tpu.memory_space<vmem>>) target_semaphore(%44 : memref<!tpu.dma_semaphore, #tpu.memory_space<semaphore_mem>>)
    %c1_29 = arith.constant 1 : index
    %45 = memref.load %arg1[%c1_29] : memref<8xi32, #tpu.memory_space<smem>>
    %c1_i32_30 = arith.constant 1 : i32
    %c0_i32_31 = arith.constant 0 : i32
    %46 = tpu.memref_slice %arg4[%45, %c0_i32_31] : memref<256x128xf32, #tpu.memory_space<any>> -> memref<1x128xf32, #tpu.memory_space<any>>
    %c1_i32_32 = arith.constant 1 : i32
    %c0_i32_33 = arith.constant 0 : i32
    %47 = tpu.memref_slice %arg7[%c1_i32_32, %c0_i32_33] : memref<8x128xf32, #tpu.memory_space<vmem>> -> memref<1x128xf32, #tpu.memory_space<vmem>>
    %48 = tpu.memref_slice %arg10[%c1_i32_30] : memref<8x!tpu.dma_semaphore, #tpu.memory_space<semaphore_mem>> -> memref<1x!tpu.dma_semaphore, #tpu.memory_space<semaphore_mem>>
    %49 = tpu.memref_squeeze %48 : memref<1x!tpu.dma_semaphore, #tpu.memory_space<semaphore_mem>> -> memref<!tpu.dma_semaphore, #tpu.memory_space<semaphore_mem>>
    tpu.enqueue_dma source(%46 : memref<1x128xf32, #tpu.memory_space<any>>) target(%47 : memref<1x128xf32, #tpu.memory_space<vmem>>) target_semaphore(%49 : memref<!tpu.dma_semaphore, #tpu.memory_space<semaphore_mem>>)
    %c2_34 = arith.constant 2 : index
    %50 = memref.load %arg1[%c2_34] : memref<8xi32, #tpu.memory_space<smem>>
    %c2_i32_35 = arith.constant 2 : i32
    %c0_i32_36 = arith.constant 0 : i32
    %51 = tpu.memref_slice %arg4[%50, %c0_i32_36] : memref<256x128xf32, #tpu.memory_space<any>> -> memref<1x128xf32, #tpu.memory_space<any>>
    %c2_i32_37 = arith.constant 2 : i32
    %c0_i32_38 = arith.constant 0 : i32
    %52 = tpu.memref_slice %arg7[%c2_i32_37, %c0_i32_38] : memref<8x128xf32, #tpu.memory_space<vmem>> -> memref<1x128xf32, #tpu.memory_space<vmem>>
    %53 = tpu.memref_slice %arg10[%c2_i32_35] : memref<8x!tpu.dma_semaphore, #tpu.memory_space<semaphore_mem>> -> memref<1x!tpu.dma_semaphore, #tpu.memory_space<semaphore_mem>>
    %54 = tpu.memref_squeeze %53 : memref<1x!tpu.dma_semaphore, #tpu.memory_space<semaphore_mem>> -> memref<!tpu.dma_semaphore, #tpu.memory_space<semaphore_mem>>
    tpu.enqueue_dma source(%51 : memref<1x128xf32, #tpu.memory_space<any>>) target(%52 : memref<1x128xf32, #tpu.memory_space<vmem>>) target_semaphore(%54 : memref<!tpu.dma_semaphore, #tpu.memory_space<semaphore_mem>>)
    %c3_39 = arith.constant 3 : index
    %55 = memref.load %arg1[%c3_39] : memref<8xi32, #tpu.memory_space<smem>>
    %c3_i32_40 = arith.constant 3 : i32
    %c0_i32_41 = arith.constant 0 : i32
    %56 = tpu.memref_slice %arg4[%55, %c0_i32_41] : memref<256x128xf32, #tpu.memory_space<any>> -> memref<1x128xf32, #tpu.memory_space<any>>
    %c3_i32_42 = arith.constant 3 : i32
    %c0_i32_43 = arith.constant 0 : i32
    %57 = tpu.memref_slice %arg7[%c3_i32_42, %c0_i32_43] : memref<8x128xf32, #tpu.memory_space<vmem>> -> memref<1x128xf32, #tpu.memory_space<vmem>>
    %58 = tpu.memref_slice %arg10[%c3_i32_40] : memref<8x!tpu.dma_semaphore, #tpu.memory_space<semaphore_mem>> -> memref<1x!tpu.dma_semaphore, #tpu.memory_space<semaphore_mem>>
    %59 = tpu.memref_squeeze %58 : memref<1x!tpu.dma_semaphore, #tpu.memory_space<semaphore_mem>> -> memref<!tpu.dma_semaphore, #tpu.memory_space<semaphore_mem>>
    tpu.enqueue_dma source(%56 : memref<1x128xf32, #tpu.memory_space<any>>) target(%57 : memref<1x128xf32, #tpu.memory_space<vmem>>) target_semaphore(%59 : memref<!tpu.dma_semaphore, #tpu.memory_space<semaphore_mem>>)
    %c4_44 = arith.constant 4 : index
    %60 = memref.load %arg1[%c4_44] : memref<8xi32, #tpu.memory_space<smem>>
    %c4_i32_45 = arith.constant 4 : i32
    %c0_i32_46 = arith.constant 0 : i32
    %61 = tpu.memref_slice %arg4[%60, %c0_i32_46] : memref<256x128xf32, #tpu.memory_space<any>> -> memref<1x128xf32, #tpu.memory_space<any>>
    %c4_i32_47 = arith.constant 4 : i32
    %c0_i32_48 = arith.constant 0 : i32
    %62 = tpu.memref_slice %arg7[%c4_i32_47, %c0_i32_48] : memref<8x128xf32, #tpu.memory_space<vmem>> -> memref<1x128xf32, #tpu.memory_space<vmem>>
    %63 = tpu.memref_slice %arg10[%c4_i32_45] : memref<8x!tpu.dma_semaphore, #tpu.memory_space<semaphore_mem>> -> memref<1x!tpu.dma_semaphore, #tpu.memory_space<semaphore_mem>>
    %64 = tpu.memref_squeeze %63 : memref<1x!tpu.dma_semaphore, #tpu.memory_space<semaphore_mem>> -> memref<!tpu.dma_semaphore, #tpu.memory_space<semaphore_mem>>
    tpu.enqueue_dma source(%61 : memref<1x128xf32, #tpu.memory_space<any>>) target(%62 : memref<1x128xf32, #tpu.memory_space<vmem>>) target_semaphore(%64 : memref<!tpu.dma_semaphore, #tpu.memory_space<semaphore_mem>>)
    %c5_49 = arith.constant 5 : index
    %65 = memref.load %arg1[%c5_49] : memref<8xi32, #tpu.memory_space<smem>>
    %c5_i32_50 = arith.constant 5 : i32
    %c0_i32_51 = arith.constant 0 : i32
    %66 = tpu.memref_slice %arg4[%65, %c0_i32_51] : memref<256x128xf32, #tpu.memory_space<any>> -> memref<1x128xf32, #tpu.memory_space<any>>
    %c5_i32_52 = arith.constant 5 : i32
    %c0_i32_53 = arith.constant 0 : i32
    %67 = tpu.memref_slice %arg7[%c5_i32_52, %c0_i32_53] : memref<8x128xf32, #tpu.memory_space<vmem>> -> memref<1x128xf32, #tpu.memory_space<vmem>>
    %68 = tpu.memref_slice %arg10[%c5_i32_50] : memref<8x!tpu.dma_semaphore, #tpu.memory_space<semaphore_mem>> -> memref<1x!tpu.dma_semaphore, #tpu.memory_space<semaphore_mem>>
    %69 = tpu.memref_squeeze %68 : memref<1x!tpu.dma_semaphore, #tpu.memory_space<semaphore_mem>> -> memref<!tpu.dma_semaphore, #tpu.memory_space<semaphore_mem>>
    tpu.enqueue_dma source(%66 : memref<1x128xf32, #tpu.memory_space<any>>) target(%67 : memref<1x128xf32, #tpu.memory_space<vmem>>) target_semaphore(%69 : memref<!tpu.dma_semaphore, #tpu.memory_space<semaphore_mem>>)
    %c6_54 = arith.constant 6 : index
    %70 = memref.load %arg1[%c6_54] : memref<8xi32, #tpu.memory_space<smem>>
    %c6_i32_55 = arith.constant 6 : i32
    %c0_i32_56 = arith.constant 0 : i32
    %71 = tpu.memref_slice %arg4[%70, %c0_i32_56] : memref<256x128xf32, #tpu.memory_space<any>> -> memref<1x128xf32, #tpu.memory_space<any>>
    %c6_i32_57 = arith.constant 6 : i32
    %c0_i32_58 = arith.constant 0 : i32
    %72 = tpu.memref_slice %arg7[%c6_i32_57, %c0_i32_58] : memref<8x128xf32, #tpu.memory_space<vmem>> -> memref<1x128xf32, #tpu.memory_space<vmem>>
    %73 = tpu.memref_slice %arg10[%c6_i32_55] : memref<8x!tpu.dma_semaphore, #tpu.memory_space<semaphore_mem>> -> memref<1x!tpu.dma_semaphore, #tpu.memory_space<semaphore_mem>>
    %74 = tpu.memref_squeeze %73 : memref<1x!tpu.dma_semaphore, #tpu.memory_space<semaphore_mem>> -> memref<!tpu.dma_semaphore, #tpu.memory_space<semaphore_mem>>
    tpu.enqueue_dma source(%71 : memref<1x128xf32, #tpu.memory_space<any>>) target(%72 : memref<1x128xf32, #tpu.memory_space<vmem>>) target_semaphore(%74 : memref<!tpu.dma_semaphore, #tpu.memory_space<semaphore_mem>>)
    %c7_59 = arith.constant 7 : index
    %75 = memref.load %arg1[%c7_59] : memref<8xi32, #tpu.memory_space<smem>>
    %c7_i32_60 = arith.constant 7 : i32
    %c0_i32_61 = arith.constant 0 : i32
    %76 = tpu.memref_slice %arg4[%75, %c0_i32_61] : memref<256x128xf32, #tpu.memory_space<any>> -> memref<1x128xf32, #tpu.memory_space<any>>
    %c7_i32_62 = arith.constant 7 : i32
    %c0_i32_63 = arith.constant 0 : i32
    %77 = tpu.memref_slice %arg7[%c7_i32_62, %c0_i32_63] : memref<8x128xf32, #tpu.memory_space<vmem>> -> memref<1x128xf32, #tpu.memory_space<vmem>>
    %78 = tpu.memref_slice %arg10[%c7_i32_60] : memref<8x!tpu.dma_semaphore, #tpu.memory_space<semaphore_mem>> -> memref<1x!tpu.dma_semaphore, #tpu.memory_space<semaphore_mem>>
    %79 = tpu.memref_squeeze %78 : memref<1x!tpu.dma_semaphore, #tpu.memory_space<semaphore_mem>> -> memref<!tpu.dma_semaphore, #tpu.memory_space<semaphore_mem>>
    tpu.enqueue_dma source(%76 : memref<1x128xf32, #tpu.memory_space<any>>) target(%77 : memref<1x128xf32, #tpu.memory_space<vmem>>) target_semaphore(%79 : memref<!tpu.dma_semaphore, #tpu.memory_space<semaphore_mem>>)
    %c0_64 = arith.constant 0 : index
    %80 = memref.load %arg2[%c0_64] : memref<32xi32, #tpu.memory_space<smem>>
    %c0_i32_65 = arith.constant 0 : i32
    %c0_i32_66 = arith.constant 0 : i32
    %c0_i32_67 = arith.constant 0 : i32
    %c0_i32_68 = arith.constant 0 : i32
    %81 = tpu.memref_slice %arg4[%80, %c0_i32_68] : memref<256x128xf32, #tpu.memory_space<any>> -> memref<1x128xf32, #tpu.memory_space<any>>
    %c0_i32_69 = arith.constant 0 : i32
    %c0_i32_70 = arith.constant 0 : i32
    %82 = tpu.memref_slice %arg8[%c0_i32_65, %c0_i32_69, %c0_i32_70] : memref<4x8x128xf32, #tpu.memory_space<vmem>> -> memref<1x1x128xf32, #tpu.memory_space<vmem>>
    %83 = tpu.memref_squeeze %82 : memref<1x1x128xf32, #tpu.memory_space<vmem>> -> memref<1x128xf32, #tpu.memory_space<vmem>>
    %84 = tpu.memref_slice %arg11[%c0_i32_66, %c0_i32_67] : memref<8x4x!tpu.dma_semaphore, #tpu.memory_space<semaphore_mem>> -> memref<1x1x!tpu.dma_semaphore, #tpu.memory_space<semaphore_mem>>
    %85 = tpu.memref_squeeze %84 : memref<1x1x!tpu.dma_semaphore, #tpu.memory_space<semaphore_mem>> -> memref<!tpu.dma_semaphore, #tpu.memory_space<semaphore_mem>>
    tpu.enqueue_dma source(%81 : memref<1x128xf32, #tpu.memory_space<any>>) target(%83 : memref<1x128xf32, #tpu.memory_space<vmem>>) target_semaphore(%85 : memref<!tpu.dma_semaphore, #tpu.memory_space<semaphore_mem>>)
    %c1_71 = arith.constant 1 : index
    %86 = memref.load %arg2[%c1_71] : memref<32xi32, #tpu.memory_space<smem>>
    %c1_i32_72 = arith.constant 1 : i32
    %c0_i32_73 = arith.constant 0 : i32
    %c1_i32_74 = arith.constant 1 : i32
    %c0_i32_75 = arith.constant 0 : i32
    %87 = tpu.memref_slice %arg4[%86, %c0_i32_75] : memref<256x128xf32, #tpu.memory_space<any>> -> memref<1x128xf32, #tpu.memory_space<any>>
    %c0_i32_76 = arith.constant 0 : i32
    %c0_i32_77 = arith.constant 0 : i32
    %88 = tpu.memref_slice %arg8[%c1_i32_72, %c0_i32_76, %c0_i32_77] : memref<4x8x128xf32, #tpu.memory_space<vmem>> -> memref<1x1x128xf32, #tpu.memory_space<vmem>>
    %89 = tpu.memref_squeeze %88 : memref<1x1x128xf32, #tpu.memory_space<vmem>> -> memref<1x128xf32, #tpu.memory_space<vmem>>
    %90 = tpu.memref_slice %arg11[%c0_i32_73, %c1_i32_74] : memref<8x4x!tpu.dma_semaphore, #tpu.memory_space<semaphore_mem>> -> memref<1x1x!tpu.dma_semaphore, #tpu.memory_space<semaphore_mem>>
    %91 = tpu.memref_squeeze %90 : memref<1x1x!tpu.dma_semaphore, #tpu.memory_space<semaphore_mem>> -> memref<!tpu.dma_semaphore, #tpu.memory_space<semaphore_mem>>
    tpu.enqueue_dma source(%87 : memref<1x128xf32, #tpu.memory_space<any>>) target(%89 : memref<1x128xf32, #tpu.memory_space<vmem>>) target_semaphore(%91 : memref<!tpu.dma_semaphore, #tpu.memory_space<semaphore_mem>>)
    %c2_78 = arith.constant 2 : index
    %92 = memref.load %arg2[%c2_78] : memref<32xi32, #tpu.memory_space<smem>>
    %c2_i32_79 = arith.constant 2 : i32
    %c0_i32_80 = arith.constant 0 : i32
    %c2_i32_81 = arith.constant 2 : i32
    %c0_i32_82 = arith.constant 0 : i32
    %93 = tpu.memref_slice %arg4[%92, %c0_i32_82] : memref<256x128xf32, #tpu.memory_space<any>> -> memref<1x128xf32, #tpu.memory_space<any>>
    %c0_i32_83 = arith.constant 0 : i32
    %c0_i32_84 = arith.constant 0 : i32
    %94 = tpu.memref_slice %arg8[%c2_i32_79, %c0_i32_83, %c0_i32_84] : memref<4x8x128xf32, #tpu.memory_space<vmem>> -> memref<1x1x128xf32, #tpu.memory_space<vmem>>
    %95 = tpu.memref_squeeze %94 : memref<1x1x128xf32, #tpu.memory_space<vmem>> -> memref<1x128xf32, #tpu.memory_space<vmem>>
    %96 = tpu.memref_slice %arg11[%c0_i32_80, %c2_i32_81] : memref<8x4x!tpu.dma_semaphore, #tpu.memory_space<semaphore_mem>> -> memref<1x1x!tpu.dma_semaphore, #tpu.memory_space<semaphore_mem>>
    %97 = tpu.memref_squeeze %96 : memref<1x1x!tpu.dma_semaphore, #tpu.memory_space<semaphore_mem>> -> memref<!tpu.dma_semaphore, #tpu.memory_space<semaphore_mem>>
    tpu.enqueue_dma source(%93 : memref<1x128xf32, #tpu.memory_space<any>>) target(%95 : memref<1x128xf32, #tpu.memory_space<vmem>>) target_semaphore(%97 : memref<!tpu.dma_semaphore, #tpu.memory_space<semaphore_mem>>)
    %c3_85 = arith.constant 3 : index
    %98 = memref.load %arg2[%c3_85] : memref<32xi32, #tpu.memory_space<smem>>
    %c3_i32_86 = arith.constant 3 : i32
    %c0_i32_87 = arith.constant 0 : i32
    %c3_i32_88 = arith.constant 3 : i32
    %c0_i32_89 = arith.constant 0 : i32
    %99 = tpu.memref_slice %arg4[%98, %c0_i32_89] : memref<256x128xf32, #tpu.memory_space<any>> -> memref<1x128xf32, #tpu.memory_space<any>>
    %c0_i32_90 = arith.constant 0 : i32
    %c0_i32_91 = arith.constant 0 : i32
    %100 = tpu.memref_slice %arg8[%c3_i32_86, %c0_i32_90, %c0_i32_91] : memref<4x8x128xf32, #tpu.memory_space<vmem>> -> memref<1x1x128xf32, #tpu.memory_space<vmem>>
    %101 = tpu.memref_squeeze %100 : memref<1x1x128xf32, #tpu.memory_space<vmem>> -> memref<1x128xf32, #tpu.memory_space<vmem>>
    %102 = tpu.memref_slice %arg11[%c0_i32_87, %c3_i32_88] : memref<8x4x!tpu.dma_semaphore, #tpu.memory_space<semaphore_mem>> -> memref<1x1x!tpu.dma_semaphore, #tpu.memory_space<semaphore_mem>>
    %103 = tpu.memref_squeeze %102 : memref<1x1x!tpu.dma_semaphore, #tpu.memory_space<semaphore_mem>> -> memref<!tpu.dma_semaphore, #tpu.memory_space<semaphore_mem>>
    tpu.enqueue_dma source(%99 : memref<1x128xf32, #tpu.memory_space<any>>) target(%101 : memref<1x128xf32, #tpu.memory_space<vmem>>) target_semaphore(%103 : memref<!tpu.dma_semaphore, #tpu.memory_space<semaphore_mem>>)
    %c4_92 = arith.constant 4 : index
    %104 = memref.load %arg2[%c4_92] : memref<32xi32, #tpu.memory_space<smem>>
    %c0_i32_93 = arith.constant 0 : i32
    %c1_i32_94 = arith.constant 1 : i32
    %c0_i32_95 = arith.constant 0 : i32
    %c0_i32_96 = arith.constant 0 : i32
    %105 = tpu.memref_slice %arg4[%104, %c0_i32_96] : memref<256x128xf32, #tpu.memory_space<any>> -> memref<1x128xf32, #tpu.memory_space<any>>
    %c1_i32_97 = arith.constant 1 : i32
    %c0_i32_98 = arith.constant 0 : i32
    %106 = tpu.memref_slice %arg8[%c0_i32_93, %c1_i32_97, %c0_i32_98] : memref<4x8x128xf32, #tpu.memory_space<vmem>> -> memref<1x1x128xf32, #tpu.memory_space<vmem>>
    %107 = tpu.memref_squeeze %106 : memref<1x1x128xf32, #tpu.memory_space<vmem>> -> memref<1x128xf32, #tpu.memory_space<vmem>>
    %108 = tpu.memref_slice %arg11[%c1_i32_94, %c0_i32_95] : memref<8x4x!tpu.dma_semaphore, #tpu.memory_space<semaphore_mem>> -> memref<1x1x!tpu.dma_semaphore, #tpu.memory_space<semaphore_mem>>
    %109 = tpu.memref_squeeze %108 : memref<1x1x!tpu.dma_semaphore, #tpu.memory_space<semaphore_mem>> -> memref<!tpu.dma_semaphore, #tpu.memory_space<semaphore_mem>>
    tpu.enqueue_dma source(%105 : memref<1x128xf32, #tpu.memory_space<any>>) target(%107 : memref<1x128xf32, #tpu.memory_space<vmem>>) target_semaphore(%109 : memref<!tpu.dma_semaphore, #tpu.memory_space<semaphore_mem>>)
    %c5_99 = arith.constant 5 : index
    %110 = memref.load %arg2[%c5_99] : memref<32xi32, #tpu.memory_space<smem>>
    %c1_i32_100 = arith.constant 1 : i32
    %c1_i32_101 = arith.constant 1 : i32
    %c1_i32_102 = arith.constant 1 : i32
    %c0_i32_103 = arith.constant 0 : i32
    %111 = tpu.memref_slice %arg4[%110, %c0_i32_103] : memref<256x128xf32, #tpu.memory_space<any>> -> memref<1x128xf32, #tpu.memory_space<any>>
    %c1_i32_104 = arith.constant 1 : i32
    %c0_i32_105 = arith.constant 0 : i32
    %112 = tpu.memref_slice %arg8[%c1_i32_100, %c1_i32_104, %c0_i32_105] : memref<4x8x128xf32, #tpu.memory_space<vmem>> -> memref<1x1x128xf32, #tpu.memory_space<vmem>>
    %113 = tpu.memref_squeeze %112 : memref<1x1x128xf32, #tpu.memory_space<vmem>> -> memref<1x128xf32, #tpu.memory_space<vmem>>
    %114 = tpu.memref_slice %arg11[%c1_i32_101, %c1_i32_102] : memref<8x4x!tpu.dma_semaphore, #tpu.memory_space<semaphore_mem>> -> memref<1x1x!tpu.dma_semaphore, #tpu.memory_space<semaphore_mem>>
    %115 = tpu.memref_squeeze %114 : memref<1x1x!tpu.dma_semaphore, #tpu.memory_space<semaphore_mem>> -> memref<!tpu.dma_semaphore, #tpu.memory_space<semaphore_mem>>
    tpu.enqueue_dma source(%111 : memref<1x128xf32, #tpu.memory_space<any>>) target(%113 : memref<1x128xf32, #tpu.memory_space<vmem>>) target_semaphore(%115 : memref<!tpu.dma_semaphore, #tpu.memory_space<semaphore_mem>>)
    %c6_106 = arith.constant 6 : index
    %116 = memref.load %arg2[%c6_106] : memref<32xi32, #tpu.memory_space<smem>>
    %c2_i32_107 = arith.constant 2 : i32
    %c1_i32_108 = arith.constant 1 : i32
    %c2_i32_109 = arith.constant 2 : i32
    %c0_i32_110 = arith.constant 0 : i32
    %117 = tpu.memref_slice %arg4[%116, %c0_i32_110] : memref<256x128xf32, #tpu.memory_space<any>> -> memref<1x128xf32, #tpu.memory_space<any>>
    %c1_i32_111 = arith.constant 1 : i32
    %c0_i32_112 = arith.constant 0 : i32
    %118 = tpu.memref_slice %arg8[%c2_i32_107, %c1_i32_111, %c0_i32_112] : memref<4x8x128xf32, #tpu.memory_space<vmem>> -> memref<1x1x128xf32, #tpu.memory_space<vmem>>
    %119 = tpu.memref_squeeze %118 : memref<1x1x128xf32, #tpu.memory_space<vmem>> -> memref<1x128xf32, #tpu.memory_space<vmem>>
    %120 = tpu.memref_slice %arg11[%c1_i32_108, %c2_i32_109] : memref<8x4x!tpu.dma_semaphore, #tpu.memory_space<semaphore_mem>> -> memref<1x1x!tpu.dma_semaphore, #tpu.memory_space<semaphore_mem>>
    %121 = tpu.memref_squeeze %120 : memref<1x1x!tpu.dma_semaphore, #tpu.memory_space<semaphore_mem>> -> memref<!tpu.dma_semaphore, #tpu.memory_space<semaphore_mem>>
    tpu.enqueue_dma source(%117 : memref<1x128xf32, #tpu.memory_space<any>>) target(%119 : memref<1x128xf32, #tpu.memory_space<vmem>>) target_semaphore(%121 : memref<!tpu.dma_semaphore, #tpu.memory_space<semaphore_mem>>)
    %c7_113 = arith.constant 7 : index
    %122 = memref.load %arg2[%c7_113] : memref<32xi32, #tpu.memory_space<smem>>
    %c3_i32_114 = arith.constant 3 : i32
    %c1_i32_115 = arith.constant 1 : i32
    %c3_i32_116 = arith.constant 3 : i32
    %c0_i32_117 = arith.constant 0 : i32
    %123 = tpu.memref_slice %arg4[%122, %c0_i32_117] : memref<256x128xf32, #tpu.memory_space<any>> -> memref<1x128xf32, #tpu.memory_space<any>>
    %c1_i32_118 = arith.constant 1 : i32
    %c0_i32_119 = arith.constant 0 : i32
    %124 = tpu.memref_slice %arg8[%c3_i32_114, %c1_i32_118, %c0_i32_119] : memref<4x8x128xf32, #tpu.memory_space<vmem>> -> memref<1x1x128xf32, #tpu.memory_space<vmem>>
    %125 = tpu.memref_squeeze %124 : memref<1x1x128xf32, #tpu.memory_space<vmem>> -> memref<1x128xf32, #tpu.memory_space<vmem>>
    %126 = tpu.memref_slice %arg11[%c1_i32_115, %c3_i32_116] : memref<8x4x!tpu.dma_semaphore, #tpu.memory_space<semaphore_mem>> -> memref<1x1x!tpu.dma_semaphore, #tpu.memory_space<semaphore_mem>>
    %127 = tpu.memref_squeeze %126 : memref<1x1x!tpu.dma_semaphore, #tpu.memory_space<semaphore_mem>> -> memref<!tpu.dma_semaphore, #tpu.memory_space<semaphore_mem>>
    tpu.enqueue_dma source(%123 : memref<1x128xf32, #tpu.memory_space<any>>) target(%125 : memref<1x128xf32, #tpu.memory_space<vmem>>) target_semaphore(%127 : memref<!tpu.dma_semaphore, #tpu.memory_space<semaphore_mem>>)
    %c8 = arith.constant 8 : index
    %128 = memref.load %arg2[%c8] : memref<32xi32, #tpu.memory_space<smem>>
    %c0_i32_120 = arith.constant 0 : i32
    %c2_i32_121 = arith.constant 2 : i32
    %c0_i32_122 = arith.constant 0 : i32
    %c0_i32_123 = arith.constant 0 : i32
    %129 = tpu.memref_slice %arg4[%128, %c0_i32_123] : memref<256x128xf32, #tpu.memory_space<any>> -> memref<1x128xf32, #tpu.memory_space<any>>
    %c2_i32_124 = arith.constant 2 : i32
    %c0_i32_125 = arith.constant 0 : i32
    %130 = tpu.memref_slice %arg8[%c0_i32_120, %c2_i32_124, %c0_i32_125] : memref<4x8x128xf32, #tpu.memory_space<vmem>> -> memref<1x1x128xf32, #tpu.memory_space<vmem>>
    %131 = tpu.memref_squeeze %130 : memref<1x1x128xf32, #tpu.memory_space<vmem>> -> memref<1x128xf32, #tpu.memory_space<vmem>>
    %132 = tpu.memref_slice %arg11[%c2_i32_121, %c0_i32_122] : memref<8x4x!tpu.dma_semaphore, #tpu.memory_space<semaphore_mem>> -> memref<1x1x!tpu.dma_semaphore, #tpu.memory_space<semaphore_mem>>
    %133 = tpu.memref_squeeze %132 : memref<1x1x!tpu.dma_semaphore, #tpu.memory_space<semaphore_mem>> -> memref<!tpu.dma_semaphore, #tpu.memory_space<semaphore_mem>>
    tpu.enqueue_dma source(%129 : memref<1x128xf32, #tpu.memory_space<any>>) target(%131 : memref<1x128xf32, #tpu.memory_space<vmem>>) target_semaphore(%133 : memref<!tpu.dma_semaphore, #tpu.memory_space<semaphore_mem>>)
    %c9 = arith.constant 9 : index
    %134 = memref.load %arg2[%c9] : memref<32xi32, #tpu.memory_space<smem>>
    %c1_i32_126 = arith.constant 1 : i32
    %c2_i32_127 = arith.constant 2 : i32
    %c1_i32_128 = arith.constant 1 : i32
    %c0_i32_129 = arith.constant 0 : i32
    %135 = tpu.memref_slice %arg4[%134, %c0_i32_129] : memref<256x128xf32, #tpu.memory_space<any>> -> memref<1x128xf32, #tpu.memory_space<any>>
    %c2_i32_130 = arith.constant 2 : i32
    %c0_i32_131 = arith.constant 0 : i32
    %136 = tpu.memref_slice %arg8[%c1_i32_126, %c2_i32_130, %c0_i32_131] : memref<4x8x128xf32, #tpu.memory_space<vmem>> -> memref<1x1x128xf32, #tpu.memory_space<vmem>>
    %137 = tpu.memref_squeeze %136 : memref<1x1x128xf32, #tpu.memory_space<vmem>> -> memref<1x128xf32, #tpu.memory_space<vmem>>
    %138 = tpu.memref_slice %arg11[%c2_i32_127, %c1_i32_128] : memref<8x4x!tpu.dma_semaphore, #tpu.memory_space<semaphore_mem>> -> memref<1x1x!tpu.dma_semaphore, #tpu.memory_space<semaphore_mem>>
    %139 = tpu.memref_squeeze %138 : memref<1x1x!tpu.dma_semaphore, #tpu.memory_space<semaphore_mem>> -> memref<!tpu.dma_semaphore, #tpu.memory_space<semaphore_mem>>
    tpu.enqueue_dma source(%135 : memref<1x128xf32, #tpu.memory_space<any>>) target(%137 : memref<1x128xf32, #tpu.memory_space<vmem>>) target_semaphore(%139 : memref<!tpu.dma_semaphore, #tpu.memory_space<semaphore_mem>>)
    %c10 = arith.constant 10 : index
    %140 = memref.load %arg2[%c10] : memref<32xi32, #tpu.memory_space<smem>>
    %c2_i32_132 = arith.constant 2 : i32
    %c2_i32_133 = arith.constant 2 : i32
    %c2_i32_134 = arith.constant 2 : i32
    %c0_i32_135 = arith.constant 0 : i32
    %141 = tpu.memref_slice %arg4[%140, %c0_i32_135] : memref<256x128xf32, #tpu.memory_space<any>> -> memref<1x128xf32, #tpu.memory_space<any>>
    %c2_i32_136 = arith.constant 2 : i32
    %c0_i32_137 = arith.constant 0 : i32
    %142 = tpu.memref_slice %arg8[%c2_i32_132, %c2_i32_136, %c0_i32_137] : memref<4x8x128xf32, #tpu.memory_space<vmem>> -> memref<1x1x128xf32, #tpu.memory_space<vmem>>
    %143 = tpu.memref_squeeze %142 : memref<1x1x128xf32, #tpu.memory_space<vmem>> -> memref<1x128xf32, #tpu.memory_space<vmem>>
    %144 = tpu.memref_slice %arg11[%c2_i32_133, %c2_i32_134] : memref<8x4x!tpu.dma_semaphore, #tpu.memory_space<semaphore_mem>> -> memref<1x1x!tpu.dma_semaphore, #tpu.memory_space<semaphore_mem>>
    %145 = tpu.memref_squeeze %144 : memref<1x1x!tpu.dma_semaphore, #tpu.memory_space<semaphore_mem>> -> memref<!tpu.dma_semaphore, #tpu.memory_space<semaphore_mem>>
    tpu.enqueue_dma source(%141 : memref<1x128xf32, #tpu.memory_space<any>>) target(%143 : memref<1x128xf32, #tpu.memory_space<vmem>>) target_semaphore(%145 : memref<!tpu.dma_semaphore, #tpu.memory_space<semaphore_mem>>)
    %c11 = arith.constant 11 : index
    %146 = memref.load %arg2[%c11] : memref<32xi32, #tpu.memory_space<smem>>
    %c3_i32_138 = arith.constant 3 : i32
    %c2_i32_139 = arith.constant 2 : i32
    %c3_i32_140 = arith.constant 3 : i32
    %c0_i32_141 = arith.constant 0 : i32
    %147 = tpu.memref_slice %arg4[%146, %c0_i32_141] : memref<256x128xf32, #tpu.memory_space<any>> -> memref<1x128xf32, #tpu.memory_space<any>>
    %c2_i32_142 = arith.constant 2 : i32
    %c0_i32_143 = arith.constant 0 : i32
    %148 = tpu.memref_slice %arg8[%c3_i32_138, %c2_i32_142, %c0_i32_143] : memref<4x8x128xf32, #tpu.memory_space<vmem>> -> memref<1x1x128xf32, #tpu.memory_space<vmem>>
    %149 = tpu.memref_squeeze %148 : memref<1x1x128xf32, #tpu.memory_space<vmem>> -> memref<1x128xf32, #tpu.memory_space<vmem>>
    %150 = tpu.memref_slice %arg11[%c2_i32_139, %c3_i32_140] : memref<8x4x!tpu.dma_semaphore, #tpu.memory_space<semaphore_mem>> -> memref<1x1x!tpu.dma_semaphore, #tpu.memory_space<semaphore_mem>>
    %151 = tpu.memref_squeeze %150 : memref<1x1x!tpu.dma_semaphore, #tpu.memory_space<semaphore_mem>> -> memref<!tpu.dma_semaphore, #tpu.memory_space<semaphore_mem>>
    tpu.enqueue_dma source(%147 : memref<1x128xf32, #tpu.memory_space<any>>) target(%149 : memref<1x128xf32, #tpu.memory_space<vmem>>) target_semaphore(%151 : memref<!tpu.dma_semaphore, #tpu.memory_space<semaphore_mem>>)
    %c12 = arith.constant 12 : index
    %152 = memref.load %arg2[%c12] : memref<32xi32, #tpu.memory_space<smem>>
    %c0_i32_144 = arith.constant 0 : i32
    %c3_i32_145 = arith.constant 3 : i32
    %c0_i32_146 = arith.constant 0 : i32
    %c0_i32_147 = arith.constant 0 : i32
    %153 = tpu.memref_slice %arg4[%152, %c0_i32_147] : memref<256x128xf32, #tpu.memory_space<any>> -> memref<1x128xf32, #tpu.memory_space<any>>
    %c3_i32_148 = arith.constant 3 : i32
    %c0_i32_149 = arith.constant 0 : i32
    %154 = tpu.memref_slice %arg8[%c0_i32_144, %c3_i32_148, %c0_i32_149] : memref<4x8x128xf32, #tpu.memory_space<vmem>> -> memref<1x1x128xf32, #tpu.memory_space<vmem>>
    %155 = tpu.memref_squeeze %154 : memref<1x1x128xf32, #tpu.memory_space<vmem>> -> memref<1x128xf32, #tpu.memory_space<vmem>>
    %156 = tpu.memref_slice %arg11[%c3_i32_145, %c0_i32_146] : memref<8x4x!tpu.dma_semaphore, #tpu.memory_space<semaphore_mem>> -> memref<1x1x!tpu.dma_semaphore, #tpu.memory_space<semaphore_mem>>
    %157 = tpu.memref_squeeze %156 : memref<1x1x!tpu.dma_semaphore, #tpu.memory_space<semaphore_mem>> -> memref<!tpu.dma_semaphore, #tpu.memory_space<semaphore_mem>>
    tpu.enqueue_dma source(%153 : memref<1x128xf32, #tpu.memory_space<any>>) target(%155 : memref<1x128xf32, #tpu.memory_space<vmem>>) target_semaphore(%157 : memref<!tpu.dma_semaphore, #tpu.memory_space<semaphore_mem>>)
    %c13 = arith.constant 13 : index
    %158 = memref.load %arg2[%c13] : memref<32xi32, #tpu.memory_space<smem>>
    %c1_i32_150 = arith.constant 1 : i32
    %c3_i32_151 = arith.constant 3 : i32
    %c1_i32_152 = arith.constant 1 : i32
    %c0_i32_153 = arith.constant 0 : i32
    %159 = tpu.memref_slice %arg4[%158, %c0_i32_153] : memref<256x128xf32, #tpu.memory_space<any>> -> memref<1x128xf32, #tpu.memory_space<any>>
    %c3_i32_154 = arith.constant 3 : i32
    %c0_i32_155 = arith.constant 0 : i32
    %160 = tpu.memref_slice %arg8[%c1_i32_150, %c3_i32_154, %c0_i32_155] : memref<4x8x128xf32, #tpu.memory_space<vmem>> -> memref<1x1x128xf32, #tpu.memory_space<vmem>>
    %161 = tpu.memref_squeeze %160 : memref<1x1x128xf32, #tpu.memory_space<vmem>> -> memref<1x128xf32, #tpu.memory_space<vmem>>
    %162 = tpu.memref_slice %arg11[%c3_i32_151, %c1_i32_152] : memref<8x4x!tpu.dma_semaphore, #tpu.memory_space<semaphore_mem>> -> memref<1x1x!tpu.dma_semaphore, #tpu.memory_space<semaphore_mem>>
    %163 = tpu.memref_squeeze %162 : memref<1x1x!tpu.dma_semaphore, #tpu.memory_space<semaphore_mem>> -> memref<!tpu.dma_semaphore, #tpu.memory_space<semaphore_mem>>
    tpu.enqueue_dma source(%159 : memref<1x128xf32, #tpu.memory_space<any>>) target(%161 : memref<1x128xf32, #tpu.memory_space<vmem>>) target_semaphore(%163 : memref<!tpu.dma_semaphore, #tpu.memory_space<semaphore_mem>>)
    %c14 = arith.constant 14 : index
    %164 = memref.load %arg2[%c14] : memref<32xi32, #tpu.memory_space<smem>>
    %c2_i32_156 = arith.constant 2 : i32
    %c3_i32_157 = arith.constant 3 : i32
    %c2_i32_158 = arith.constant 2 : i32
    %c0_i32_159 = arith.constant 0 : i32
    %165 = tpu.memref_slice %arg4[%164, %c0_i32_159] : memref<256x128xf32, #tpu.memory_space<any>> -> memref<1x128xf32, #tpu.memory_space<any>>
    %c3_i32_160 = arith.constant 3 : i32
    %c0_i32_161 = arith.constant 0 : i32
    %166 = tpu.memref_slice %arg8[%c2_i32_156, %c3_i32_160, %c0_i32_161] : memref<4x8x128xf32, #tpu.memory_space<vmem>> -> memref<1x1x128xf32, #tpu.memory_space<vmem>>
    %167 = tpu.memref_squeeze %166 : memref<1x1x128xf32, #tpu.memory_space<vmem>> -> memref<1x128xf32, #tpu.memory_space<vmem>>
    %168 = tpu.memref_slice %arg11[%c3_i32_157, %c2_i32_158] : memref<8x4x!tpu.dma_semaphore, #tpu.memory_space<semaphore_mem>> -> memref<1x1x!tpu.dma_semaphore, #tpu.memory_space<semaphore_mem>>
    %169 = tpu.memref_squeeze %168 : memref<1x1x!tpu.dma_semaphore, #tpu.memory_space<semaphore_mem>> -> memref<!tpu.dma_semaphore, #tpu.memory_space<semaphore_mem>>
    tpu.enqueue_dma source(%165 : memref<1x128xf32, #tpu.memory_space<any>>) target(%167 : memref<1x128xf32, #tpu.memory_space<vmem>>) target_semaphore(%169 : memref<!tpu.dma_semaphore, #tpu.memory_space<semaphore_mem>>)
    %c15 = arith.constant 15 : index
    %170 = memref.load %arg2[%c15] : memref<32xi32, #tpu.memory_space<smem>>
    %c3_i32_162 = arith.constant 3 : i32
    %c3_i32_163 = arith.constant 3 : i32
    %c3_i32_164 = arith.constant 3 : i32
    %c0_i32_165 = arith.constant 0 : i32
    %171 = tpu.memref_slice %arg4[%170, %c0_i32_165] : memref<256x128xf32, #tpu.memory_space<any>> -> memref<1x128xf32, #tpu.memory_space<any>>
    %c3_i32_166 = arith.constant 3 : i32
    %c0_i32_167 = arith.constant 0 : i32
    %172 = tpu.memref_slice %arg8[%c3_i32_162, %c3_i32_166, %c0_i32_167] : memref<4x8x128xf32, #tpu.memory_space<vmem>> -> memref<1x1x128xf32, #tpu.memory_space<vmem>>
    %173 = tpu.memref_squeeze %172 : memref<1x1x128xf32, #tpu.memory_space<vmem>> -> memref<1x128xf32, #tpu.memory_space<vmem>>
    %174 = tpu.memref_slice %arg11[%c3_i32_163, %c3_i32_164] : memref<8x4x!tpu.dma_semaphore, #tpu.memory_space<semaphore_mem>> -> memref<1x1x!tpu.dma_semaphore, #tpu.memory_space<semaphore_mem>>
    %175 = tpu.memref_squeeze %174 : memref<1x1x!tpu.dma_semaphore, #tpu.memory_space<semaphore_mem>> -> memref<!tpu.dma_semaphore, #tpu.memory_space<semaphore_mem>>
    tpu.enqueue_dma source(%171 : memref<1x128xf32, #tpu.memory_space<any>>) target(%173 : memref<1x128xf32, #tpu.memory_space<vmem>>) target_semaphore(%175 : memref<!tpu.dma_semaphore, #tpu.memory_space<semaphore_mem>>)
    %c16 = arith.constant 16 : index
    %176 = memref.load %arg2[%c16] : memref<32xi32, #tpu.memory_space<smem>>
    %c0_i32_168 = arith.constant 0 : i32
    %c4_i32_169 = arith.constant 4 : i32
    %c0_i32_170 = arith.constant 0 : i32
    %c0_i32_171 = arith.constant 0 : i32
    %177 = tpu.memref_slice %arg4[%176, %c0_i32_171] : memref<256x128xf32, #tpu.memory_space<any>> -> memref<1x128xf32, #tpu.memory_space<any>>
    %c4_i32_172 = arith.constant 4 : i32
    %c0_i32_173 = arith.constant 0 : i32
    %178 = tpu.memref_slice %arg8[%c0_i32_168, %c4_i32_172, %c0_i32_173] : memref<4x8x128xf32, #tpu.memory_space<vmem>> -> memref<1x1x128xf32, #tpu.memory_space<vmem>>
    %179 = tpu.memref_squeeze %178 : memref<1x1x128xf32, #tpu.memory_space<vmem>> -> memref<1x128xf32, #tpu.memory_space<vmem>>
    %180 = tpu.memref_slice %arg11[%c4_i32_169, %c0_i32_170] : memref<8x4x!tpu.dma_semaphore, #tpu.memory_space<semaphore_mem>> -> memref<1x1x!tpu.dma_semaphore, #tpu.memory_space<semaphore_mem>>
    %181 = tpu.memref_squeeze %180 : memref<1x1x!tpu.dma_semaphore, #tpu.memory_space<semaphore_mem>> -> memref<!tpu.dma_semaphore, #tpu.memory_space<semaphore_mem>>
    tpu.enqueue_dma source(%177 : memref<1x128xf32, #tpu.memory_space<any>>) target(%179 : memref<1x128xf32, #tpu.memory_space<vmem>>) target_semaphore(%181 : memref<!tpu.dma_semaphore, #tpu.memory_space<semaphore_mem>>)
    %c17 = arith.constant 17 : index
    %182 = memref.load %arg2[%c17] : memref<32xi32, #tpu.memory_space<smem>>
    %c1_i32_174 = arith.constant 1 : i32
    %c4_i32_175 = arith.constant 4 : i32
    %c1_i32_176 = arith.constant 1 : i32
    %c0_i32_177 = arith.constant 0 : i32
    %183 = tpu.memref_slice %arg4[%182, %c0_i32_177] : memref<256x128xf32, #tpu.memory_space<any>> -> memref<1x128xf32, #tpu.memory_space<any>>
    %c4_i32_178 = arith.constant 4 : i32
    %c0_i32_179 = arith.constant 0 : i32
    %184 = tpu.memref_slice %arg8[%c1_i32_174, %c4_i32_178, %c0_i32_179] : memref<4x8x128xf32, #tpu.memory_space<vmem>> -> memref<1x1x128xf32, #tpu.memory_space<vmem>>
    %185 = tpu.memref_squeeze %184 : memref<1x1x128xf32, #tpu.memory_space<vmem>> -> memref<1x128xf32, #tpu.memory_space<vmem>>
    %186 = tpu.memref_slice %arg11[%c4_i32_175, %c1_i32_176] : memref<8x4x!tpu.dma_semaphore, #tpu.memory_space<semaphore_mem>> -> memref<1x1x!tpu.dma_semaphore, #tpu.memory_space<semaphore_mem>>
    %187 = tpu.memref_squeeze %186 : memref<1x1x!tpu.dma_semaphore, #tpu.memory_space<semaphore_mem>> -> memref<!tpu.dma_semaphore, #tpu.memory_space<semaphore_mem>>
    tpu.enqueue_dma source(%183 : memref<1x128xf32, #tpu.memory_space<any>>) target(%185 : memref<1x128xf32, #tpu.memory_space<vmem>>) target_semaphore(%187 : memref<!tpu.dma_semaphore, #tpu.memory_space<semaphore_mem>>)
    %c18 = arith.constant 18 : index
    %188 = memref.load %arg2[%c18] : memref<32xi32, #tpu.memory_space<smem>>
    %c2_i32_180 = arith.constant 2 : i32
    %c4_i32_181 = arith.constant 4 : i32
    %c2_i32_182 = arith.constant 2 : i32
    %c0_i32_183 = arith.constant 0 : i32
    %189 = tpu.memref_slice %arg4[%188, %c0_i32_183] : memref<256x128xf32, #tpu.memory_space<any>> -> memref<1x128xf32, #tpu.memory_space<any>>
    %c4_i32_184 = arith.constant 4 : i32
    %c0_i32_185 = arith.constant 0 : i32
    %190 = tpu.memref_slice %arg8[%c2_i32_180, %c4_i32_184, %c0_i32_185] : memref<4x8x128xf32, #tpu.memory_space<vmem>> -> memref<1x1x128xf32, #tpu.memory_space<vmem>>
    %191 = tpu.memref_squeeze %190 : memref<1x1x128xf32, #tpu.memory_space<vmem>> -> memref<1x128xf32, #tpu.memory_space<vmem>>
    %192 = tpu.memref_slice %arg11[%c4_i32_181, %c2_i32_182] : memref<8x4x!tpu.dma_semaphore, #tpu.memory_space<semaphore_mem>> -> memref<1x1x!tpu.dma_semaphore, #tpu.memory_space<semaphore_mem>>
    %193 = tpu.memref_squeeze %192 : memref<1x1x!tpu.dma_semaphore, #tpu.memory_space<semaphore_mem>> -> memref<!tpu.dma_semaphore, #tpu.memory_space<semaphore_mem>>
    tpu.enqueue_dma source(%189 : memref<1x128xf32, #tpu.memory_space<any>>) target(%191 : memref<1x128xf32, #tpu.memory_space<vmem>>) target_semaphore(%193 : memref<!tpu.dma_semaphore, #tpu.memory_space<semaphore_mem>>)
    %c19 = arith.constant 19 : index
    %194 = memref.load %arg2[%c19] : memref<32xi32, #tpu.memory_space<smem>>
    %c3_i32_186 = arith.constant 3 : i32
    %c4_i32_187 = arith.constant 4 : i32
    %c3_i32_188 = arith.constant 3 : i32
    %c0_i32_189 = arith.constant 0 : i32
    %195 = tpu.memref_slice %arg4[%194, %c0_i32_189] : memref<256x128xf32, #tpu.memory_space<any>> -> memref<1x128xf32, #tpu.memory_space<any>>
    %c4_i32_190 = arith.constant 4 : i32
    %c0_i32_191 = arith.constant 0 : i32
    %196 = tpu.memref_slice %arg8[%c3_i32_186, %c4_i32_190, %c0_i32_191] : memref<4x8x128xf32, #tpu.memory_space<vmem>> -> memref<1x1x128xf32, #tpu.memory_space<vmem>>
    %197 = tpu.memref_squeeze %196 : memref<1x1x128xf32, #tpu.memory_space<vmem>> -> memref<1x128xf32, #tpu.memory_space<vmem>>
    %198 = tpu.memref_slice %arg11[%c4_i32_187, %c3_i32_188] : memref<8x4x!tpu.dma_semaphore, #tpu.memory_space<semaphore_mem>> -> memref<1x1x!tpu.dma_semaphore, #tpu.memory_space<semaphore_mem>>
    %199 = tpu.memref_squeeze %198 : memref<1x1x!tpu.dma_semaphore, #tpu.memory_space<semaphore_mem>> -> memref<!tpu.dma_semaphore, #tpu.memory_space<semaphore_mem>>
    tpu.enqueue_dma source(%195 : memref<1x128xf32, #tpu.memory_space<any>>) target(%197 : memref<1x128xf32, #tpu.memory_space<vmem>>) target_semaphore(%199 : memref<!tpu.dma_semaphore, #tpu.memory_space<semaphore_mem>>)
    %c20 = arith.constant 20 : index
    %200 = memref.load %arg2[%c20] : memref<32xi32, #tpu.memory_space<smem>>
    %c0_i32_192 = arith.constant 0 : i32
    %c5_i32_193 = arith.constant 5 : i32
    %c0_i32_194 = arith.constant 0 : i32
    %c0_i32_195 = arith.constant 0 : i32
    %201 = tpu.memref_slice %arg4[%200, %c0_i32_195] : memref<256x128xf32, #tpu.memory_space<any>> -> memref<1x128xf32, #tpu.memory_space<any>>
    %c5_i32_196 = arith.constant 5 : i32
    %c0_i32_197 = arith.constant 0 : i32
    %202 = tpu.memref_slice %arg8[%c0_i32_192, %c5_i32_196, %c0_i32_197] : memref<4x8x128xf32, #tpu.memory_space<vmem>> -> memref<1x1x128xf32, #tpu.memory_space<vmem>>
    %203 = tpu.memref_squeeze %202 : memref<1x1x128xf32, #tpu.memory_space<vmem>> -> memref<1x128xf32, #tpu.memory_space<vmem>>
    %204 = tpu.memref_slice %arg11[%c5_i32_193, %c0_i32_194] : memref<8x4x!tpu.dma_semaphore, #tpu.memory_space<semaphore_mem>> -> memref<1x1x!tpu.dma_semaphore, #tpu.memory_space<semaphore_mem>>
    %205 = tpu.memref_squeeze %204 : memref<1x1x!tpu.dma_semaphore, #tpu.memory_space<semaphore_mem>> -> memref<!tpu.dma_semaphore, #tpu.memory_space<semaphore_mem>>
    tpu.enqueue_dma source(%201 : memref<1x128xf32, #tpu.memory_space<any>>) target(%203 : memref<1x128xf32, #tpu.memory_space<vmem>>) target_semaphore(%205 : memref<!tpu.dma_semaphore, #tpu.memory_space<semaphore_mem>>)
    %c21 = arith.constant 21 : index
    %206 = memref.load %arg2[%c21] : memref<32xi32, #tpu.memory_space<smem>>
    %c1_i32_198 = arith.constant 1 : i32
    %c5_i32_199 = arith.constant 5 : i32
    %c1_i32_200 = arith.constant 1 : i32
    %c0_i32_201 = arith.constant 0 : i32
    %207 = tpu.memref_slice %arg4[%206, %c0_i32_201] : memref<256x128xf32, #tpu.memory_space<any>> -> memref<1x128xf32, #tpu.memory_space<any>>
    %c5_i32_202 = arith.constant 5 : i32
    %c0_i32_203 = arith.constant 0 : i32
    %208 = tpu.memref_slice %arg8[%c1_i32_198, %c5_i32_202, %c0_i32_203] : memref<4x8x128xf32, #tpu.memory_space<vmem>> -> memref<1x1x128xf32, #tpu.memory_space<vmem>>
    %209 = tpu.memref_squeeze %208 : memref<1x1x128xf32, #tpu.memory_space<vmem>> -> memref<1x128xf32, #tpu.memory_space<vmem>>
    %210 = tpu.memref_slice %arg11[%c5_i32_199, %c1_i32_200] : memref<8x4x!tpu.dma_semaphore, #tpu.memory_space<semaphore_mem>> -> memref<1x1x!tpu.dma_semaphore, #tpu.memory_space<semaphore_mem>>
    %211 = tpu.memref_squeeze %210 : memref<1x1x!tpu.dma_semaphore, #tpu.memory_space<semaphore_mem>> -> memref<!tpu.dma_semaphore, #tpu.memory_space<semaphore_mem>>
    tpu.enqueue_dma source(%207 : memref<1x128xf32, #tpu.memory_space<any>>) target(%209 : memref<1x128xf32, #tpu.memory_space<vmem>>) target_semaphore(%211 : memref<!tpu.dma_semaphore, #tpu.memory_space<semaphore_mem>>)
    %c22 = arith.constant 22 : index
    %212 = memref.load %arg2[%c22] : memref<32xi32, #tpu.memory_space<smem>>
    %c2_i32_204 = arith.constant 2 : i32
    %c5_i32_205 = arith.constant 5 : i32
    %c2_i32_206 = arith.constant 2 : i32
    %c0_i32_207 = arith.constant 0 : i32
    %213 = tpu.memref_slice %arg4[%212, %c0_i32_207] : memref<256x128xf32, #tpu.memory_space<any>> -> memref<1x128xf32, #tpu.memory_space<any>>
    %c5_i32_208 = arith.constant 5 : i32
    %c0_i32_209 = arith.constant 0 : i32
    %214 = tpu.memref_slice %arg8[%c2_i32_204, %c5_i32_208, %c0_i32_209] : memref<4x8x128xf32, #tpu.memory_space<vmem>> -> memref<1x1x128xf32, #tpu.memory_space<vmem>>
    %215 = tpu.memref_squeeze %214 : memref<1x1x128xf32, #tpu.memory_space<vmem>> -> memref<1x128xf32, #tpu.memory_space<vmem>>
    %216 = tpu.memref_slice %arg11[%c5_i32_205, %c2_i32_206] : memref<8x4x!tpu.dma_semaphore, #tpu.memory_space<semaphore_mem>> -> memref<1x1x!tpu.dma_semaphore, #tpu.memory_space<semaphore_mem>>
    %217 = tpu.memref_squeeze %216 : memref<1x1x!tpu.dma_semaphore, #tpu.memory_space<semaphore_mem>> -> memref<!tpu.dma_semaphore, #tpu.memory_space<semaphore_mem>>
    tpu.enqueue_dma source(%213 : memref<1x128xf32, #tpu.memory_space<any>>) target(%215 : memref<1x128xf32, #tpu.memory_space<vmem>>) target_semaphore(%217 : memref<!tpu.dma_semaphore, #tpu.memory_space<semaphore_mem>>)
    %c23 = arith.constant 23 : index
    %218 = memref.load %arg2[%c23] : memref<32xi32, #tpu.memory_space<smem>>
    %c3_i32_210 = arith.constant 3 : i32
    %c5_i32_211 = arith.constant 5 : i32
    %c3_i32_212 = arith.constant 3 : i32
    %c0_i32_213 = arith.constant 0 : i32
    %219 = tpu.memref_slice %arg4[%218, %c0_i32_213] : memref<256x128xf32, #tpu.memory_space<any>> -> memref<1x128xf32, #tpu.memory_space<any>>
    %c5_i32_214 = arith.constant 5 : i32
    %c0_i32_215 = arith.constant 0 : i32
    %220 = tpu.memref_slice %arg8[%c3_i32_210, %c5_i32_214, %c0_i32_215] : memref<4x8x128xf32, #tpu.memory_space<vmem>> -> memref<1x1x128xf32, #tpu.memory_space<vmem>>
    %221 = tpu.memref_squeeze %220 : memref<1x1x128xf32, #tpu.memory_space<vmem>> -> memref<1x128xf32, #tpu.memory_space<vmem>>
    %222 = tpu.memref_slice %arg11[%c5_i32_211, %c3_i32_212] : memref<8x4x!tpu.dma_semaphore, #tpu.memory_space<semaphore_mem>> -> memref<1x1x!tpu.dma_semaphore, #tpu.memory_space<semaphore_mem>>
    %223 = tpu.memref_squeeze %222 : memref<1x1x!tpu.dma_semaphore, #tpu.memory_space<semaphore_mem>> -> memref<!tpu.dma_semaphore, #tpu.memory_space<semaphore_mem>>
    tpu.enqueue_dma source(%219 : memref<1x128xf32, #tpu.memory_space<any>>) target(%221 : memref<1x128xf32, #tpu.memory_space<vmem>>) target_semaphore(%223 : memref<!tpu.dma_semaphore, #tpu.memory_space<semaphore_mem>>)
    %c24 = arith.constant 24 : index
    %224 = memref.load %arg2[%c24] : memref<32xi32, #tpu.memory_space<smem>>
    %c0_i32_216 = arith.constant 0 : i32
    %c6_i32_217 = arith.constant 6 : i32
    %c0_i32_218 = arith.constant 0 : i32
    %c0_i32_219 = arith.constant 0 : i32
    %225 = tpu.memref_slice %arg4[%224, %c0_i32_219] : memref<256x128xf32, #tpu.memory_space<any>> -> memref<1x128xf32, #tpu.memory_space<any>>
    %c6_i32_220 = arith.constant 6 : i32
    %c0_i32_221 = arith.constant 0 : i32
    %226 = tpu.memref_slice %arg8[%c0_i32_216, %c6_i32_220, %c0_i32_221] : memref<4x8x128xf32, #tpu.memory_space<vmem>> -> memref<1x1x128xf32, #tpu.memory_space<vmem>>
    %227 = tpu.memref_squeeze %226 : memref<1x1x128xf32, #tpu.memory_space<vmem>> -> memref<1x128xf32, #tpu.memory_space<vmem>>
    %228 = tpu.memref_slice %arg11[%c6_i32_217, %c0_i32_218] : memref<8x4x!tpu.dma_semaphore, #tpu.memory_space<semaphore_mem>> -> memref<1x1x!tpu.dma_semaphore, #tpu.memory_space<semaphore_mem>>
    %229 = tpu.memref_squeeze %228 : memref<1x1x!tpu.dma_semaphore, #tpu.memory_space<semaphore_mem>> -> memref<!tpu.dma_semaphore, #tpu.memory_space<semaphore_mem>>
    tpu.enqueue_dma source(%225 : memref<1x128xf32, #tpu.memory_space<any>>) target(%227 : memref<1x128xf32, #tpu.memory_space<vmem>>) target_semaphore(%229 : memref<!tpu.dma_semaphore, #tpu.memory_space<semaphore_mem>>)
    %c25 = arith.constant 25 : index
    %230 = memref.load %arg2[%c25] : memref<32xi32, #tpu.memory_space<smem>>
    %c1_i32_222 = arith.constant 1 : i32
    %c6_i32_223 = arith.constant 6 : i32
    %c1_i32_224 = arith.constant 1 : i32
    %c0_i32_225 = arith.constant 0 : i32
    %231 = tpu.memref_slice %arg4[%230, %c0_i32_225] : memref<256x128xf32, #tpu.memory_space<any>> -> memref<1x128xf32, #tpu.memory_space<any>>
    %c6_i32_226 = arith.constant 6 : i32
    %c0_i32_227 = arith.constant 0 : i32
    %232 = tpu.memref_slice %arg8[%c1_i32_222, %c6_i32_226, %c0_i32_227] : memref<4x8x128xf32, #tpu.memory_space<vmem>> -> memref<1x1x128xf32, #tpu.memory_space<vmem>>
    %233 = tpu.memref_squeeze %232 : memref<1x1x128xf32, #tpu.memory_space<vmem>> -> memref<1x128xf32, #tpu.memory_space<vmem>>
    %234 = tpu.memref_slice %arg11[%c6_i32_223, %c1_i32_224] : memref<8x4x!tpu.dma_semaphore, #tpu.memory_space<semaphore_mem>> -> memref<1x1x!tpu.dma_semaphore, #tpu.memory_space<semaphore_mem>>
    %235 = tpu.memref_squeeze %234 : memref<1x1x!tpu.dma_semaphore, #tpu.memory_space<semaphore_mem>> -> memref<!tpu.dma_semaphore, #tpu.memory_space<semaphore_mem>>
    tpu.enqueue_dma source(%231 : memref<1x128xf32, #tpu.memory_space<any>>) target(%233 : memref<1x128xf32, #tpu.memory_space<vmem>>) target_semaphore(%235 : memref<!tpu.dma_semaphore, #tpu.memory_space<semaphore_mem>>)
    %c26 = arith.constant 26 : index
    %236 = memref.load %arg2[%c26] : memref<32xi32, #tpu.memory_space<smem>>
    %c2_i32_228 = arith.constant 2 : i32
    %c6_i32_229 = arith.constant 6 : i32
    %c2_i32_230 = arith.constant 2 : i32
    %c0_i32_231 = arith.constant 0 : i32
    %237 = tpu.memref_slice %arg4[%236, %c0_i32_231] : memref<256x128xf32, #tpu.memory_space<any>> -> memref<1x128xf32, #tpu.memory_space<any>>
    %c6_i32_232 = arith.constant 6 : i32
    %c0_i32_233 = arith.constant 0 : i32
    %238 = tpu.memref_slice %arg8[%c2_i32_228, %c6_i32_232, %c0_i32_233] : memref<4x8x128xf32, #tpu.memory_space<vmem>> -> memref<1x1x128xf32, #tpu.memory_space<vmem>>
    %239 = tpu.memref_squeeze %238 : memref<1x1x128xf32, #tpu.memory_space<vmem>> -> memref<1x128xf32, #tpu.memory_space<vmem>>
    %240 = tpu.memref_slice %arg11[%c6_i32_229, %c2_i32_230] : memref<8x4x!tpu.dma_semaphore, #tpu.memory_space<semaphore_mem>> -> memref<1x1x!tpu.dma_semaphore, #tpu.memory_space<semaphore_mem>>
    %241 = tpu.memref_squeeze %240 : memref<1x1x!tpu.dma_semaphore, #tpu.memory_space<semaphore_mem>> -> memref<!tpu.dma_semaphore, #tpu.memory_space<semaphore_mem>>
    tpu.enqueue_dma source(%237 : memref<1x128xf32, #tpu.memory_space<any>>) target(%239 : memref<1x128xf32, #tpu.memory_space<vmem>>) target_semaphore(%241 : memref<!tpu.dma_semaphore, #tpu.memory_space<semaphore_mem>>)
    %c27 = arith.constant 27 : index
    %242 = memref.load %arg2[%c27] : memref<32xi32, #tpu.memory_space<smem>>
    %c3_i32_234 = arith.constant 3 : i32
    %c6_i32_235 = arith.constant 6 : i32
    %c3_i32_236 = arith.constant 3 : i32
    %c0_i32_237 = arith.constant 0 : i32
    %243 = tpu.memref_slice %arg4[%242, %c0_i32_237] : memref<256x128xf32, #tpu.memory_space<any>> -> memref<1x128xf32, #tpu.memory_space<any>>
    %c6_i32_238 = arith.constant 6 : i32
    %c0_i32_239 = arith.constant 0 : i32
    %244 = tpu.memref_slice %arg8[%c3_i32_234, %c6_i32_238, %c0_i32_239] : memref<4x8x128xf32, #tpu.memory_space<vmem>> -> memref<1x1x128xf32, #tpu.memory_space<vmem>>
    %245 = tpu.memref_squeeze %244 : memref<1x1x128xf32, #tpu.memory_space<vmem>> -> memref<1x128xf32, #tpu.memory_space<vmem>>
    %246 = tpu.memref_slice %arg11[%c6_i32_235, %c3_i32_236] : memref<8x4x!tpu.dma_semaphore, #tpu.memory_space<semaphore_mem>> -> memref<1x1x!tpu.dma_semaphore, #tpu.memory_space<semaphore_mem>>
    %247 = tpu.memref_squeeze %246 : memref<1x1x!tpu.dma_semaphore, #tpu.memory_space<semaphore_mem>> -> memref<!tpu.dma_semaphore, #tpu.memory_space<semaphore_mem>>
    tpu.enqueue_dma source(%243 : memref<1x128xf32, #tpu.memory_space<any>>) target(%245 : memref<1x128xf32, #tpu.memory_space<vmem>>) target_semaphore(%247 : memref<!tpu.dma_semaphore, #tpu.memory_space<semaphore_mem>>)
    %c28 = arith.constant 28 : index
    %248 = memref.load %arg2[%c28] : memref<32xi32, #tpu.memory_space<smem>>
    %c0_i32_240 = arith.constant 0 : i32
    %c7_i32_241 = arith.constant 7 : i32
    %c0_i32_242 = arith.constant 0 : i32
    %c0_i32_243 = arith.constant 0 : i32
    %249 = tpu.memref_slice %arg4[%248, %c0_i32_243] : memref<256x128xf32, #tpu.memory_space<any>> -> memref<1x128xf32, #tpu.memory_space<any>>
    %c7_i32_244 = arith.constant 7 : i32
    %c0_i32_245 = arith.constant 0 : i32
    %250 = tpu.memref_slice %arg8[%c0_i32_240, %c7_i32_244, %c0_i32_245] : memref<4x8x128xf32, #tpu.memory_space<vmem>> -> memref<1x1x128xf32, #tpu.memory_space<vmem>>
    %251 = tpu.memref_squeeze %250 : memref<1x1x128xf32, #tpu.memory_space<vmem>> -> memref<1x128xf32, #tpu.memory_space<vmem>>
    %252 = tpu.memref_slice %arg11[%c7_i32_241, %c0_i32_242] : memref<8x4x!tpu.dma_semaphore, #tpu.memory_space<semaphore_mem>> -> memref<1x1x!tpu.dma_semaphore, #tpu.memory_space<semaphore_mem>>
    %253 = tpu.memref_squeeze %252 : memref<1x1x!tpu.dma_semaphore, #tpu.memory_space<semaphore_mem>> -> memref<!tpu.dma_semaphore, #tpu.memory_space<semaphore_mem>>
    tpu.enqueue_dma source(%249 : memref<1x128xf32, #tpu.memory_space<any>>) target(%251 : memref<1x128xf32, #tpu.memory_space<vmem>>) target_semaphore(%253 : memref<!tpu.dma_semaphore, #tpu.memory_space<semaphore_mem>>)
    %c29 = arith.constant 29 : index
    %254 = memref.load %arg2[%c29] : memref<32xi32, #tpu.memory_space<smem>>
    %c1_i32_246 = arith.constant 1 : i32
    %c7_i32_247 = arith.constant 7 : i32
    %c1_i32_248 = arith.constant 1 : i32
    %c0_i32_249 = arith.constant 0 : i32
    %255 = tpu.memref_slice %arg4[%254, %c0_i32_249] : memref<256x128xf32, #tpu.memory_space<any>> -> memref<1x128xf32, #tpu.memory_space<any>>
    %c7_i32_250 = arith.constant 7 : i32
    %c0_i32_251 = arith.constant 0 : i32
    %256 = tpu.memref_slice %arg8[%c1_i32_246, %c7_i32_250, %c0_i32_251] : memref<4x8x128xf32, #tpu.memory_space<vmem>> -> memref<1x1x128xf32, #tpu.memory_space<vmem>>
    %257 = tpu.memref_squeeze %256 : memref<1x1x128xf32, #tpu.memory_space<vmem>> -> memref<1x128xf32, #tpu.memory_space<vmem>>
    %258 = tpu.memref_slice %arg11[%c7_i32_247, %c1_i32_248] : memref<8x4x!tpu.dma_semaphore, #tpu.memory_space<semaphore_mem>> -> memref<1x1x!tpu.dma_semaphore, #tpu.memory_space<semaphore_mem>>
    %259 = tpu.memref_squeeze %258 : memref<1x1x!tpu.dma_semaphore, #tpu.memory_space<semaphore_mem>> -> memref<!tpu.dma_semaphore, #tpu.memory_space<semaphore_mem>>
    tpu.enqueue_dma source(%255 : memref<1x128xf32, #tpu.memory_space<any>>) target(%257 : memref<1x128xf32, #tpu.memory_space<vmem>>) target_semaphore(%259 : memref<!tpu.dma_semaphore, #tpu.memory_space<semaphore_mem>>)
    %c30 = arith.constant 30 : index
    %260 = memref.load %arg2[%c30] : memref<32xi32, #tpu.memory_space<smem>>
    %c2_i32_252 = arith.constant 2 : i32
    %c7_i32_253 = arith.constant 7 : i32
    %c2_i32_254 = arith.constant 2 : i32
    %c0_i32_255 = arith.constant 0 : i32
    %261 = tpu.memref_slice %arg4[%260, %c0_i32_255] : memref<256x128xf32, #tpu.memory_space<any>> -> memref<1x128xf32, #tpu.memory_space<any>>
    %c7_i32_256 = arith.constant 7 : i32
    %c0_i32_257 = arith.constant 0 : i32
    %262 = tpu.memref_slice %arg8[%c2_i32_252, %c7_i32_256, %c0_i32_257] : memref<4x8x128xf32, #tpu.memory_space<vmem>> -> memref<1x1x128xf32, #tpu.memory_space<vmem>>
    %263 = tpu.memref_squeeze %262 : memref<1x1x128xf32, #tpu.memory_space<vmem>> -> memref<1x128xf32, #tpu.memory_space<vmem>>
    %264 = tpu.memref_slice %arg11[%c7_i32_253, %c2_i32_254] : memref<8x4x!tpu.dma_semaphore, #tpu.memory_space<semaphore_mem>> -> memref<1x1x!tpu.dma_semaphore, #tpu.memory_space<semaphore_mem>>
    %265 = tpu.memref_squeeze %264 : memref<1x1x!tpu.dma_semaphore, #tpu.memory_space<semaphore_mem>> -> memref<!tpu.dma_semaphore, #tpu.memory_space<semaphore_mem>>
    tpu.enqueue_dma source(%261 : memref<1x128xf32, #tpu.memory_space<any>>) target(%263 : memref<1x128xf32, #tpu.memory_space<vmem>>) target_semaphore(%265 : memref<!tpu.dma_semaphore, #tpu.memory_space<semaphore_mem>>)
    %c31 = arith.constant 31 : index
    %266 = memref.load %arg2[%c31] : memref<32xi32, #tpu.memory_space<smem>>
    %c3_i32_258 = arith.constant 3 : i32
    %c7_i32_259 = arith.constant 7 : i32
    %c3_i32_260 = arith.constant 3 : i32
    %c0_i32_261 = arith.constant 0 : i32
    %267 = tpu.memref_slice %arg4[%266, %c0_i32_261] : memref<256x128xf32, #tpu.memory_space<any>> -> memref<1x128xf32, #tpu.memory_space<any>>
    %c7_i32_262 = arith.constant 7 : i32
    %c0_i32_263 = arith.constant 0 : i32
    %268 = tpu.memref_slice %arg8[%c3_i32_258, %c7_i32_262, %c0_i32_263] : memref<4x8x128xf32, #tpu.memory_space<vmem>> -> memref<1x1x128xf32, #tpu.memory_space<vmem>>
    %269 = tpu.memref_squeeze %268 : memref<1x1x128xf32, #tpu.memory_space<vmem>> -> memref<1x128xf32, #tpu.memory_space<vmem>>
    %270 = tpu.memref_slice %arg11[%c7_i32_259, %c3_i32_260] : memref<8x4x!tpu.dma_semaphore, #tpu.memory_space<semaphore_mem>> -> memref<1x1x!tpu.dma_semaphore, #tpu.memory_space<semaphore_mem>>
    %271 = tpu.memref_squeeze %270 : memref<1x1x!tpu.dma_semaphore, #tpu.memory_space<semaphore_mem>> -> memref<!tpu.dma_semaphore, #tpu.memory_space<semaphore_mem>>
    tpu.enqueue_dma source(%267 : memref<1x128xf32, #tpu.memory_space<any>>) target(%269 : memref<1x128xf32, #tpu.memory_space<vmem>>) target_semaphore(%271 : memref<!tpu.dma_semaphore, #tpu.memory_space<semaphore_mem>>)
    %c0_i32_264 = arith.constant 0 : i32
    %c0_i32_265 = arith.constant 0 : i32
    %272 = tpu.memref_slice %arg3[%0, %c0_i32_265] : memref<256x128xf32, #tpu.memory_space<any>> -> memref<1x128xf32, #tpu.memory_space<any>>
    %c0_i32_266 = arith.constant 0 : i32
    %c0_i32_267 = arith.constant 0 : i32
    %273 = tpu.memref_slice %arg6[%c0_i32_266, %c0_i32_267] : memref<8x128xf32, #tpu.memory_space<vmem>> -> memref<1x128xf32, #tpu.memory_space<vmem>>
    %274 = tpu.memref_slice %arg9[%c0_i32_264] : memref<8x!tpu.dma_semaphore, #tpu.memory_space<semaphore_mem>> -> memref<1x!tpu.dma_semaphore, #tpu.memory_space<semaphore_mem>>
    %275 = tpu.memref_squeeze %274 : memref<1x!tpu.dma_semaphore, #tpu.memory_space<semaphore_mem>> -> memref<!tpu.dma_semaphore, #tpu.memory_space<semaphore_mem>>
    tpu.wait_dma2 semaphore(%275 : memref<!tpu.dma_semaphore, #tpu.memory_space<semaphore_mem>>) src(%272 : memref<1x128xf32, #tpu.memory_space<any>>) dst(%273 : memref<1x128xf32, #tpu.memory_space<vmem>>)
    %c1_i32_268 = arith.constant 1 : i32
    %c0_i32_269 = arith.constant 0 : i32
    %276 = tpu.memref_slice %arg3[%5, %c0_i32_269] : memref<256x128xf32, #tpu.memory_space<any>> -> memref<1x128xf32, #tpu.memory_space<any>>
    %c1_i32_270 = arith.constant 1 : i32
    %c0_i32_271 = arith.constant 0 : i32
    %277 = tpu.memref_slice %arg6[%c1_i32_270, %c0_i32_271] : memref<8x128xf32, #tpu.memory_space<vmem>> -> memref<1x128xf32, #tpu.memory_space<vmem>>
    %278 = tpu.memref_slice %arg9[%c1_i32_268] : memref<8x!tpu.dma_semaphore, #tpu.memory_space<semaphore_mem>> -> memref<1x!tpu.dma_semaphore, #tpu.memory_space<semaphore_mem>>
    %279 = tpu.memref_squeeze %278 : memref<1x!tpu.dma_semaphore, #tpu.memory_space<semaphore_mem>> -> memref<!tpu.dma_semaphore, #tpu.memory_space<semaphore_mem>>
    tpu.wait_dma2 semaphore(%279 : memref<!tpu.dma_semaphore, #tpu.memory_space<semaphore_mem>>) src(%276 : memref<1x128xf32, #tpu.memory_space<any>>) dst(%277 : memref<1x128xf32, #tpu.memory_space<vmem>>)
    %c2_i32_272 = arith.constant 2 : i32
    %c0_i32_273 = arith.constant 0 : i32
    %280 = tpu.memref_slice %arg3[%10, %c0_i32_273] : memref<256x128xf32, #tpu.memory_space<any>> -> memref<1x128xf32, #tpu.memory_space<any>>
    %c2_i32_274 = arith.constant 2 : i32
    %c0_i32_275 = arith.constant 0 : i32
    %281 = tpu.memref_slice %arg6[%c2_i32_274, %c0_i32_275] : memref<8x128xf32, #tpu.memory_space<vmem>> -> memref<1x128xf32, #tpu.memory_space<vmem>>
    %282 = tpu.memref_slice %arg9[%c2_i32_272] : memref<8x!tpu.dma_semaphore, #tpu.memory_space<semaphore_mem>> -> memref<1x!tpu.dma_semaphore, #tpu.memory_space<semaphore_mem>>
    %283 = tpu.memref_squeeze %282 : memref<1x!tpu.dma_semaphore, #tpu.memory_space<semaphore_mem>> -> memref<!tpu.dma_semaphore, #tpu.memory_space<semaphore_mem>>
    tpu.wait_dma2 semaphore(%283 : memref<!tpu.dma_semaphore, #tpu.memory_space<semaphore_mem>>) src(%280 : memref<1x128xf32, #tpu.memory_space<any>>) dst(%281 : memref<1x128xf32, #tpu.memory_space<vmem>>)
    %c3_i32_276 = arith.constant 3 : i32
    %c0_i32_277 = arith.constant 0 : i32
    %284 = tpu.memref_slice %arg3[%15, %c0_i32_277] : memref<256x128xf32, #tpu.memory_space<any>> -> memref<1x128xf32, #tpu.memory_space<any>>
    %c3_i32_278 = arith.constant 3 : i32
    %c0_i32_279 = arith.constant 0 : i32
    %285 = tpu.memref_slice %arg6[%c3_i32_278, %c0_i32_279] : memref<8x128xf32, #tpu.memory_space<vmem>> -> memref<1x128xf32, #tpu.memory_space<vmem>>
    %286 = tpu.memref_slice %arg9[%c3_i32_276] : memref<8x!tpu.dma_semaphore, #tpu.memory_space<semaphore_mem>> -> memref<1x!tpu.dma_semaphore, #tpu.memory_space<semaphore_mem>>
    %287 = tpu.memref_squeeze %286 : memref<1x!tpu.dma_semaphore, #tpu.memory_space<semaphore_mem>> -> memref<!tpu.dma_semaphore, #tpu.memory_space<semaphore_mem>>
    tpu.wait_dma2 semaphore(%287 : memref<!tpu.dma_semaphore, #tpu.memory_space<semaphore_mem>>) src(%284 : memref<1x128xf32, #tpu.memory_space<any>>) dst(%285 : memref<1x128xf32, #tpu.memory_space<vmem>>)
    %c4_i32_280 = arith.constant 4 : i32
    %c0_i32_281 = arith.constant 0 : i32
    %288 = tpu.memref_slice %arg3[%20, %c0_i32_281] : memref<256x128xf32, #tpu.memory_space<any>> -> memref<1x128xf32, #tpu.memory_space<any>>
    %c4_i32_282 = arith.constant 4 : i32
    %c0_i32_283 = arith.constant 0 : i32
    %289 = tpu.memref_slice %arg6[%c4_i32_282, %c0_i32_283] : memref<8x128xf32, #tpu.memory_space<vmem>> -> memref<1x128xf32, #tpu.memory_space<vmem>>
    %290 = tpu.memref_slice %arg9[%c4_i32_280] : memref<8x!tpu.dma_semaphore, #tpu.memory_space<semaphore_mem>> -> memref<1x!tpu.dma_semaphore, #tpu.memory_space<semaphore_mem>>
    %291 = tpu.memref_squeeze %290 : memref<1x!tpu.dma_semaphore, #tpu.memory_space<semaphore_mem>> -> memref<!tpu.dma_semaphore, #tpu.memory_space<semaphore_mem>>
    tpu.wait_dma2 semaphore(%291 : memref<!tpu.dma_semaphore, #tpu.memory_space<semaphore_mem>>) src(%288 : memref<1x128xf32, #tpu.memory_space<any>>) dst(%289 : memref<1x128xf32, #tpu.memory_space<vmem>>)
    %c5_i32_284 = arith.constant 5 : i32
    %c0_i32_285 = arith.constant 0 : i32
    %292 = tpu.memref_slice %arg3[%25, %c0_i32_285] : memref<256x128xf32, #tpu.memory_space<any>> -> memref<1x128xf32, #tpu.memory_space<any>>
    %c5_i32_286 = arith.constant 5 : i32
    %c0_i32_287 = arith.constant 0 : i32
    %293 = tpu.memref_slice %arg6[%c5_i32_286, %c0_i32_287] : memref<8x128xf32, #tpu.memory_space<vmem>> -> memref<1x128xf32, #tpu.memory_space<vmem>>
    %294 = tpu.memref_slice %arg9[%c5_i32_284] : memref<8x!tpu.dma_semaphore, #tpu.memory_space<semaphore_mem>> -> memref<1x!tpu.dma_semaphore, #tpu.memory_space<semaphore_mem>>
    %295 = tpu.memref_squeeze %294 : memref<1x!tpu.dma_semaphore, #tpu.memory_space<semaphore_mem>> -> memref<!tpu.dma_semaphore, #tpu.memory_space<semaphore_mem>>
    tpu.wait_dma2 semaphore(%295 : memref<!tpu.dma_semaphore, #tpu.memory_space<semaphore_mem>>) src(%292 : memref<1x128xf32, #tpu.memory_space<any>>) dst(%293 : memref<1x128xf32, #tpu.memory_space<vmem>>)
    %c6_i32_288 = arith.constant 6 : i32
    %c0_i32_289 = arith.constant 0 : i32
    %296 = tpu.memref_slice %arg3[%30, %c0_i32_289] : memref<256x128xf32, #tpu.memory_space<any>> -> memref<1x128xf32, #tpu.memory_space<any>>
    %c6_i32_290 = arith.constant 6 : i32
    %c0_i32_291 = arith.constant 0 : i32
    %297 = tpu.memref_slice %arg6[%c6_i32_290, %c0_i32_291] : memref<8x128xf32, #tpu.memory_space<vmem>> -> memref<1x128xf32, #tpu.memory_space<vmem>>
    %298 = tpu.memref_slice %arg9[%c6_i32_288] : memref<8x!tpu.dma_semaphore, #tpu.memory_space<semaphore_mem>> -> memref<1x!tpu.dma_semaphore, #tpu.memory_space<semaphore_mem>>
    %299 = tpu.memref_squeeze %298 : memref<1x!tpu.dma_semaphore, #tpu.memory_space<semaphore_mem>> -> memref<!tpu.dma_semaphore, #tpu.memory_space<semaphore_mem>>
    tpu.wait_dma2 semaphore(%299 : memref<!tpu.dma_semaphore, #tpu.memory_space<semaphore_mem>>) src(%296 : memref<1x128xf32, #tpu.memory_space<any>>) dst(%297 : memref<1x128xf32, #tpu.memory_space<vmem>>)
    %c7_i32_292 = arith.constant 7 : i32
    %c0_i32_293 = arith.constant 0 : i32
    %300 = tpu.memref_slice %arg3[%35, %c0_i32_293] : memref<256x128xf32, #tpu.memory_space<any>> -> memref<1x128xf32, #tpu.memory_space<any>>
    %c7_i32_294 = arith.constant 7 : i32
    %c0_i32_295 = arith.constant 0 : i32
    %301 = tpu.memref_slice %arg6[%c7_i32_294, %c0_i32_295] : memref<8x128xf32, #tpu.memory_space<vmem>> -> memref<1x128xf32, #tpu.memory_space<vmem>>
    %302 = tpu.memref_slice %arg9[%c7_i32_292] : memref<8x!tpu.dma_semaphore, #tpu.memory_space<semaphore_mem>> -> memref<1x!tpu.dma_semaphore, #tpu.memory_space<semaphore_mem>>
    %303 = tpu.memref_squeeze %302 : memref<1x!tpu.dma_semaphore, #tpu.memory_space<semaphore_mem>> -> memref<!tpu.dma_semaphore, #tpu.memory_space<semaphore_mem>>
    tpu.wait_dma2 semaphore(%303 : memref<!tpu.dma_semaphore, #tpu.memory_space<semaphore_mem>>) src(%300 : memref<1x128xf32, #tpu.memory_space<any>>) dst(%301 : memref<1x128xf32, #tpu.memory_space<vmem>>)
    %c0_i32_296 = arith.constant 0 : i32
    %c0_i32_297 = arith.constant 0 : i32
    %304 = tpu.memref_slice %arg4[%40, %c0_i32_297] : memref<256x128xf32, #tpu.memory_space<any>> -> memref<1x128xf32, #tpu.memory_space<any>>
    %c0_i32_298 = arith.constant 0 : i32
    %c0_i32_299 = arith.constant 0 : i32
    %305 = tpu.memref_slice %arg7[%c0_i32_298, %c0_i32_299] : memref<8x128xf32, #tpu.memory_space<vmem>> -> memref<1x128xf32, #tpu.memory_space<vmem>>
    %306 = tpu.memref_slice %arg10[%c0_i32_296] : memref<8x!tpu.dma_semaphore, #tpu.memory_space<semaphore_mem>> -> memref<1x!tpu.dma_semaphore, #tpu.memory_space<semaphore_mem>>
    %307 = tpu.memref_squeeze %306 : memref<1x!tpu.dma_semaphore, #tpu.memory_space<semaphore_mem>> -> memref<!tpu.dma_semaphore, #tpu.memory_space<semaphore_mem>>
    tpu.wait_dma2 semaphore(%307 : memref<!tpu.dma_semaphore, #tpu.memory_space<semaphore_mem>>) src(%304 : memref<1x128xf32, #tpu.memory_space<any>>) dst(%305 : memref<1x128xf32, #tpu.memory_space<vmem>>)
    %c1_i32_300 = arith.constant 1 : i32
    %c0_i32_301 = arith.constant 0 : i32
    %308 = tpu.memref_slice %arg4[%45, %c0_i32_301] : memref<256x128xf32, #tpu.memory_space<any>> -> memref<1x128xf32, #tpu.memory_space<any>>
    %c1_i32_302 = arith.constant 1 : i32
    %c0_i32_303 = arith.constant 0 : i32
    %309 = tpu.memref_slice %arg7[%c1_i32_302, %c0_i32_303] : memref<8x128xf32, #tpu.memory_space<vmem>> -> memref<1x128xf32, #tpu.memory_space<vmem>>
    %310 = tpu.memref_slice %arg10[%c1_i32_300] : memref<8x!tpu.dma_semaphore, #tpu.memory_space<semaphore_mem>> -> memref<1x!tpu.dma_semaphore, #tpu.memory_space<semaphore_mem>>
    %311 = tpu.memref_squeeze %310 : memref<1x!tpu.dma_semaphore, #tpu.memory_space<semaphore_mem>> -> memref<!tpu.dma_semaphore, #tpu.memory_space<semaphore_mem>>
    tpu.wait_dma2 semaphore(%311 : memref<!tpu.dma_semaphore, #tpu.memory_space<semaphore_mem>>) src(%308 : memref<1x128xf32, #tpu.memory_space<any>>) dst(%309 : memref<1x128xf32, #tpu.memory_space<vmem>>)
    %c2_i32_304 = arith.constant 2 : i32
    %c0_i32_305 = arith.constant 0 : i32
    %312 = tpu.memref_slice %arg4[%50, %c0_i32_305] : memref<256x128xf32, #tpu.memory_space<any>> -> memref<1x128xf32, #tpu.memory_space<any>>
    %c2_i32_306 = arith.constant 2 : i32
    %c0_i32_307 = arith.constant 0 : i32
    %313 = tpu.memref_slice %arg7[%c2_i32_306, %c0_i32_307] : memref<8x128xf32, #tpu.memory_space<vmem>> -> memref<1x128xf32, #tpu.memory_space<vmem>>
    %314 = tpu.memref_slice %arg10[%c2_i32_304] : memref<8x!tpu.dma_semaphore, #tpu.memory_space<semaphore_mem>> -> memref<1x!tpu.dma_semaphore, #tpu.memory_space<semaphore_mem>>
    %315 = tpu.memref_squeeze %314 : memref<1x!tpu.dma_semaphore, #tpu.memory_space<semaphore_mem>> -> memref<!tpu.dma_semaphore, #tpu.memory_space<semaphore_mem>>
    tpu.wait_dma2 semaphore(%315 : memref<!tpu.dma_semaphore, #tpu.memory_space<semaphore_mem>>) src(%312 : memref<1x128xf32, #tpu.memory_space<any>>) dst(%313 : memref<1x128xf32, #tpu.memory_space<vmem>>)
    %c3_i32_308 = arith.constant 3 : i32
    %c0_i32_309 = arith.constant 0 : i32
    %316 = tpu.memref_slice %arg4[%55, %c0_i32_309] : memref<256x128xf32, #tpu.memory_space<any>> -> memref<1x128xf32, #tpu.memory_space<any>>
    %c3_i32_310 = arith.constant 3 : i32
    %c0_i32_311 = arith.constant 0 : i32
    %317 = tpu.memref_slice %arg7[%c3_i32_310, %c0_i32_311] : memref<8x128xf32, #tpu.memory_space<vmem>> -> memref<1x128xf32, #tpu.memory_space<vmem>>
    %318 = tpu.memref_slice %arg10[%c3_i32_308] : memref<8x!tpu.dma_semaphore, #tpu.memory_space<semaphore_mem>> -> memref<1x!tpu.dma_semaphore, #tpu.memory_space<semaphore_mem>>
    %319 = tpu.memref_squeeze %318 : memref<1x!tpu.dma_semaphore, #tpu.memory_space<semaphore_mem>> -> memref<!tpu.dma_semaphore, #tpu.memory_space<semaphore_mem>>
    tpu.wait_dma2 semaphore(%319 : memref<!tpu.dma_semaphore, #tpu.memory_space<semaphore_mem>>) src(%316 : memref<1x128xf32, #tpu.memory_space<any>>) dst(%317 : memref<1x128xf32, #tpu.memory_space<vmem>>)
    %c4_i32_312 = arith.constant 4 : i32
    %c0_i32_313 = arith.constant 0 : i32
    %320 = tpu.memref_slice %arg4[%60, %c0_i32_313] : memref<256x128xf32, #tpu.memory_space<any>> -> memref<1x128xf32, #tpu.memory_space<any>>
    %c4_i32_314 = arith.constant 4 : i32
    %c0_i32_315 = arith.constant 0 : i32
    %321 = tpu.memref_slice %arg7[%c4_i32_314, %c0_i32_315] : memref<8x128xf32, #tpu.memory_space<vmem>> -> memref<1x128xf32, #tpu.memory_space<vmem>>
    %322 = tpu.memref_slice %arg10[%c4_i32_312] : memref<8x!tpu.dma_semaphore, #tpu.memory_space<semaphore_mem>> -> memref<1x!tpu.dma_semaphore, #tpu.memory_space<semaphore_mem>>
    %323 = tpu.memref_squeeze %322 : memref<1x!tpu.dma_semaphore, #tpu.memory_space<semaphore_mem>> -> memref<!tpu.dma_semaphore, #tpu.memory_space<semaphore_mem>>
    tpu.wait_dma2 semaphore(%323 : memref<!tpu.dma_semaphore, #tpu.memory_space<semaphore_mem>>) src(%320 : memref<1x128xf32, #tpu.memory_space<any>>) dst(%321 : memref<1x128xf32, #tpu.memory_space<vmem>>)
    %c5_i32_316 = arith.constant 5 : i32
    %c0_i32_317 = arith.constant 0 : i32
    %324 = tpu.memref_slice %arg4[%65, %c0_i32_317] : memref<256x128xf32, #tpu.memory_space<any>> -> memref<1x128xf32, #tpu.memory_space<any>>
    %c5_i32_318 = arith.constant 5 : i32
    %c0_i32_319 = arith.constant 0 : i32
    %325 = tpu.memref_slice %arg7[%c5_i32_318, %c0_i32_319] : memref<8x128xf32, #tpu.memory_space<vmem>> -> memref<1x128xf32, #tpu.memory_space<vmem>>
    %326 = tpu.memref_slice %arg10[%c5_i32_316] : memref<8x!tpu.dma_semaphore, #tpu.memory_space<semaphore_mem>> -> memref<1x!tpu.dma_semaphore, #tpu.memory_space<semaphore_mem>>
    %327 = tpu.memref_squeeze %326 : memref<1x!tpu.dma_semaphore, #tpu.memory_space<semaphore_mem>> -> memref<!tpu.dma_semaphore, #tpu.memory_space<semaphore_mem>>
    tpu.wait_dma2 semaphore(%327 : memref<!tpu.dma_semaphore, #tpu.memory_space<semaphore_mem>>) src(%324 : memref<1x128xf32, #tpu.memory_space<any>>) dst(%325 : memref<1x128xf32, #tpu.memory_space<vmem>>)
    %c6_i32_320 = arith.constant 6 : i32
    %c0_i32_321 = arith.constant 0 : i32
    %328 = tpu.memref_slice %arg4[%70, %c0_i32_321] : memref<256x128xf32, #tpu.memory_space<any>> -> memref<1x128xf32, #tpu.memory_space<any>>
    %c6_i32_322 = arith.constant 6 : i32
    %c0_i32_323 = arith.constant 0 : i32
    %329 = tpu.memref_slice %arg7[%c6_i32_322, %c0_i32_323] : memref<8x128xf32, #tpu.memory_space<vmem>> -> memref<1x128xf32, #tpu.memory_space<vmem>>
    %330 = tpu.memref_slice %arg10[%c6_i32_320] : memref<8x!tpu.dma_semaphore, #tpu.memory_space<semaphore_mem>> -> memref<1x!tpu.dma_semaphore, #tpu.memory_space<semaphore_mem>>
    %331 = tpu.memref_squeeze %330 : memref<1x!tpu.dma_semaphore, #tpu.memory_space<semaphore_mem>> -> memref<!tpu.dma_semaphore, #tpu.memory_space<semaphore_mem>>
    tpu.wait_dma2 semaphore(%331 : memref<!tpu.dma_semaphore, #tpu.memory_space<semaphore_mem>>) src(%328 : memref<1x128xf32, #tpu.memory_space<any>>) dst(%329 : memref<1x128xf32, #tpu.memory_space<vmem>>)
    %c7_i32_324 = arith.constant 7 : i32
    %c0_i32_325 = arith.constant 0 : i32
    %332 = tpu.memref_slice %arg4[%75, %c0_i32_325] : memref<256x128xf32, #tpu.memory_space<any>> -> memref<1x128xf32, #tpu.memory_space<any>>
    %c7_i32_326 = arith.constant 7 : i32
    %c0_i32_327 = arith.constant 0 : i32
    %333 = tpu.memref_slice %arg7[%c7_i32_326, %c0_i32_327] : memref<8x128xf32, #tpu.memory_space<vmem>> -> memref<1x128xf32, #tpu.memory_space<vmem>>
    %334 = tpu.memref_slice %arg10[%c7_i32_324] : memref<8x!tpu.dma_semaphore, #tpu.memory_space<semaphore_mem>> -> memref<1x!tpu.dma_semaphore, #tpu.memory_space<semaphore_mem>>
    %335 = tpu.memref_squeeze %334 : memref<1x!tpu.dma_semaphore, #tpu.memory_space<semaphore_mem>> -> memref<!tpu.dma_semaphore, #tpu.memory_space<semaphore_mem>>
    tpu.wait_dma2 semaphore(%335 : memref<!tpu.dma_semaphore, #tpu.memory_space<semaphore_mem>>) src(%332 : memref<1x128xf32, #tpu.memory_space<any>>) dst(%333 : memref<1x128xf32, #tpu.memory_space<vmem>>)
    %c0_i32_328 = arith.constant 0 : i32
    %c0_i32_329 = arith.constant 0 : i32
    %c0_i32_330 = arith.constant 0 : i32
    %c0_i32_331 = arith.constant 0 : i32
    %336 = tpu.memref_slice %arg4[%80, %c0_i32_331] : memref<256x128xf32, #tpu.memory_space<any>> -> memref<1x128xf32, #tpu.memory_space<any>>
    %c0_i32_332 = arith.constant 0 : i32
    %c0_i32_333 = arith.constant 0 : i32
    %337 = tpu.memref_slice %arg8[%c0_i32_328, %c0_i32_332, %c0_i32_333] : memref<4x8x128xf32, #tpu.memory_space<vmem>> -> memref<1x1x128xf32, #tpu.memory_space<vmem>>
    %338 = tpu.memref_squeeze %337 : memref<1x1x128xf32, #tpu.memory_space<vmem>> -> memref<1x128xf32, #tpu.memory_space<vmem>>
    %339 = tpu.memref_slice %arg11[%c0_i32_329, %c0_i32_330] : memref<8x4x!tpu.dma_semaphore, #tpu.memory_space<semaphore_mem>> -> memref<1x1x!tpu.dma_semaphore, #tpu.memory_space<semaphore_mem>>
    %340 = tpu.memref_squeeze %339 : memref<1x1x!tpu.dma_semaphore, #tpu.memory_space<semaphore_mem>> -> memref<!tpu.dma_semaphore, #tpu.memory_space<semaphore_mem>>
    tpu.wait_dma2 semaphore(%340 : memref<!tpu.dma_semaphore, #tpu.memory_space<semaphore_mem>>) src(%336 : memref<1x128xf32, #tpu.memory_space<any>>) dst(%338 : memref<1x128xf32, #tpu.memory_space<vmem>>)
    %c1_i32_334 = arith.constant 1 : i32
    %c0_i32_335 = arith.constant 0 : i32
    %c1_i32_336 = arith.constant 1 : i32
    %c0_i32_337 = arith.constant 0 : i32
    %341 = tpu.memref_slice %arg4[%86, %c0_i32_337] : memref<256x128xf32, #tpu.memory_space<any>> -> memref<1x128xf32, #tpu.memory_space<any>>
    %c0_i32_338 = arith.constant 0 : i32
    %c0_i32_339 = arith.constant 0 : i32
    %342 = tpu.memref_slice %arg8[%c1_i32_334, %c0_i32_338, %c0_i32_339] : memref<4x8x128xf32, #tpu.memory_space<vmem>> -> memref<1x1x128xf32, #tpu.memory_space<vmem>>
    %343 = tpu.memref_squeeze %342 : memref<1x1x128xf32, #tpu.memory_space<vmem>> -> memref<1x128xf32, #tpu.memory_space<vmem>>
    %344 = tpu.memref_slice %arg11[%c0_i32_335, %c1_i32_336] : memref<8x4x!tpu.dma_semaphore, #tpu.memory_space<semaphore_mem>> -> memref<1x1x!tpu.dma_semaphore, #tpu.memory_space<semaphore_mem>>
    %345 = tpu.memref_squeeze %344 : memref<1x1x!tpu.dma_semaphore, #tpu.memory_space<semaphore_mem>> -> memref<!tpu.dma_semaphore, #tpu.memory_space<semaphore_mem>>
    tpu.wait_dma2 semaphore(%345 : memref<!tpu.dma_semaphore, #tpu.memory_space<semaphore_mem>>) src(%341 : memref<1x128xf32, #tpu.memory_space<any>>) dst(%343 : memref<1x128xf32, #tpu.memory_space<vmem>>)
    %c2_i32_340 = arith.constant 2 : i32
    %c0_i32_341 = arith.constant 0 : i32
    %c2_i32_342 = arith.constant 2 : i32
    %c0_i32_343 = arith.constant 0 : i32
    %346 = tpu.memref_slice %arg4[%92, %c0_i32_343] : memref<256x128xf32, #tpu.memory_space<any>> -> memref<1x128xf32, #tpu.memory_space<any>>
    %c0_i32_344 = arith.constant 0 : i32
    %c0_i32_345 = arith.constant 0 : i32
    %347 = tpu.memref_slice %arg8[%c2_i32_340, %c0_i32_344, %c0_i32_345] : memref<4x8x128xf32, #tpu.memory_space<vmem>> -> memref<1x1x128xf32, #tpu.memory_space<vmem>>
    %348 = tpu.memref_squeeze %347 : memref<1x1x128xf32, #tpu.memory_space<vmem>> -> memref<1x128xf32, #tpu.memory_space<vmem>>
    %349 = tpu.memref_slice %arg11[%c0_i32_341, %c2_i32_342] : memref<8x4x!tpu.dma_semaphore, #tpu.memory_space<semaphore_mem>> -> memref<1x1x!tpu.dma_semaphore, #tpu.memory_space<semaphore_mem>>
    %350 = tpu.memref_squeeze %349 : memref<1x1x!tpu.dma_semaphore, #tpu.memory_space<semaphore_mem>> -> memref<!tpu.dma_semaphore, #tpu.memory_space<semaphore_mem>>
    tpu.wait_dma2 semaphore(%350 : memref<!tpu.dma_semaphore, #tpu.memory_space<semaphore_mem>>) src(%346 : memref<1x128xf32, #tpu.memory_space<any>>) dst(%348 : memref<1x128xf32, #tpu.memory_space<vmem>>)
    %c3_i32_346 = arith.constant 3 : i32
    %c0_i32_347 = arith.constant 0 : i32
    %c3_i32_348 = arith.constant 3 : i32
    %c0_i32_349 = arith.constant 0 : i32
    %351 = tpu.memref_slice %arg4[%98, %c0_i32_349] : memref<256x128xf32, #tpu.memory_space<any>> -> memref<1x128xf32, #tpu.memory_space<any>>
    %c0_i32_350 = arith.constant 0 : i32
    %c0_i32_351 = arith.constant 0 : i32
    %352 = tpu.memref_slice %arg8[%c3_i32_346, %c0_i32_350, %c0_i32_351] : memref<4x8x128xf32, #tpu.memory_space<vmem>> -> memref<1x1x128xf32, #tpu.memory_space<vmem>>
    %353 = tpu.memref_squeeze %352 : memref<1x1x128xf32, #tpu.memory_space<vmem>> -> memref<1x128xf32, #tpu.memory_space<vmem>>
    %354 = tpu.memref_slice %arg11[%c0_i32_347, %c3_i32_348] : memref<8x4x!tpu.dma_semaphore, #tpu.memory_space<semaphore_mem>> -> memref<1x1x!tpu.dma_semaphore, #tpu.memory_space<semaphore_mem>>
    %355 = tpu.memref_squeeze %354 : memref<1x1x!tpu.dma_semaphore, #tpu.memory_space<semaphore_mem>> -> memref<!tpu.dma_semaphore, #tpu.memory_space<semaphore_mem>>
    tpu.wait_dma2 semaphore(%355 : memref<!tpu.dma_semaphore, #tpu.memory_space<semaphore_mem>>) src(%351 : memref<1x128xf32, #tpu.memory_space<any>>) dst(%353 : memref<1x128xf32, #tpu.memory_space<vmem>>)
    %c0_i32_352 = arith.constant 0 : i32
    %c1_i32_353 = arith.constant 1 : i32
    %c0_i32_354 = arith.constant 0 : i32
    %c0_i32_355 = arith.constant 0 : i32
    %356 = tpu.memref_slice %arg4[%104, %c0_i32_355] : memref<256x128xf32, #tpu.memory_space<any>> -> memref<1x128xf32, #tpu.memory_space<any>>
    %c1_i32_356 = arith.constant 1 : i32
    %c0_i32_357 = arith.constant 0 : i32
    %357 = tpu.memref_slice %arg8[%c0_i32_352, %c1_i32_356, %c0_i32_357] : memref<4x8x128xf32, #tpu.memory_space<vmem>> -> memref<1x1x128xf32, #tpu.memory_space<vmem>>
    %358 = tpu.memref_squeeze %357 : memref<1x1x128xf32, #tpu.memory_space<vmem>> -> memref<1x128xf32, #tpu.memory_space<vmem>>
    %359 = tpu.memref_slice %arg11[%c1_i32_353, %c0_i32_354] : memref<8x4x!tpu.dma_semaphore, #tpu.memory_space<semaphore_mem>> -> memref<1x1x!tpu.dma_semaphore, #tpu.memory_space<semaphore_mem>>
    %360 = tpu.memref_squeeze %359 : memref<1x1x!tpu.dma_semaphore, #tpu.memory_space<semaphore_mem>> -> memref<!tpu.dma_semaphore, #tpu.memory_space<semaphore_mem>>
    tpu.wait_dma2 semaphore(%360 : memref<!tpu.dma_semaphore, #tpu.memory_space<semaphore_mem>>) src(%356 : memref<1x128xf32, #tpu.memory_space<any>>) dst(%358 : memref<1x128xf32, #tpu.memory_space<vmem>>)
    %c1_i32_358 = arith.constant 1 : i32
    %c1_i32_359 = arith.constant 1 : i32
    %c1_i32_360 = arith.constant 1 : i32
    %c0_i32_361 = arith.constant 0 : i32
    %361 = tpu.memref_slice %arg4[%110, %c0_i32_361] : memref<256x128xf32, #tpu.memory_space<any>> -> memref<1x128xf32, #tpu.memory_space<any>>
    %c1_i32_362 = arith.constant 1 : i32
    %c0_i32_363 = arith.constant 0 : i32
    %362 = tpu.memref_slice %arg8[%c1_i32_358, %c1_i32_362, %c0_i32_363] : memref<4x8x128xf32, #tpu.memory_space<vmem>> -> memref<1x1x128xf32, #tpu.memory_space<vmem>>
    %363 = tpu.memref_squeeze %362 : memref<1x1x128xf32, #tpu.memory_space<vmem>> -> memref<1x128xf32, #tpu.memory_space<vmem>>
    %364 = tpu.memref_slice %arg11[%c1_i32_359, %c1_i32_360] : memref<8x4x!tpu.dma_semaphore, #tpu.memory_space<semaphore_mem>> -> memref<1x1x!tpu.dma_semaphore, #tpu.memory_space<semaphore_mem>>
    %365 = tpu.memref_squeeze %364 : memref<1x1x!tpu.dma_semaphore, #tpu.memory_space<semaphore_mem>> -> memref<!tpu.dma_semaphore, #tpu.memory_space<semaphore_mem>>
    tpu.wait_dma2 semaphore(%365 : memref<!tpu.dma_semaphore, #tpu.memory_space<semaphore_mem>>) src(%361 : memref<1x128xf32, #tpu.memory_space<any>>) dst(%363 : memref<1x128xf32, #tpu.memory_space<vmem>>)
    %c2_i32_364 = arith.constant 2 : i32
    %c1_i32_365 = arith.constant 1 : i32
    %c2_i32_366 = arith.constant 2 : i32
    %c0_i32_367 = arith.constant 0 : i32
    %366 = tpu.memref_slice %arg4[%116, %c0_i32_367] : memref<256x128xf32, #tpu.memory_space<any>> -> memref<1x128xf32, #tpu.memory_space<any>>
    %c1_i32_368 = arith.constant 1 : i32
    %c0_i32_369 = arith.constant 0 : i32
    %367 = tpu.memref_slice %arg8[%c2_i32_364, %c1_i32_368, %c0_i32_369] : memref<4x8x128xf32, #tpu.memory_space<vmem>> -> memref<1x1x128xf32, #tpu.memory_space<vmem>>
    %368 = tpu.memref_squeeze %367 : memref<1x1x128xf32, #tpu.memory_space<vmem>> -> memref<1x128xf32, #tpu.memory_space<vmem>>
    %369 = tpu.memref_slice %arg11[%c1_i32_365, %c2_i32_366] : memref<8x4x!tpu.dma_semaphore, #tpu.memory_space<semaphore_mem>> -> memref<1x1x!tpu.dma_semaphore, #tpu.memory_space<semaphore_mem>>
    %370 = tpu.memref_squeeze %369 : memref<1x1x!tpu.dma_semaphore, #tpu.memory_space<semaphore_mem>> -> memref<!tpu.dma_semaphore, #tpu.memory_space<semaphore_mem>>
    tpu.wait_dma2 semaphore(%370 : memref<!tpu.dma_semaphore, #tpu.memory_space<semaphore_mem>>) src(%366 : memref<1x128xf32, #tpu.memory_space<any>>) dst(%368 : memref<1x128xf32, #tpu.memory_space<vmem>>)
    %c3_i32_370 = arith.constant 3 : i32
    %c1_i32_371 = arith.constant 1 : i32
    %c3_i32_372 = arith.constant 3 : i32
    %c0_i32_373 = arith.constant 0 : i32
    %371 = tpu.memref_slice %arg4[%122, %c0_i32_373] : memref<256x128xf32, #tpu.memory_space<any>> -> memref<1x128xf32, #tpu.memory_space<any>>
    %c1_i32_374 = arith.constant 1 : i32
    %c0_i32_375 = arith.constant 0 : i32
    %372 = tpu.memref_slice %arg8[%c3_i32_370, %c1_i32_374, %c0_i32_375] : memref<4x8x128xf32, #tpu.memory_space<vmem>> -> memref<1x1x128xf32, #tpu.memory_space<vmem>>
    %373 = tpu.memref_squeeze %372 : memref<1x1x128xf32, #tpu.memory_space<vmem>> -> memref<1x128xf32, #tpu.memory_space<vmem>>
    %374 = tpu.memref_slice %arg11[%c1_i32_371, %c3_i32_372] : memref<8x4x!tpu.dma_semaphore, #tpu.memory_space<semaphore_mem>> -> memref<1x1x!tpu.dma_semaphore, #tpu.memory_space<semaphore_mem>>
    %375 = tpu.memref_squeeze %374 : memref<1x1x!tpu.dma_semaphore, #tpu.memory_space<semaphore_mem>> -> memref<!tpu.dma_semaphore, #tpu.memory_space<semaphore_mem>>
    tpu.wait_dma2 semaphore(%375 : memref<!tpu.dma_semaphore, #tpu.memory_space<semaphore_mem>>) src(%371 : memref<1x128xf32, #tpu.memory_space<any>>) dst(%373 : memref<1x128xf32, #tpu.memory_space<vmem>>)
    %c0_i32_376 = arith.constant 0 : i32
    %c2_i32_377 = arith.constant 2 : i32
    %c0_i32_378 = arith.constant 0 : i32
    %c0_i32_379 = arith.constant 0 : i32
    %376 = tpu.memref_slice %arg4[%128, %c0_i32_379] : memref<256x128xf32, #tpu.memory_space<any>> -> memref<1x128xf32, #tpu.memory_space<any>>
    %c2_i32_380 = arith.constant 2 : i32
    %c0_i32_381 = arith.constant 0 : i32
    %377 = tpu.memref_slice %arg8[%c0_i32_376, %c2_i32_380, %c0_i32_381] : memref<4x8x128xf32, #tpu.memory_space<vmem>> -> memref<1x1x128xf32, #tpu.memory_space<vmem>>
    %378 = tpu.memref_squeeze %377 : memref<1x1x128xf32, #tpu.memory_space<vmem>> -> memref<1x128xf32, #tpu.memory_space<vmem>>
    %379 = tpu.memref_slice %arg11[%c2_i32_377, %c0_i32_378] : memref<8x4x!tpu.dma_semaphore, #tpu.memory_space<semaphore_mem>> -> memref<1x1x!tpu.dma_semaphore, #tpu.memory_space<semaphore_mem>>
    %380 = tpu.memref_squeeze %379 : memref<1x1x!tpu.dma_semaphore, #tpu.memory_space<semaphore_mem>> -> memref<!tpu.dma_semaphore, #tpu.memory_space<semaphore_mem>>
    tpu.wait_dma2 semaphore(%380 : memref<!tpu.dma_semaphore, #tpu.memory_space<semaphore_mem>>) src(%376 : memref<1x128xf32, #tpu.memory_space<any>>) dst(%378 : memref<1x128xf32, #tpu.memory_space<vmem>>)
    %c1_i32_382 = arith.constant 1 : i32
    %c2_i32_383 = arith.constant 2 : i32
    %c1_i32_384 = arith.constant 1 : i32
    %c0_i32_385 = arith.constant 0 : i32
    %381 = tpu.memref_slice %arg4[%134, %c0_i32_385] : memref<256x128xf32, #tpu.memory_space<any>> -> memref<1x128xf32, #tpu.memory_space<any>>
    %c2_i32_386 = arith.constant 2 : i32
    %c0_i32_387 = arith.constant 0 : i32
    %382 = tpu.memref_slice %arg8[%c1_i32_382, %c2_i32_386, %c0_i32_387] : memref<4x8x128xf32, #tpu.memory_space<vmem>> -> memref<1x1x128xf32, #tpu.memory_space<vmem>>
    %383 = tpu.memref_squeeze %382 : memref<1x1x128xf32, #tpu.memory_space<vmem>> -> memref<1x128xf32, #tpu.memory_space<vmem>>
    %384 = tpu.memref_slice %arg11[%c2_i32_383, %c1_i32_384] : memref<8x4x!tpu.dma_semaphore, #tpu.memory_space<semaphore_mem>> -> memref<1x1x!tpu.dma_semaphore, #tpu.memory_space<semaphore_mem>>
    %385 = tpu.memref_squeeze %384 : memref<1x1x!tpu.dma_semaphore, #tpu.memory_space<semaphore_mem>> -> memref<!tpu.dma_semaphore, #tpu.memory_space<semaphore_mem>>
    tpu.wait_dma2 semaphore(%385 : memref<!tpu.dma_semaphore, #tpu.memory_space<semaphore_mem>>) src(%381 : memref<1x128xf32, #tpu.memory_space<any>>) dst(%383 : memref<1x128xf32, #tpu.memory_space<vmem>>)
    %c2_i32_388 = arith.constant 2 : i32
    %c2_i32_389 = arith.constant 2 : i32
    %c2_i32_390 = arith.constant 2 : i32
    %c0_i32_391 = arith.constant 0 : i32
    %386 = tpu.memref_slice %arg4[%140, %c0_i32_391] : memref<256x128xf32, #tpu.memory_space<any>> -> memref<1x128xf32, #tpu.memory_space<any>>
    %c2_i32_392 = arith.constant 2 : i32
    %c0_i32_393 = arith.constant 0 : i32
    %387 = tpu.memref_slice %arg8[%c2_i32_388, %c2_i32_392, %c0_i32_393] : memref<4x8x128xf32, #tpu.memory_space<vmem>> -> memref<1x1x128xf32, #tpu.memory_space<vmem>>
    %388 = tpu.memref_squeeze %387 : memref<1x1x128xf32, #tpu.memory_space<vmem>> -> memref<1x128xf32, #tpu.memory_space<vmem>>
    %389 = tpu.memref_slice %arg11[%c2_i32_389, %c2_i32_390] : memref<8x4x!tpu.dma_semaphore, #tpu.memory_space<semaphore_mem>> -> memref<1x1x!tpu.dma_semaphore, #tpu.memory_space<semaphore_mem>>
    %390 = tpu.memref_squeeze %389 : memref<1x1x!tpu.dma_semaphore, #tpu.memory_space<semaphore_mem>> -> memref<!tpu.dma_semaphore, #tpu.memory_space<semaphore_mem>>
    tpu.wait_dma2 semaphore(%390 : memref<!tpu.dma_semaphore, #tpu.memory_space<semaphore_mem>>) src(%386 : memref<1x128xf32, #tpu.memory_space<any>>) dst(%388 : memref<1x128xf32, #tpu.memory_space<vmem>>)
    %c3_i32_394 = arith.constant 3 : i32
    %c2_i32_395 = arith.constant 2 : i32
    %c3_i32_396 = arith.constant 3 : i32
    %c0_i32_397 = arith.constant 0 : i32
    %391 = tpu.memref_slice %arg4[%146, %c0_i32_397] : memref<256x128xf32, #tpu.memory_space<any>> -> memref<1x128xf32, #tpu.memory_space<any>>
    %c2_i32_398 = arith.constant 2 : i32
    %c0_i32_399 = arith.constant 0 : i32
    %392 = tpu.memref_slice %arg8[%c3_i32_394, %c2_i32_398, %c0_i32_399] : memref<4x8x128xf32, #tpu.memory_space<vmem>> -> memref<1x1x128xf32, #tpu.memory_space<vmem>>
    %393 = tpu.memref_squeeze %392 : memref<1x1x128xf32, #tpu.memory_space<vmem>> -> memref<1x128xf32, #tpu.memory_space<vmem>>
    %394 = tpu.memref_slice %arg11[%c2_i32_395, %c3_i32_396] : memref<8x4x!tpu.dma_semaphore, #tpu.memory_space<semaphore_mem>> -> memref<1x1x!tpu.dma_semaphore, #tpu.memory_space<semaphore_mem>>
    %395 = tpu.memref_squeeze %394 : memref<1x1x!tpu.dma_semaphore, #tpu.memory_space<semaphore_mem>> -> memref<!tpu.dma_semaphore, #tpu.memory_space<semaphore_mem>>
    tpu.wait_dma2 semaphore(%395 : memref<!tpu.dma_semaphore, #tpu.memory_space<semaphore_mem>>) src(%391 : memref<1x128xf32, #tpu.memory_space<any>>) dst(%393 : memref<1x128xf32, #tpu.memory_space<vmem>>)
    %c0_i32_400 = arith.constant 0 : i32
    %c3_i32_401 = arith.constant 3 : i32
    %c0_i32_402 = arith.constant 0 : i32
    %c0_i32_403 = arith.constant 0 : i32
    %396 = tpu.memref_slice %arg4[%152, %c0_i32_403] : memref<256x128xf32, #tpu.memory_space<any>> -> memref<1x128xf32, #tpu.memory_space<any>>
    %c3_i32_404 = arith.constant 3 : i32
    %c0_i32_405 = arith.constant 0 : i32
    %397 = tpu.memref_slice %arg8[%c0_i32_400, %c3_i32_404, %c0_i32_405] : memref<4x8x128xf32, #tpu.memory_space<vmem>> -> memref<1x1x128xf32, #tpu.memory_space<vmem>>
    %398 = tpu.memref_squeeze %397 : memref<1x1x128xf32, #tpu.memory_space<vmem>> -> memref<1x128xf32, #tpu.memory_space<vmem>>
    %399 = tpu.memref_slice %arg11[%c3_i32_401, %c0_i32_402] : memref<8x4x!tpu.dma_semaphore, #tpu.memory_space<semaphore_mem>> -> memref<1x1x!tpu.dma_semaphore, #tpu.memory_space<semaphore_mem>>
    %400 = tpu.memref_squeeze %399 : memref<1x1x!tpu.dma_semaphore, #tpu.memory_space<semaphore_mem>> -> memref<!tpu.dma_semaphore, #tpu.memory_space<semaphore_mem>>
    tpu.wait_dma2 semaphore(%400 : memref<!tpu.dma_semaphore, #tpu.memory_space<semaphore_mem>>) src(%396 : memref<1x128xf32, #tpu.memory_space<any>>) dst(%398 : memref<1x128xf32, #tpu.memory_space<vmem>>)
    %c1_i32_406 = arith.constant 1 : i32
    %c3_i32_407 = arith.constant 3 : i32
    %c1_i32_408 = arith.constant 1 : i32
    %c0_i32_409 = arith.constant 0 : i32
    %401 = tpu.memref_slice %arg4[%158, %c0_i32_409] : memref<256x128xf32, #tpu.memory_space<any>> -> memref<1x128xf32, #tpu.memory_space<any>>
    %c3_i32_410 = arith.constant 3 : i32
    %c0_i32_411 = arith.constant 0 : i32
    %402 = tpu.memref_slice %arg8[%c1_i32_406, %c3_i32_410, %c0_i32_411] : memref<4x8x128xf32, #tpu.memory_space<vmem>> -> memref<1x1x128xf32, #tpu.memory_space<vmem>>
    %403 = tpu.memref_squeeze %402 : memref<1x1x128xf32, #tpu.memory_space<vmem>> -> memref<1x128xf32, #tpu.memory_space<vmem>>
    %404 = tpu.memref_slice %arg11[%c3_i32_407, %c1_i32_408] : memref<8x4x!tpu.dma_semaphore, #tpu.memory_space<semaphore_mem>> -> memref<1x1x!tpu.dma_semaphore, #tpu.memory_space<semaphore_mem>>
    %405 = tpu.memref_squeeze %404 : memref<1x1x!tpu.dma_semaphore, #tpu.memory_space<semaphore_mem>> -> memref<!tpu.dma_semaphore, #tpu.memory_space<semaphore_mem>>
    tpu.wait_dma2 semaphore(%405 : memref<!tpu.dma_semaphore, #tpu.memory_space<semaphore_mem>>) src(%401 : memref<1x128xf32, #tpu.memory_space<any>>) dst(%403 : memref<1x128xf32, #tpu.memory_space<vmem>>)
    %c2_i32_412 = arith.constant 2 : i32
    %c3_i32_413 = arith.constant 3 : i32
    %c2_i32_414 = arith.constant 2 : i32
    %c0_i32_415 = arith.constant 0 : i32
    %406 = tpu.memref_slice %arg4[%164, %c0_i32_415] : memref<256x128xf32, #tpu.memory_space<any>> -> memref<1x128xf32, #tpu.memory_space<any>>
    %c3_i32_416 = arith.constant 3 : i32
    %c0_i32_417 = arith.constant 0 : i32
    %407 = tpu.memref_slice %arg8[%c2_i32_412, %c3_i32_416, %c0_i32_417] : memref<4x8x128xf32, #tpu.memory_space<vmem>> -> memref<1x1x128xf32, #tpu.memory_space<vmem>>
    %408 = tpu.memref_squeeze %407 : memref<1x1x128xf32, #tpu.memory_space<vmem>> -> memref<1x128xf32, #tpu.memory_space<vmem>>
    %409 = tpu.memref_slice %arg11[%c3_i32_413, %c2_i32_414] : memref<8x4x!tpu.dma_semaphore, #tpu.memory_space<semaphore_mem>> -> memref<1x1x!tpu.dma_semaphore, #tpu.memory_space<semaphore_mem>>
    %410 = tpu.memref_squeeze %409 : memref<1x1x!tpu.dma_semaphore, #tpu.memory_space<semaphore_mem>> -> memref<!tpu.dma_semaphore, #tpu.memory_space<semaphore_mem>>
    tpu.wait_dma2 semaphore(%410 : memref<!tpu.dma_semaphore, #tpu.memory_space<semaphore_mem>>) src(%406 : memref<1x128xf32, #tpu.memory_space<any>>) dst(%408 : memref<1x128xf32, #tpu.memory_space<vmem>>)
    %c3_i32_418 = arith.constant 3 : i32
    %c3_i32_419 = arith.constant 3 : i32
    %c3_i32_420 = arith.constant 3 : i32
    %c0_i32_421 = arith.constant 0 : i32
    %411 = tpu.memref_slice %arg4[%170, %c0_i32_421] : memref<256x128xf32, #tpu.memory_space<any>> -> memref<1x128xf32, #tpu.memory_space<any>>
    %c3_i32_422 = arith.constant 3 : i32
    %c0_i32_423 = arith.constant 0 : i32
    %412 = tpu.memref_slice %arg8[%c3_i32_418, %c3_i32_422, %c0_i32_423] : memref<4x8x128xf32, #tpu.memory_space<vmem>> -> memref<1x1x128xf32, #tpu.memory_space<vmem>>
    %413 = tpu.memref_squeeze %412 : memref<1x1x128xf32, #tpu.memory_space<vmem>> -> memref<1x128xf32, #tpu.memory_space<vmem>>
    %414 = tpu.memref_slice %arg11[%c3_i32_419, %c3_i32_420] : memref<8x4x!tpu.dma_semaphore, #tpu.memory_space<semaphore_mem>> -> memref<1x1x!tpu.dma_semaphore, #tpu.memory_space<semaphore_mem>>
    %415 = tpu.memref_squeeze %414 : memref<1x1x!tpu.dma_semaphore, #tpu.memory_space<semaphore_mem>> -> memref<!tpu.dma_semaphore, #tpu.memory_space<semaphore_mem>>
    tpu.wait_dma2 semaphore(%415 : memref<!tpu.dma_semaphore, #tpu.memory_space<semaphore_mem>>) src(%411 : memref<1x128xf32, #tpu.memory_space<any>>) dst(%413 : memref<1x128xf32, #tpu.memory_space<vmem>>)
    %c0_i32_424 = arith.constant 0 : i32
    %c4_i32_425 = arith.constant 4 : i32
    %c0_i32_426 = arith.constant 0 : i32
    %c0_i32_427 = arith.constant 0 : i32
    %416 = tpu.memref_slice %arg4[%176, %c0_i32_427] : memref<256x128xf32, #tpu.memory_space<any>> -> memref<1x128xf32, #tpu.memory_space<any>>
    %c4_i32_428 = arith.constant 4 : i32
    %c0_i32_429 = arith.constant 0 : i32
    %417 = tpu.memref_slice %arg8[%c0_i32_424, %c4_i32_428, %c0_i32_429] : memref<4x8x128xf32, #tpu.memory_space<vmem>> -> memref<1x1x128xf32, #tpu.memory_space<vmem>>
    %418 = tpu.memref_squeeze %417 : memref<1x1x128xf32, #tpu.memory_space<vmem>> -> memref<1x128xf32, #tpu.memory_space<vmem>>
    %419 = tpu.memref_slice %arg11[%c4_i32_425, %c0_i32_426] : memref<8x4x!tpu.dma_semaphore, #tpu.memory_space<semaphore_mem>> -> memref<1x1x!tpu.dma_semaphore, #tpu.memory_space<semaphore_mem>>
    %420 = tpu.memref_squeeze %419 : memref<1x1x!tpu.dma_semaphore, #tpu.memory_space<semaphore_mem>> -> memref<!tpu.dma_semaphore, #tpu.memory_space<semaphore_mem>>
    tpu.wait_dma2 semaphore(%420 : memref<!tpu.dma_semaphore, #tpu.memory_space<semaphore_mem>>) src(%416 : memref<1x128xf32, #tpu.memory_space<any>>) dst(%418 : memref<1x128xf32, #tpu.memory_space<vmem>>)
    %c1_i32_430 = arith.constant 1 : i32
    %c4_i32_431 = arith.constant 4 : i32
    %c1_i32_432 = arith.constant 1 : i32
    %c0_i32_433 = arith.constant 0 : i32
    %421 = tpu.memref_slice %arg4[%182, %c0_i32_433] : memref<256x128xf32, #tpu.memory_space<any>> -> memref<1x128xf32, #tpu.memory_space<any>>
    %c4_i32_434 = arith.constant 4 : i32
    %c0_i32_435 = arith.constant 0 : i32
    %422 = tpu.memref_slice %arg8[%c1_i32_430, %c4_i32_434, %c0_i32_435] : memref<4x8x128xf32, #tpu.memory_space<vmem>> -> memref<1x1x128xf32, #tpu.memory_space<vmem>>
    %423 = tpu.memref_squeeze %422 : memref<1x1x128xf32, #tpu.memory_space<vmem>> -> memref<1x128xf32, #tpu.memory_space<vmem>>
    %424 = tpu.memref_slice %arg11[%c4_i32_431, %c1_i32_432] : memref<8x4x!tpu.dma_semaphore, #tpu.memory_space<semaphore_mem>> -> memref<1x1x!tpu.dma_semaphore, #tpu.memory_space<semaphore_mem>>
    %425 = tpu.memref_squeeze %424 : memref<1x1x!tpu.dma_semaphore, #tpu.memory_space<semaphore_mem>> -> memref<!tpu.dma_semaphore, #tpu.memory_space<semaphore_mem>>
    tpu.wait_dma2 semaphore(%425 : memref<!tpu.dma_semaphore, #tpu.memory_space<semaphore_mem>>) src(%421 : memref<1x128xf32, #tpu.memory_space<any>>) dst(%423 : memref<1x128xf32, #tpu.memory_space<vmem>>)
    %c2_i32_436 = arith.constant 2 : i32
    %c4_i32_437 = arith.constant 4 : i32
    %c2_i32_438 = arith.constant 2 : i32
    %c0_i32_439 = arith.constant 0 : i32
    %426 = tpu.memref_slice %arg4[%188, %c0_i32_439] : memref<256x128xf32, #tpu.memory_space<any>> -> memref<1x128xf32, #tpu.memory_space<any>>
    %c4_i32_440 = arith.constant 4 : i32
    %c0_i32_441 = arith.constant 0 : i32
    %427 = tpu.memref_slice %arg8[%c2_i32_436, %c4_i32_440, %c0_i32_441] : memref<4x8x128xf32, #tpu.memory_space<vmem>> -> memref<1x1x128xf32, #tpu.memory_space<vmem>>
    %428 = tpu.memref_squeeze %427 : memref<1x1x128xf32, #tpu.memory_space<vmem>> -> memref<1x128xf32, #tpu.memory_space<vmem>>
    %429 = tpu.memref_slice %arg11[%c4_i32_437, %c2_i32_438] : memref<8x4x!tpu.dma_semaphore, #tpu.memory_space<semaphore_mem>> -> memref<1x1x!tpu.dma_semaphore, #tpu.memory_space<semaphore_mem>>
    %430 = tpu.memref_squeeze %429 : memref<1x1x!tpu.dma_semaphore, #tpu.memory_space<semaphore_mem>> -> memref<!tpu.dma_semaphore, #tpu.memory_space<semaphore_mem>>
    tpu.wait_dma2 semaphore(%430 : memref<!tpu.dma_semaphore, #tpu.memory_space<semaphore_mem>>) src(%426 : memref<1x128xf32, #tpu.memory_space<any>>) dst(%428 : memref<1x128xf32, #tpu.memory_space<vmem>>)
    %c3_i32_442 = arith.constant 3 : i32
    %c4_i32_443 = arith.constant 4 : i32
    %c3_i32_444 = arith.constant 3 : i32
    %c0_i32_445 = arith.constant 0 : i32
    %431 = tpu.memref_slice %arg4[%194, %c0_i32_445] : memref<256x128xf32, #tpu.memory_space<any>> -> memref<1x128xf32, #tpu.memory_space<any>>
    %c4_i32_446 = arith.constant 4 : i32
    %c0_i32_447 = arith.constant 0 : i32
    %432 = tpu.memref_slice %arg8[%c3_i32_442, %c4_i32_446, %c0_i32_447] : memref<4x8x128xf32, #tpu.memory_space<vmem>> -> memref<1x1x128xf32, #tpu.memory_space<vmem>>
    %433 = tpu.memref_squeeze %432 : memref<1x1x128xf32, #tpu.memory_space<vmem>> -> memref<1x128xf32, #tpu.memory_space<vmem>>
    %434 = tpu.memref_slice %arg11[%c4_i32_443, %c3_i32_444] : memref<8x4x!tpu.dma_semaphore, #tpu.memory_space<semaphore_mem>> -> memref<1x1x!tpu.dma_semaphore, #tpu.memory_space<semaphore_mem>>
    %435 = tpu.memref_squeeze %434 : memref<1x1x!tpu.dma_semaphore, #tpu.memory_space<semaphore_mem>> -> memref<!tpu.dma_semaphore, #tpu.memory_space<semaphore_mem>>
    tpu.wait_dma2 semaphore(%435 : memref<!tpu.dma_semaphore, #tpu.memory_space<semaphore_mem>>) src(%431 : memref<1x128xf32, #tpu.memory_space<any>>) dst(%433 : memref<1x128xf32, #tpu.memory_space<vmem>>)
    %c0_i32_448 = arith.constant 0 : i32
    %c5_i32_449 = arith.constant 5 : i32
    %c0_i32_450 = arith.constant 0 : i32
    %c0_i32_451 = arith.constant 0 : i32
    %436 = tpu.memref_slice %arg4[%200, %c0_i32_451] : memref<256x128xf32, #tpu.memory_space<any>> -> memref<1x128xf32, #tpu.memory_space<any>>
    %c5_i32_452 = arith.constant 5 : i32
    %c0_i32_453 = arith.constant 0 : i32
    %437 = tpu.memref_slice %arg8[%c0_i32_448, %c5_i32_452, %c0_i32_453] : memref<4x8x128xf32, #tpu.memory_space<vmem>> -> memref<1x1x128xf32, #tpu.memory_space<vmem>>
    %438 = tpu.memref_squeeze %437 : memref<1x1x128xf32, #tpu.memory_space<vmem>> -> memref<1x128xf32, #tpu.memory_space<vmem>>
    %439 = tpu.memref_slice %arg11[%c5_i32_449, %c0_i32_450] : memref<8x4x!tpu.dma_semaphore, #tpu.memory_space<semaphore_mem>> -> memref<1x1x!tpu.dma_semaphore, #tpu.memory_space<semaphore_mem>>
    %440 = tpu.memref_squeeze %439 : memref<1x1x!tpu.dma_semaphore, #tpu.memory_space<semaphore_mem>> -> memref<!tpu.dma_semaphore, #tpu.memory_space<semaphore_mem>>
    tpu.wait_dma2 semaphore(%440 : memref<!tpu.dma_semaphore, #tpu.memory_space<semaphore_mem>>) src(%436 : memref<1x128xf32, #tpu.memory_space<any>>) dst(%438 : memref<1x128xf32, #tpu.memory_space<vmem>>)
    %c1_i32_454 = arith.constant 1 : i32
    %c5_i32_455 = arith.constant 5 : i32
    %c1_i32_456 = arith.constant 1 : i32
    %c0_i32_457 = arith.constant 0 : i32
    %441 = tpu.memref_slice %arg4[%206, %c0_i32_457] : memref<256x128xf32, #tpu.memory_space<any>> -> memref<1x128xf32, #tpu.memory_space<any>>
    %c5_i32_458 = arith.constant 5 : i32
    %c0_i32_459 = arith.constant 0 : i32
    %442 = tpu.memref_slice %arg8[%c1_i32_454, %c5_i32_458, %c0_i32_459] : memref<4x8x128xf32, #tpu.memory_space<vmem>> -> memref<1x1x128xf32, #tpu.memory_space<vmem>>
    %443 = tpu.memref_squeeze %442 : memref<1x1x128xf32, #tpu.memory_space<vmem>> -> memref<1x128xf32, #tpu.memory_space<vmem>>
    %444 = tpu.memref_slice %arg11[%c5_i32_455, %c1_i32_456] : memref<8x4x!tpu.dma_semaphore, #tpu.memory_space<semaphore_mem>> -> memref<1x1x!tpu.dma_semaphore, #tpu.memory_space<semaphore_mem>>
    %445 = tpu.memref_squeeze %444 : memref<1x1x!tpu.dma_semaphore, #tpu.memory_space<semaphore_mem>> -> memref<!tpu.dma_semaphore, #tpu.memory_space<semaphore_mem>>
    tpu.wait_dma2 semaphore(%445 : memref<!tpu.dma_semaphore, #tpu.memory_space<semaphore_mem>>) src(%441 : memref<1x128xf32, #tpu.memory_space<any>>) dst(%443 : memref<1x128xf32, #tpu.memory_space<vmem>>)
    %c2_i32_460 = arith.constant 2 : i32
    %c5_i32_461 = arith.constant 5 : i32
    %c2_i32_462 = arith.constant 2 : i32
    %c0_i32_463 = arith.constant 0 : i32
    %446 = tpu.memref_slice %arg4[%212, %c0_i32_463] : memref<256x128xf32, #tpu.memory_space<any>> -> memref<1x128xf32, #tpu.memory_space<any>>
    %c5_i32_464 = arith.constant 5 : i32
    %c0_i32_465 = arith.constant 0 : i32
    %447 = tpu.memref_slice %arg8[%c2_i32_460, %c5_i32_464, %c0_i32_465] : memref<4x8x128xf32, #tpu.memory_space<vmem>> -> memref<1x1x128xf32, #tpu.memory_space<vmem>>
    %448 = tpu.memref_squeeze %447 : memref<1x1x128xf32, #tpu.memory_space<vmem>> -> memref<1x128xf32, #tpu.memory_space<vmem>>
    %449 = tpu.memref_slice %arg11[%c5_i32_461, %c2_i32_462] : memref<8x4x!tpu.dma_semaphore, #tpu.memory_space<semaphore_mem>> -> memref<1x1x!tpu.dma_semaphore, #tpu.memory_space<semaphore_mem>>
    %450 = tpu.memref_squeeze %449 : memref<1x1x!tpu.dma_semaphore, #tpu.memory_space<semaphore_mem>> -> memref<!tpu.dma_semaphore, #tpu.memory_space<semaphore_mem>>
    tpu.wait_dma2 semaphore(%450 : memref<!tpu.dma_semaphore, #tpu.memory_space<semaphore_mem>>) src(%446 : memref<1x128xf32, #tpu.memory_space<any>>) dst(%448 : memref<1x128xf32, #tpu.memory_space<vmem>>)
    %c3_i32_466 = arith.constant 3 : i32
    %c5_i32_467 = arith.constant 5 : i32
    %c3_i32_468 = arith.constant 3 : i32
    %c0_i32_469 = arith.constant 0 : i32
    %451 = tpu.memref_slice %arg4[%218, %c0_i32_469] : memref<256x128xf32, #tpu.memory_space<any>> -> memref<1x128xf32, #tpu.memory_space<any>>
    %c5_i32_470 = arith.constant 5 : i32
    %c0_i32_471 = arith.constant 0 : i32
    %452 = tpu.memref_slice %arg8[%c3_i32_466, %c5_i32_470, %c0_i32_471] : memref<4x8x128xf32, #tpu.memory_space<vmem>> -> memref<1x1x128xf32, #tpu.memory_space<vmem>>
    %453 = tpu.memref_squeeze %452 : memref<1x1x128xf32, #tpu.memory_space<vmem>> -> memref<1x128xf32, #tpu.memory_space<vmem>>
    %454 = tpu.memref_slice %arg11[%c5_i32_467, %c3_i32_468] : memref<8x4x!tpu.dma_semaphore, #tpu.memory_space<semaphore_mem>> -> memref<1x1x!tpu.dma_semaphore, #tpu.memory_space<semaphore_mem>>
    %455 = tpu.memref_squeeze %454 : memref<1x1x!tpu.dma_semaphore, #tpu.memory_space<semaphore_mem>> -> memref<!tpu.dma_semaphore, #tpu.memory_space<semaphore_mem>>
    tpu.wait_dma2 semaphore(%455 : memref<!tpu.dma_semaphore, #tpu.memory_space<semaphore_mem>>) src(%451 : memref<1x128xf32, #tpu.memory_space<any>>) dst(%453 : memref<1x128xf32, #tpu.memory_space<vmem>>)
    %c0_i32_472 = arith.constant 0 : i32
    %c6_i32_473 = arith.constant 6 : i32
    %c0_i32_474 = arith.constant 0 : i32
    %c0_i32_475 = arith.constant 0 : i32
    %456 = tpu.memref_slice %arg4[%224, %c0_i32_475] : memref<256x128xf32, #tpu.memory_space<any>> -> memref<1x128xf32, #tpu.memory_space<any>>
    %c6_i32_476 = arith.constant 6 : i32
    %c0_i32_477 = arith.constant 0 : i32
    %457 = tpu.memref_slice %arg8[%c0_i32_472, %c6_i32_476, %c0_i32_477] : memref<4x8x128xf32, #tpu.memory_space<vmem>> -> memref<1x1x128xf32, #tpu.memory_space<vmem>>
    %458 = tpu.memref_squeeze %457 : memref<1x1x128xf32, #tpu.memory_space<vmem>> -> memref<1x128xf32, #tpu.memory_space<vmem>>
    %459 = tpu.memref_slice %arg11[%c6_i32_473, %c0_i32_474] : memref<8x4x!tpu.dma_semaphore, #tpu.memory_space<semaphore_mem>> -> memref<1x1x!tpu.dma_semaphore, #tpu.memory_space<semaphore_mem>>
    %460 = tpu.memref_squeeze %459 : memref<1x1x!tpu.dma_semaphore, #tpu.memory_space<semaphore_mem>> -> memref<!tpu.dma_semaphore, #tpu.memory_space<semaphore_mem>>
    tpu.wait_dma2 semaphore(%460 : memref<!tpu.dma_semaphore, #tpu.memory_space<semaphore_mem>>) src(%456 : memref<1x128xf32, #tpu.memory_space<any>>) dst(%458 : memref<1x128xf32, #tpu.memory_space<vmem>>)
    %c1_i32_478 = arith.constant 1 : i32
    %c6_i32_479 = arith.constant 6 : i32
    %c1_i32_480 = arith.constant 1 : i32
    %c0_i32_481 = arith.constant 0 : i32
    %461 = tpu.memref_slice %arg4[%230, %c0_i32_481] : memref<256x128xf32, #tpu.memory_space<any>> -> memref<1x128xf32, #tpu.memory_space<any>>
    %c6_i32_482 = arith.constant 6 : i32
    %c0_i32_483 = arith.constant 0 : i32
    %462 = tpu.memref_slice %arg8[%c1_i32_478, %c6_i32_482, %c0_i32_483] : memref<4x8x128xf32, #tpu.memory_space<vmem>> -> memref<1x1x128xf32, #tpu.memory_space<vmem>>
    %463 = tpu.memref_squeeze %462 : memref<1x1x128xf32, #tpu.memory_space<vmem>> -> memref<1x128xf32, #tpu.memory_space<vmem>>
    %464 = tpu.memref_slice %arg11[%c6_i32_479, %c1_i32_480] : memref<8x4x!tpu.dma_semaphore, #tpu.memory_space<semaphore_mem>> -> memref<1x1x!tpu.dma_semaphore, #tpu.memory_space<semaphore_mem>>
    %465 = tpu.memref_squeeze %464 : memref<1x1x!tpu.dma_semaphore, #tpu.memory_space<semaphore_mem>> -> memref<!tpu.dma_semaphore, #tpu.memory_space<semaphore_mem>>
    tpu.wait_dma2 semaphore(%465 : memref<!tpu.dma_semaphore, #tpu.memory_space<semaphore_mem>>) src(%461 : memref<1x128xf32, #tpu.memory_space<any>>) dst(%463 : memref<1x128xf32, #tpu.memory_space<vmem>>)
    %c2_i32_484 = arith.constant 2 : i32
    %c6_i32_485 = arith.constant 6 : i32
    %c2_i32_486 = arith.constant 2 : i32
    %c0_i32_487 = arith.constant 0 : i32
    %466 = tpu.memref_slice %arg4[%236, %c0_i32_487] : memref<256x128xf32, #tpu.memory_space<any>> -> memref<1x128xf32, #tpu.memory_space<any>>
    %c6_i32_488 = arith.constant 6 : i32
    %c0_i32_489 = arith.constant 0 : i32
    %467 = tpu.memref_slice %arg8[%c2_i32_484, %c6_i32_488, %c0_i32_489] : memref<4x8x128xf32, #tpu.memory_space<vmem>> -> memref<1x1x128xf32, #tpu.memory_space<vmem>>
    %468 = tpu.memref_squeeze %467 : memref<1x1x128xf32, #tpu.memory_space<vmem>> -> memref<1x128xf32, #tpu.memory_space<vmem>>
    %469 = tpu.memref_slice %arg11[%c6_i32_485, %c2_i32_486] : memref<8x4x!tpu.dma_semaphore, #tpu.memory_space<semaphore_mem>> -> memref<1x1x!tpu.dma_semaphore, #tpu.memory_space<semaphore_mem>>
    %470 = tpu.memref_squeeze %469 : memref<1x1x!tpu.dma_semaphore, #tpu.memory_space<semaphore_mem>> -> memref<!tpu.dma_semaphore, #tpu.memory_space<semaphore_mem>>
    tpu.wait_dma2 semaphore(%470 : memref<!tpu.dma_semaphore, #tpu.memory_space<semaphore_mem>>) src(%466 : memref<1x128xf32, #tpu.memory_space<any>>) dst(%468 : memref<1x128xf32, #tpu.memory_space<vmem>>)
    %c3_i32_490 = arith.constant 3 : i32
    %c6_i32_491 = arith.constant 6 : i32
    %c3_i32_492 = arith.constant 3 : i32
    %c0_i32_493 = arith.constant 0 : i32
    %471 = tpu.memref_slice %arg4[%242, %c0_i32_493] : memref<256x128xf32, #tpu.memory_space<any>> -> memref<1x128xf32, #tpu.memory_space<any>>
    %c6_i32_494 = arith.constant 6 : i32
    %c0_i32_495 = arith.constant 0 : i32
    %472 = tpu.memref_slice %arg8[%c3_i32_490, %c6_i32_494, %c0_i32_495] : memref<4x8x128xf32, #tpu.memory_space<vmem>> -> memref<1x1x128xf32, #tpu.memory_space<vmem>>
    %473 = tpu.memref_squeeze %472 : memref<1x1x128xf32, #tpu.memory_space<vmem>> -> memref<1x128xf32, #tpu.memory_space<vmem>>
    %474 = tpu.memref_slice %arg11[%c6_i32_491, %c3_i32_492] : memref<8x4x!tpu.dma_semaphore, #tpu.memory_space<semaphore_mem>> -> memref<1x1x!tpu.dma_semaphore, #tpu.memory_space<semaphore_mem>>
    %475 = tpu.memref_squeeze %474 : memref<1x1x!tpu.dma_semaphore, #tpu.memory_space<semaphore_mem>> -> memref<!tpu.dma_semaphore, #tpu.memory_space<semaphore_mem>>
    tpu.wait_dma2 semaphore(%475 : memref<!tpu.dma_semaphore, #tpu.memory_space<semaphore_mem>>) src(%471 : memref<1x128xf32, #tpu.memory_space<any>>) dst(%473 : memref<1x128xf32, #tpu.memory_space<vmem>>)
    %c0_i32_496 = arith.constant 0 : i32
    %c7_i32_497 = arith.constant 7 : i32
    %c0_i32_498 = arith.constant 0 : i32
    %c0_i32_499 = arith.constant 0 : i32
    %476 = tpu.memref_slice %arg4[%248, %c0_i32_499] : memref<256x128xf32, #tpu.memory_space<any>> -> memref<1x128xf32, #tpu.memory_space<any>>
    %c7_i32_500 = arith.constant 7 : i32
    %c0_i32_501 = arith.constant 0 : i32
    %477 = tpu.memref_slice %arg8[%c0_i32_496, %c7_i32_500, %c0_i32_501] : memref<4x8x128xf32, #tpu.memory_space<vmem>> -> memref<1x1x128xf32, #tpu.memory_space<vmem>>
    %478 = tpu.memref_squeeze %477 : memref<1x1x128xf32, #tpu.memory_space<vmem>> -> memref<1x128xf32, #tpu.memory_space<vmem>>
    %479 = tpu.memref_slice %arg11[%c7_i32_497, %c0_i32_498] : memref<8x4x!tpu.dma_semaphore, #tpu.memory_space<semaphore_mem>> -> memref<1x1x!tpu.dma_semaphore, #tpu.memory_space<semaphore_mem>>
    %480 = tpu.memref_squeeze %479 : memref<1x1x!tpu.dma_semaphore, #tpu.memory_space<semaphore_mem>> -> memref<!tpu.dma_semaphore, #tpu.memory_space<semaphore_mem>>
    tpu.wait_dma2 semaphore(%480 : memref<!tpu.dma_semaphore, #tpu.memory_space<semaphore_mem>>) src(%476 : memref<1x128xf32, #tpu.memory_space<any>>) dst(%478 : memref<1x128xf32, #tpu.memory_space<vmem>>)
    %c1_i32_502 = arith.constant 1 : i32
    %c7_i32_503 = arith.constant 7 : i32
    %c1_i32_504 = arith.constant 1 : i32
    %c0_i32_505 = arith.constant 0 : i32
    %481 = tpu.memref_slice %arg4[%254, %c0_i32_505] : memref<256x128xf32, #tpu.memory_space<any>> -> memref<1x128xf32, #tpu.memory_space<any>>
    %c7_i32_506 = arith.constant 7 : i32
    %c0_i32_507 = arith.constant 0 : i32
    %482 = tpu.memref_slice %arg8[%c1_i32_502, %c7_i32_506, %c0_i32_507] : memref<4x8x128xf32, #tpu.memory_space<vmem>> -> memref<1x1x128xf32, #tpu.memory_space<vmem>>
    %483 = tpu.memref_squeeze %482 : memref<1x1x128xf32, #tpu.memory_space<vmem>> -> memref<1x128xf32, #tpu.memory_space<vmem>>
    %484 = tpu.memref_slice %arg11[%c7_i32_503, %c1_i32_504] : memref<8x4x!tpu.dma_semaphore, #tpu.memory_space<semaphore_mem>> -> memref<1x1x!tpu.dma_semaphore, #tpu.memory_space<semaphore_mem>>
    %485 = tpu.memref_squeeze %484 : memref<1x1x!tpu.dma_semaphore, #tpu.memory_space<semaphore_mem>> -> memref<!tpu.dma_semaphore, #tpu.memory_space<semaphore_mem>>
    tpu.wait_dma2 semaphore(%485 : memref<!tpu.dma_semaphore, #tpu.memory_space<semaphore_mem>>) src(%481 : memref<1x128xf32, #tpu.memory_space<any>>) dst(%483 : memref<1x128xf32, #tpu.memory_space<vmem>>)
    %c2_i32_508 = arith.constant 2 : i32
    %c7_i32_509 = arith.constant 7 : i32
    %c2_i32_510 = arith.constant 2 : i32
    %c0_i32_511 = arith.constant 0 : i32
    %486 = tpu.memref_slice %arg4[%260, %c0_i32_511] : memref<256x128xf32, #tpu.memory_space<any>> -> memref<1x128xf32, #tpu.memory_space<any>>
    %c7_i32_512 = arith.constant 7 : i32
    %c0_i32_513 = arith.constant 0 : i32
    %487 = tpu.memref_slice %arg8[%c2_i32_508, %c7_i32_512, %c0_i32_513] : memref<4x8x128xf32, #tpu.memory_space<vmem>> -> memref<1x1x128xf32, #tpu.memory_space<vmem>>
    %488 = tpu.memref_squeeze %487 : memref<1x1x128xf32, #tpu.memory_space<vmem>> -> memref<1x128xf32, #tpu.memory_space<vmem>>
    %489 = tpu.memref_slice %arg11[%c7_i32_509, %c2_i32_510] : memref<8x4x!tpu.dma_semaphore, #tpu.memory_space<semaphore_mem>> -> memref<1x1x!tpu.dma_semaphore, #tpu.memory_space<semaphore_mem>>
    %490 = tpu.memref_squeeze %489 : memref<1x1x!tpu.dma_semaphore, #tpu.memory_space<semaphore_mem>> -> memref<!tpu.dma_semaphore, #tpu.memory_space<semaphore_mem>>
    tpu.wait_dma2 semaphore(%490 : memref<!tpu.dma_semaphore, #tpu.memory_space<semaphore_mem>>) src(%486 : memref<1x128xf32, #tpu.memory_space<any>>) dst(%488 : memref<1x128xf32, #tpu.memory_space<vmem>>)
    %c3_i32_514 = arith.constant 3 : i32
    %c7_i32_515 = arith.constant 7 : i32
    %c3_i32_516 = arith.constant 3 : i32
    %c0_i32_517 = arith.constant 0 : i32
    %491 = tpu.memref_slice %arg4[%266, %c0_i32_517] : memref<256x128xf32, #tpu.memory_space<any>> -> memref<1x128xf32, #tpu.memory_space<any>>
    %c7_i32_518 = arith.constant 7 : i32
    %c0_i32_519 = arith.constant 0 : i32
    %492 = tpu.memref_slice %arg8[%c3_i32_514, %c7_i32_518, %c0_i32_519] : memref<4x8x128xf32, #tpu.memory_space<vmem>> -> memref<1x1x128xf32, #tpu.memory_space<vmem>>
    %493 = tpu.memref_squeeze %492 : memref<1x1x128xf32, #tpu.memory_space<vmem>> -> memref<1x128xf32, #tpu.memory_space<vmem>>
    %494 = tpu.memref_slice %arg11[%c7_i32_515, %c3_i32_516] : memref<8x4x!tpu.dma_semaphore, #tpu.memory_space<semaphore_mem>> -> memref<1x1x!tpu.dma_semaphore, #tpu.memory_space<semaphore_mem>>
    %495 = tpu.memref_squeeze %494 : memref<1x1x!tpu.dma_semaphore, #tpu.memory_space<semaphore_mem>> -> memref<!tpu.dma_semaphore, #tpu.memory_space<semaphore_mem>>
    tpu.wait_dma2 semaphore(%495 : memref<!tpu.dma_semaphore, #tpu.memory_space<semaphore_mem>>) src(%491 : memref<1x128xf32, #tpu.memory_space<any>>) dst(%493 : memref<1x128xf32, #tpu.memory_space<vmem>>)
    %c0_520 = arith.constant 0 : index
    %c0_521 = arith.constant 0 : index
    %496 = vector.load %arg6[%c0_520, %c0_521] : memref<8x128xf32, #tpu.memory_space<vmem>>, vector<8x128xf32>
    %c0_522 = arith.constant 0 : index
    %c0_523 = arith.constant 0 : index
    %497 = vector.load %arg7[%c0_522, %c0_523] : memref<8x128xf32, #tpu.memory_space<vmem>>, vector<8x128xf32>
    %c0_524 = arith.constant 0 : index
    %c0_525 = arith.constant 0 : index
    %c0_526 = arith.constant 0 : index
    %498 = vector.load %arg8[%c0_524, %c0_525, %c0_526] : memref<4x8x128xf32, #tpu.memory_space<vmem>>, vector<4x8x128xf32>
    %499 = arith.mulf %496, %497 : vector<8x128xf32>
    %cst = arith.constant dense<0.000000e+00> : vector<8xf32>
    %500 = vector.multi_reduction <add>, %499, %cst [1] : vector<8x128xf32> to vector<8xf32>
    %501 = vector.shape_cast %500 : vector<8xf32> to vector<8x1xf32>
    %cst_527 = arith.constant 0.000000e+00 : f32
    %502 = vector.broadcast %cst_527 : f32 to vector<8x1xf32>
    %503 = arith.minimumf %501, %502 : vector<8x1xf32>
    %504 = math.absf %501 : vector<8x1xf32>
    %cst_528 = arith.constant 0.000000e+00 : f32
    %505 = vector.broadcast %cst_528 : f32 to vector<8x1xf32>
    %506 = arith.subf %505, %504 : vector<8x1xf32>
    %507 = math.exp %506 : vector<8x1xf32>
    %508 = math.log1p %507 : vector<8x1xf32>
    %509 = arith.subf %503, %508 : vector<8x1xf32>
    %510 = vector.shape_cast %509 : vector<8x1xf32> to vector<1x8x1xf32>
    %cst_529 = arith.constant dense<0.000000e+00> : vector<1xf32>
    %511 = vector.multi_reduction <add>, %510, %cst_529 [1, 2] : vector<1x8x1xf32> to vector<1xf32>
    %512 = vector.shape_cast %511 : vector<1xf32> to vector<1x1x1xf32>
    %513 = vector.extract %512[0, 0, 0] : f32 from vector<1x1x1xf32>
    %cst_530 = arith.constant dense<0.000000e+00> : vector<8x128xf32>
    %514 = vector.multi_reduction <add>, %498, %cst_530 [0] : vector<4x8x128xf32> to vector<8x128xf32>
    %515 = arith.mulf %514, %496 : vector<8x128xf32>
    %cst_531 = arith.constant dense<0.000000e+00> : vector<8xf32>
    %516 = vector.multi_reduction <add>, %515, %cst_531 [1] : vector<8x128xf32> to vector<8xf32>
    %517 = vector.shape_cast %516 : vector<8xf32> to vector<8x1xf32>
    %cst_532 = arith.constant 0.000000e+00 : f32
    %518 = vector.broadcast %cst_532 : f32 to vector<8x1xf32>
    %519 = arith.subf %518, %517 : vector<8x1xf32>
    %cst_533 = arith.constant 0.000000e+00 : f32
    %520 = vector.broadcast %cst_533 : f32 to vector<8x1xf32>
    %521 = arith.minimumf %519, %520 : vector<8x1xf32>
    %522 = math.absf %519 : vector<8x1xf32>
    %cst_534 = arith.constant 0.000000e+00 : f32
    %523 = vector.broadcast %cst_534 : f32 to vector<8x1xf32>
    %524 = arith.subf %523, %522 : vector<8x1xf32>
    %525 = math.exp %524 : vector<8x1xf32>
    %526 = math.log1p %525 : vector<8x1xf32>
    %527 = arith.subf %521, %526 : vector<8x1xf32>
    %528 = vector.shape_cast %527 : vector<8x1xf32> to vector<1x8x1xf32>
    %cst_535 = arith.constant dense<0.000000e+00> : vector<1xf32>
    %529 = vector.multi_reduction <add>, %528, %cst_535 [1, 2] : vector<1x8x1xf32> to vector<1xf32>
    %530 = vector.shape_cast %529 : vector<1xf32> to vector<1x1x1xf32>
    %531 = vector.extract %530[0, 0, 0] : f32 from vector<1x1x1xf32>
    %532 = arith.addf %513, %531 : f32
    %cst_536 = arith.constant 0.000000e+00 : f32
    %533 = arith.subf %cst_536, %532 : f32
    %534 = vector.broadcast %533 : f32 to vector<1x1xf32>
    %c0_537 = arith.constant 0 : index
    %c0_538 = arith.constant 0 : index
    %535 = vector.load %arg5[%c0_537, %c0_538] : memref<1x1xf32, #tpu.memory_space<vmem>>, vector<1x1xf32>
    tpu.vector_store %arg5[%c0_537, %c0_538], %534 {strides = array<i32>} : memref<1x1xf32, #tpu.memory_space<vmem>>, vector<1x1xf32>,
    return
  }
}

</mosaic_0001>

<llo_original>
// kernel: tpu_custom_call.1
$region0: #{tpu_custom_call.1}
  #allocation0 [shape = 'u32[]', space=smem, size = 0x4, offset = 0x4, fixed_abs, tag = 'smem constant byte address 0x4 - core index']
  #allocation1 [shape = 'u32[144,128]{1,0:T(1,128)}', space=vmem, size = 0x12000, scoped, tag = 'internal scratch']
  #allocation2 [shape = 'f32[8,128]{1,0:T(8,128)}', space=vmem, size = 0x1000, scoped, tag = 'scratch operand']
  #allocation3 [shape = 'f32[8,128]{1,0:T(8,128)}', space=vmem, size = 0x1000, scoped, tag = 'scratch operand']
  #allocation4 [shape = 'f32[4,8,128]{2,1,0:T(8,128)}', space=vmem, size = 0x4000, scoped, tag = 'scratch operand']
  #allocation5 [shape = 's32[8]{0}', space=sflag, size = 0x20, scoped, tag = 'scratch operand']
  #allocation6 [shape = 's32[8]{0}', space=sflag, size = 0x20, scoped, tag = 'scratch operand']
  #allocation7 [shape = 's32[32]{0}', space=sflag, size = 0x80, scoped, tag = 'scratch operand']
  #allocation16 [shape = 's32[]', space=sflag, size = 0x4, offset = 0, fixed_abs, tag = 'sflag constant byte address 0x0 - dummy sync flag']
  #allocation17 [shape = 's32[]', space=sflag, size = 0x4, offset = 0, fixed_abs, tag = 'sflag constant byte address 0x0 - dummy sync flag']
  #allocation18 [shape = 'u32[]', space=smem, size = 0x4, offset = 0x44, fixed_abs, tag = 'smem constant byte address 0x44 - assertion arg 0']
  #allocation19 [shape = 'u32[]', space=smem, size = 0x4, offset = 0x48, fixed_abs, tag = 'smem constant byte address 0x48 - assertion arg 1']
  #allocation20 [shape = 's32[]', space=sflag, size = 0x4, offset = 0, fixed_abs, tag = 'sflag constant byte address 0x0 - dummy sync flag']
  #allocation21 [shape = 's32[]', space=sflag, size = 0x4, offset = 0, fixed_abs, tag = 'sflag constant byte address 0x0 - dummy sync flag']
  #allocation22 [shape = 's32[]', space=sflag, size = 0x4, offset = 0, fixed_abs, tag = 'sflag constant byte address 0x0 - dummy sync flag']
  #allocation23 [shape = 's32[]', space=sflag, size = 0x4, offset = 0, fixed_abs, tag = 'sflag constant byte address 0x0 - dummy sync flag']
  #allocation24 [shape = 's32[]', space=sflag, size = 0x4, offset = 0, fixed_abs, tag = 'sflag constant byte address 0x0 - dummy sync flag']
  #allocation25 [shape = 's32[]', space=sflag, size = 0x4, offset = 0, fixed_abs, tag = 'sflag constant byte address 0x0 - dummy sync flag']
  #allocation26 [shape = 's32[]', space=sflag, size = 0x4, offset = 0, fixed_abs, tag = 'sflag constant byte address 0x0 - dummy sync flag']
  #allocation27 [shape = 's32[]', space=sflag, size = 0x4, offset = 0, fixed_abs, tag = 'sflag constant byte address 0x0 - dummy sync flag']
  #allocation28 [shape = 's32[]', space=sflag, size = 0x4, offset = 0, fixed_abs, tag = 'sflag constant byte address 0x0 - dummy sync flag']
  #allocation29 [shape = 's32[]', space=sflag, size = 0x4, offset = 0, fixed_abs, tag = 'sflag constant byte address 0x0 - dummy sync flag']
  #allocation30 [shape = 's32[]', space=sflag, size = 0x4, offset = 0, fixed_abs, tag = 'sflag constant byte address 0x0 - dummy sync flag']
  #allocation31 [shape = 's32[]', space=sflag, size = 0x4, offset = 0, fixed_abs, tag = 'sflag constant byte address 0x0 - dummy sync flag']
  #allocation32 [shape = 's32[]', space=sflag, size = 0x4, offset = 0, fixed_abs, tag = 'sflag constant byte address 0x0 - dummy sync flag']
  #allocation33 [shape = 's32[]', space=sflag, size = 0x4, offset = 0, fixed_abs, tag = 'sflag constant byte address 0x0 - dummy sync flag']
  #allocation34 [shape = 's32[]', space=sflag, size = 0x4, offset = 0, fixed_abs, tag = 'sflag constant byte address 0x0 - dummy sync flag']
  #allocation35 [shape = 's32[]', space=sflag, size = 0x4, offset = 0, fixed_abs, tag = 'sflag constant byte address 0x0 - dummy sync flag']
  #allocation36 [shape = 's32[]', space=sflag, size = 0x4, offset = 0, fixed_abs, tag = 'sflag constant byte address 0x0 - dummy sync flag']
  #allocation37 [shape = 's32[]', space=sflag, size = 0x4, offset = 0, fixed_abs, tag = 'sflag constant byte address 0x0 - dummy sync flag']
  #allocation38 [shape = 's32[]', space=sflag, size = 0x4, offset = 0, fixed_abs, tag = 'sflag constant byte address 0x0 - dummy sync flag']
  #allocation39 [shape = 's32[]', space=sflag, size = 0x4, offset = 0, fixed_abs, tag = 'sflag constant byte address 0x0 - dummy sync flag']
  #allocation40 [shape = 's32[]', space=sflag, size = 0x4, offset = 0, fixed_abs, tag = 'sflag constant byte address 0x0 - dummy sync flag']
  #allocation41 [shape = 's32[]', space=sflag, size = 0x4, offset = 0, fixed_abs, tag = 'sflag constant byte address 0x0 - dummy sync flag']
  #allocation42 [shape = 's32[]', space=sflag, size = 0x4, offset = 0, fixed_abs, tag = 'sflag constant byte address 0x0 - dummy sync flag']
  #allocation43 [shape = 's32[]', space=sflag, size = 0x4, offset = 0, fixed_abs, tag = 'sflag constant byte address 0x0 - dummy sync flag']
  #allocation44 [shape = 's32[]', space=sflag, size = 0x4, offset = 0, fixed_abs, tag = 'sflag constant byte address 0x0 - dummy sync flag']
  #allocation45 [shape = 's32[]', space=sflag, size = 0x4, offset = 0, fixed_abs, tag = 'sflag constant byte address 0x0 - dummy sync flag']
  #allocation46 [shape = 's32[]', space=sflag, size = 0x4, offset = 0, fixed_abs, tag = 'sflag constant byte address 0x0 - dummy sync flag']
  #allocation47 [shape = 's32[]', space=sflag, size = 0x4, offset = 0, fixed_abs, tag = 'sflag constant byte address 0x0 - dummy sync flag']
  #allocation48 [shape = 's32[]', space=sflag, size = 0x4, offset = 0, fixed_abs, tag = 'sflag constant byte address 0x0 - dummy sync flag']
  #allocation49 [shape = 's32[]', space=sflag, size = 0x4, offset = 0, fixed_abs, tag = 'sflag constant byte address 0x0 - dummy sync flag']
  #allocation50 [shape = 's32[]', space=sflag, size = 0x4, offset = 0, fixed_abs, tag = 'sflag constant byte address 0x0 - dummy sync flag']
  #allocation51 [shape = 's32[]', space=sflag, size = 0x4, offset = 0, fixed_abs, tag = 'sflag constant byte address 0x0 - dummy sync flag']
  #allocation52 [shape = 's32[]', space=sflag, size = 0x4, offset = 0, fixed_abs, tag = 'sflag constant byte address 0x0 - dummy sync flag']
  #allocation53 [shape = 's32[]', space=sflag, size = 0x4, offset = 0, fixed_abs, tag = 'sflag constant byte address 0x0 - dummy sync flag']
  #allocation54 [shape = 's32[]', space=sflag, size = 0x4, offset = 0, fixed_abs, tag = 'sflag constant byte address 0x0 - dummy sync flag']
  #allocation55 [shape = 's32[]', space=sflag, size = 0x4, offset = 0, fixed_abs, tag = 'sflag constant byte address 0x0 - dummy sync flag']
  #allocation56 [shape = 's32[]', space=sflag, size = 0x4, offset = 0, fixed_abs, tag = 'sflag constant byte address 0x0 - dummy sync flag']
  #allocation57 [shape = 's32[]', space=sflag, size = 0x4, offset = 0, fixed_abs, tag = 'sflag constant byte address 0x0 - dummy sync flag']
  #allocation58 [shape = 's32[]', space=sflag, size = 0x4, offset = 0, fixed_abs, tag = 'sflag constant byte address 0x0 - dummy sync flag']
  #allocation59 [shape = 's32[]', space=sflag, size = 0x4, offset = 0, fixed_abs, tag = 'sflag constant byte address 0x0 - dummy sync flag']
  #allocation60 [shape = 's32[]', space=sflag, size = 0x4, offset = 0, fixed_abs, tag = 'sflag constant byte address 0x0 - dummy sync flag']
  #allocation61 [shape = 's32[]', space=sflag, size = 0x4, offset = 0, fixed_abs, tag = 'sflag constant byte address 0x0 - dummy sync flag']
  #allocation62 [shape = 's32[]', space=sflag, size = 0x4, offset = 0, fixed_abs, tag = 'sflag constant byte address 0x0 - dummy sync flag']
  #allocation63 [shape = 's32[]', space=sflag, size = 0x4, offset = 0, fixed_abs, tag = 'sflag constant byte address 0x0 - dummy sync flag']
  #allocation64 [shape = 's32[]', space=sflag, size = 0x4, offset = 0, fixed_abs, tag = 'sflag constant byte address 0x0 - dummy sync flag']
  #allocation65 [shape = 's32[]', space=sflag, size = 0x4, offset = 0, fixed_abs, tag = 'sflag constant byte address 0x0 - dummy sync flag']
  #allocation66 [shape = 's32[]', space=sflag, size = 0x4, offset = 0, fixed_abs, tag = 'sflag constant byte address 0x0 - dummy sync flag']
  #allocation67 [shape = 's32[]', space=sflag, size = 0x4, offset = 0, fixed_abs, tag = 'sflag constant byte address 0x0 - dummy sync flag']
  #allocation68 [shape = 's32[]', space=sflag, size = 0x4, offset = 0, fixed_abs, tag = 'sflag constant byte address 0x0 - dummy sync flag']
  #allocation69 [shape = 's32[]', space=sflag, size = 0x4, offset = 0, fixed_abs, tag = 'sflag constant byte address 0x0 - dummy sync flag']
  #allocation70 [shape = 's32[]', space=sflag, size = 0x4, offset = 0, fixed_abs, tag = 'sflag constant byte address 0x0 - dummy sync flag']
  #allocation71 [shape = 's32[]', space=sflag, size = 0x4, offset = 0, fixed_abs, tag = 'sflag constant byte address 0x0 - dummy sync flag']
  #allocation72 [shape = 's32[]', space=sflag, size = 0x4, offset = 0, fixed_abs, tag = 'sflag constant byte address 0x0 - dummy sync flag']
  #allocation73 [shape = 's32[]', space=sflag, size = 0x4, offset = 0, fixed_abs, tag = 'sflag constant byte address 0x0 - dummy sync flag']
  #allocation74 [shape = 's32[]', space=sflag, size = 0x4, offset = 0, fixed_abs, tag = 'sflag constant byte address 0x0 - dummy sync flag']
  #allocation75 [shape = 's32[]', space=sflag, size = 0x4, offset = 0, fixed_abs, tag = 'sflag constant byte address 0x0 - dummy sync flag']
  #allocation76 [shape = 's32[]', space=sflag, size = 0x4, offset = 0, fixed_abs, tag = 'sflag constant byte address 0x0 - dummy sync flag']
  #allocation77 [shape = 's32[]', space=sflag, size = 0x4, offset = 0, fixed_abs, tag = 'sflag constant byte address 0x0 - dummy sync flag']
  #allocation78 [shape = 's32[]', space=sflag, size = 0x4, offset = 0, fixed_abs, tag = 'sflag constant byte address 0x0 - dummy sync flag']
  #allocation79 [shape = 's32[]', space=sflag, size = 0x4, offset = 0, fixed_abs, tag = 'sflag constant byte address 0x0 - dummy sync flag']
  #allocation80 [shape = 's32[]', space=sflag, size = 0x4, offset = 0, fixed_abs, tag = 'sflag constant byte address 0x0 - dummy sync flag']
  #allocation81 [shape = 's32[]', space=sflag, size = 0x4, offset = 0, fixed_abs, tag = 'sflag constant byte address 0x0 - dummy sync flag']
  #allocation82 [shape = 's32[]', space=sflag, size = 0x4, offset = 0, fixed_abs, tag = 'sflag constant byte address 0x0 - dummy sync flag']
  #allocation83 [shape = 's32[]', space=sflag, size = 0x4, offset = 0, fixed_abs, tag = 'sflag constant byte address 0x0 - dummy sync flag']
  #allocation84 [shape = 's32[]', space=sflag, size = 0x4, offset = 0, fixed_abs, tag = 'sflag constant byte address 0x0 - dummy sync flag']
  #allocation85 [shape = 's32[]', space=sflag, size = 0x4, offset = 0, fixed_abs, tag = 'sflag constant byte address 0x0 - dummy sync flag']
  #allocation86 [shape = 's32[]', space=sflag, size = 0x4, offset = 0, fixed_abs, tag = 'sflag constant byte address 0x0 - dummy sync flag']
  #allocation87 [shape = 's32[]', space=sflag, size = 0x4, offset = 0, fixed_abs, tag = 'sflag constant byte address 0x0 - dummy sync flag']
  #allocation88 [shape = 's32[]', space=sflag, size = 0x4, offset = 0, fixed_abs, tag = 'sflag constant byte address 0x0 - dummy sync flag']
  #allocation89 [shape = 's32[]', space=sflag, size = 0x4, offset = 0, fixed_abs, tag = 'sflag constant byte address 0x0 - dummy sync flag']
  #allocation90 [shape = 's32[]', space=sflag, size = 0x4, offset = 0, fixed_abs, tag = 'sflag constant byte address 0x0 - dummy sync flag']
  #allocation91 [shape = 's32[]', space=sflag, size = 0x4, offset = 0, fixed_abs, tag = 'sflag constant byte address 0x0 - dummy sync flag']
  #allocation92 [shape = 's32[]', space=sflag, size = 0x4, offset = 0, fixed_abs, tag = 'sflag constant byte address 0x0 - dummy sync flag']
  #allocation93 [shape = 's32[]', space=sflag, size = 0x4, offset = 0, fixed_abs, tag = 'sflag constant byte address 0x0 - dummy sync flag']
  #allocation94 [shape = 's32[]', space=sflag, size = 0x4, offset = 0, fixed_abs, tag = 'sflag constant byte address 0x0 - dummy sync flag']
  #allocation95 [shape = 's32[]', space=sflag, size = 0x4, offset = 0, fixed_abs, tag = 'sflag constant byte address 0x0 - dummy sync flag']
  #allocation96 [shape = 's32[]', space=sflag, size = 0x4, offset = 0, fixed_abs, tag = 'sflag constant byte address 0x0 - dummy sync flag']
  #allocation97 [shape = 's32[]', space=sflag, size = 0x4, offset = 0, fixed_abs, tag = 'sflag constant byte address 0x0 - dummy sync flag']
  #allocation98 [shape = 's32[]', space=sflag, size = 0x4, offset = 0, fixed_abs, tag = 'sflag constant byte address 0x0 - dummy sync flag']
  #allocation99 [shape = 's32[]', space=sflag, size = 0x4, offset = 0, fixed_abs, tag = 'sflag constant byte address 0x0 - dummy sync flag']
  #allocation100 [shape = 's32[]', space=sflag, size = 0x4, offset = 0, fixed_abs, tag = 'sflag constant byte address 0x0 - dummy sync flag']
  #allocation101 [shape = 's32[]', space=sflag, size = 0x4, offset = 0, fixed_abs, tag = 'sflag constant byte address 0x0 - dummy sync flag']
  #allocation102 [shape = 's32[]', space=sflag, size = 0x4, offset = 0, fixed_abs, tag = 'sflag constant byte address 0x0 - dummy sync flag']
  #allocation103 [shape = 's32[]', space=sflag, size = 0x4, offset = 0, fixed_abs, tag = 'sflag constant byte address 0x0 - dummy sync flag']
  #allocation104 [shape = 's32[]', space=sflag, size = 0x4, offset = 0, fixed_abs, tag = 'sflag constant byte address 0x0 - dummy sync flag']
  #allocation105 [shape = 's32[]', space=sflag, size = 0x4, offset = 0, fixed_abs, tag = 'sflag constant byte address 0x0 - dummy sync flag']
  #allocation106 [shape = 's32[]', space=sflag, size = 0x4, offset = 0, fixed_abs, tag = 'sflag constant byte address 0x0 - dummy sync flag']
  #allocation107 [shape = 's32[]', space=sflag, size = 0x4, offset = 0, fixed_abs, tag = 'sflag constant byte address 0x0 - dummy sync flag']
  #allocation108 [shape = 's32[]', space=sflag, size = 0x4, offset = 0, fixed_abs, tag = 'sflag constant byte address 0x0 - dummy sync flag']
  #allocation109 [shape = 's32[]', space=sflag, size = 0x4, offset = 0, fixed_abs, tag = 'sflag constant byte address 0x0 - dummy sync flag']
  #allocation110 [shape = 's32[]', space=sflag, size = 0x4, offset = 0, fixed_abs, tag = 'sflag constant byte address 0x0 - dummy sync flag']
  #allocation111 [shape = 's32[]', space=sflag, size = 0x4, offset = 0, fixed_abs, tag = 'sflag constant byte address 0x0 - dummy sync flag']
  #allocation112 [shape = 's32[]', space=sflag, size = 0x4, offset = 0, fixed_abs, tag = 'sflag constant byte address 0x0 - dummy sync flag']
  #allocation113 [shape = 's32[]', space=sflag, size = 0x4, offset = 0, fixed_abs, tag = 'sflag constant byte address 0x0 - dummy sync flag']
  %s0 = inlined_call_operand.hbm [shape: s32[8], index: 0, kind: input, shape index: {}]
  %s1 = inlined_call_operand.vmem [shape: s32[8], index: 1, kind: input, shape index: {}]
  %s2 = inlined_call_operand.vmem [shape: s32[32], index: 2, kind: input, shape index: {}]
  %s3 = inlined_call_operand.hbm [shape: f32[256,128], index: 3, kind: input, shape index: {}]
  %s4 = inlined_call_operand.hbm [shape: f32[256,128], index: 4, kind: input, shape index: {}]
  %s5 = inlined_call_operand.hbm [shape: f32[1,1], index: 5, kind: output, shape index: {}]
  %s6 = sld [smem:[#allocation0]]
  $region226: #{tpu_custom_call.1} parent=0
    _
  %s8 = ssub.s32 1, %s6
  %s9 = scalar_select 0, %s8, %s6
  $region1: #{tpu_custom_call.1} parent=0
    #allocation8 [shape = 'u8[512]{0}', space=smem, size = 0x200, scoped, tag = 'input window, operand 0, single buffered']
    #allocation9 [shape = 's32[1]{0}', space=sflag, size = 0x4, scoped, tag = 'scoped memory for tpu_custom_call.1']
    #allocation10 [shape = 's32[1]{0}', space=sflag, size = 0x4, scoped, tag = 'scoped memory for tpu_custom_call.1']
    #allocation11 [shape = 's32[1]{0}', space=sflag, size = 0x4, scoped, tag = 'scoped memory for tpu_custom_call.1']
    #allocation12 [shape = 'u8[512]{0}', space=smem, size = 0x200, scoped, tag = 'input window, operand 1, single buffered']
    #allocation13 [shape = 'u8[512]{0}', space=smem, size = 0x200, scoped, tag = 'input window, operand 2, single buffered']
    #allocation14 [shape = 's32[1]{0}', space=sflag, size = 0x4, scoped, tag = 'scoped memory for tpu_custom_call.1']
    #allocation15 [shape = 'u8[512]{0}', space=vmem, size = 0x400, scoped, tag = 'output window, operand 0, single buffered']
    %10 = vsyncpa [#allocation10], 0
    %11 = vsyncpa [#allocation11], 0
    %12 = vsyncpa [#allocation14], 0
    %13 = vsyncpa [#allocation9], 0
    // Predicated region
    $region2: #{tpu_custom_call.1} parent=1 // pred_check
      _
    $region3: #{tpu_custom_call.1} parent=1 // pred_check_branch
      %15 = sbr.rel (0) target = $region5
    $region4: #{tpu_custom_call.1} parent=1 // pred_region
      %s17 = ssub.s32 16, 16
      %18 = vsyncadd [#allocation10], %s17
      %21 = dma.hbm_to_smem %s0, 16, [#allocation8], [#allocation10]
    $region5: #{tpu_custom_call.1} parent=1 // pred_fallthru
      _
    // Predicated region
    $region6: #{tpu_custom_call.1} parent=1 // pred_check
      _
    $region7: #{tpu_custom_call.1} parent=1 // pred_check_branch
      %23 = sbr.rel (0) target = $region9
    $region8: #{tpu_custom_call.1} parent=1 // pred_region
      %s25 = ssub.s32 16, 16
      %26 = vsyncadd [#allocation11], %s25
      %s28 = sshll.u32 %s1, 4
      %s29 = int_to_ptr.vmem [resolvable:$true] %s28
      %31 = dma.vmem_to_smem %s29, 16, [#allocation12], [#allocation11]
    $region9: #{tpu_custom_call.1} parent=1 // pred_fallthru
      _
    // Predicated region
    $region10: #{tpu_custom_call.1} parent=1 // pred_check
      _
    $region11: #{tpu_custom_call.1} parent=1 // pred_check_branch
      %33 = sbr.rel (0) target = $region13
    $region12: #{tpu_custom_call.1} parent=1 // pred_region
      %s35 = ssub.s32 16, 16
      %36 = vsyncadd [#allocation14], %s35
      %s38 = sshll.u32 %s2, 4
      %s39 = int_to_ptr.vmem [resolvable:$true] %s38
      %41 = dma.vmem_to_smem %s39, 16, [#allocation13], [#allocation14]
    $region13: #{tpu_custom_call.1} parent=1 // pred_fallthru
      _
    // Predicated region
    $region14: #{tpu_custom_call.1} parent=1 // pred_check
      _
    $region15: #{tpu_custom_call.1} parent=1 // pred_check_branch
      %43 = sbr.rel (0) target = $region17
    $region16: #{tpu_custom_call.1} parent=1 // pred_region
      %44 = dma.done [#allocation10], 16
    $region17: #{tpu_custom_call.1} parent=1 // pred_fallthru
      _
    // Predicated region
    $region18: #{tpu_custom_call.1} parent=1 // pred_check
      _
    $region19: #{tpu_custom_call.1} parent=1 // pred_check_branch
      %46 = sbr.rel (0) target = $region21
    $region20: #{tpu_custom_call.1} parent=1 // pred_region
      %47 = dma.done [#allocation11], 16
    $region21: #{tpu_custom_call.1} parent=1 // pred_fallthru
      _
    // Predicated region
    $region22: #{tpu_custom_call.1} parent=1 // pred_check
      _
    $region23: #{tpu_custom_call.1} parent=1 // pred_check_branch
      %49 = sbr.rel (0) target = $region25
    $region24: #{tpu_custom_call.1} parent=1 // pred_region
      %50 = dma.done [#allocation14], 16
    $region25: #{tpu_custom_call.1} parent=1 // pred_fallthru
      _
    %51 = sfence
    %s52 = sld [smem:[#allocation8]]
    %s53 = smul.addr %s52, 16
    %s54 = scalar_lea.hbm %s3, %s53
    // Predicated region
    $region26: #{tpu_custom_call.1} parent=1 // pred_check
      _
    $region27: #{tpu_custom_call.1} parent=1 // pred_check_branch
      %56 = sbr.rel target = $region29
    $region28: #{tpu_custom_call.1} parent=1 // pred_region
      %57 = sst [smem:[#allocation18]] [#allocation17]
      %58 = sst [smem:[#allocation19]] [#allocation16]
    $region29: #{tpu_custom_call.1} parent=1 // pred_fallthru
      _
    %60 = shalt.err (0)
    %s62 = sshll.u32 [#allocation2], 4
    %s63 = int_to_ptr.vmem [resolvable:$true] %s62
    %65 = dma.hbm_to_vmem [thread:$0]  %s54, 16, %s63, [#allocation5]
    %s66 = sld [smem:[#allocation8 + $0x1]]
    %s67 = smul.addr %s66, 16
    %s68 = scalar_lea.hbm %s3, %s67
    %s69 = scalar_lea.vmem [#allocation2], 1
    %s70 = scalar_lea.sflag [#allocation5], 1
    // Predicated region
    $region30: #{tpu_custom_call.1} parent=1 // pred_check
      _
    $region31: #{tpu_custom_call.1} parent=1 // pred_check_branch
      %72 = sbr.rel target = $region33
    $region32: #{tpu_custom_call.1} parent=1 // pred_region
      %73 = sst [smem:[#allocation18]] [#allocation21]
      %74 = sst [smem:[#allocation19]] [#allocation20]
    $region33: #{tpu_custom_call.1} parent=1 // pred_fallthru
      _
    %76 = shalt.err (0)
    %s78 = sshll.u32 %s69, 4
    %s79 = int_to_ptr.vmem [resolvable:$true] %s78
    %81 = dma.hbm_to_vmem [thread:$0]  %s68, 16, %s79, %s70
    %s82 = sld [smem:[#allocation8 + $0x2]]
    %s83 = smul.addr %s82, 16
    %s84 = scalar_lea.hbm %s3, %s83
    %s85 = scalar_lea.vmem [#allocation2], 2
    %s86 = scalar_lea.sflag [#allocation5], 2
    // Predicated region
    $region34: #{tpu_custom_call.1} parent=1 // pred_check
      _
    $region35: #{tpu_custom_call.1} parent=1 // pred_check_branch
      %88 = sbr.rel target = $region37
    $region36: #{tpu_custom_call.1} parent=1 // pred_region
      %89 = sst [smem:[#allocation18]] [#allocation23]
      %90 = sst [smem:[#allocation19]] [#allocation22]
    $region37: #{tpu_custom_call.1} parent=1 // pred_fallthru
      _
    %92 = shalt.err (0)
    %s94 = sshll.u32 %s85, 4
    %s95 = int_to_ptr.vmem [resolvable:$true] %s94
    %97 = dma.hbm_to_vmem [thread:$0]  %s84, 16, %s95, %s86
    %s98 = sld [smem:[#allocation8 + $0x3]]
    %s99 = smul.addr %s98, 16
    %s100 = scalar_lea.hbm %s3, %s99
    %s101 = scalar_lea.vmem [#allocation2], 3
    %s102 = scalar_lea.sflag [#allocation5], 3
    // Predicated region
    $region38: #{tpu_custom_call.1} parent=1 // pred_check
      _
    $region39: #{tpu_custom_call.1} parent=1 // pred_check_branch
      %104 = sbr.rel target = $region41
    $region40: #{tpu_custom_call.1} parent=1 // pred_region
      %105 = sst [smem:[#allocation18]] [#allocation25]
      %106 = sst [smem:[#allocation19]] [#allocation24]
    $region41: #{tpu_custom_call.1} parent=1 // pred_fallthru
      _
    %108 = shalt.err (0)
    %s110 = sshll.u32 %s101, 4
    %s111 = int_to_ptr.vmem [resolvable:$true] %s110
    %113 = dma.hbm_to_vmem [thread:$0]  %s100, 16, %s111, %s102
    %s114 = sld [smem:[#allocation8 + $0x4]]
    %s115 = smul.addr %s114, 16
    %s116 = scalar_lea.hbm %s3, %s115
    %s117 = scalar_lea.vmem [#allocation2], 4
    %s118 = scalar_lea.sflag [#allocation5], 4
    // Predicated region
    $region42: #{tpu_custom_call.1} parent=1 // pred_check
      _
    $region43: #{tpu_custom_call.1} parent=1 // pred_check_branch
      %120 = sbr.rel target = $region45
    $region44: #{tpu_custom_call.1} parent=1 // pred_region
      %121 = sst [smem:[#allocation18]] [#allocation27]
      %122 = sst [smem:[#allocation19]] [#allocation26]
    $region45: #{tpu_custom_call.1} parent=1 // pred_fallthru
      _
    %124 = shalt.err (0)
    %s126 = sshll.u32 %s117, 4
    %s127 = int_to_ptr.vmem [resolvable:$true] %s126
    %129 = dma.hbm_to_vmem [thread:$0]  %s116, 16, %s127, %s118
    %s130 = sld [smem:[#allocation8 + $0x5]]
    %s131 = smul.addr %s130, 16
    %s132 = scalar_lea.hbm %s3, %s131
    %s133 = scalar_lea.vmem [#allocation2], 5
    %s134 = scalar_lea.sflag [#allocation5], 5
    // Predicated region
    $region46: #{tpu_custom_call.1} parent=1 // pred_check
      _
    $region47: #{tpu_custom_call.1} parent=1 // pred_check_branch
      %136 = sbr.rel target = $region49
    $region48: #{tpu_custom_call.1} parent=1 // pred_region
      %137 = sst [smem:[#allocation18]] [#allocation29]
      %138 = sst [smem:[#allocation19]] [#allocation28]
    $region49: #{tpu_custom_call.1} parent=1 // pred_fallthru
      _
    %140 = shalt.err (0)
    %s142 = sshll.u32 %s133, 4
    %s143 = int_to_ptr.vmem [resolvable:$true] %s142
    %145 = dma.hbm_to_vmem [thread:$0]  %s132, 16, %s143, %s134
    %s146 = sld [smem:[#allocation8 + $0x6]]
    %s147 = smul.addr %s146, 16
    %s148 = scalar_lea.hbm %s3, %s147
    %s149 = scalar_lea.vmem [#allocation2], 6
    %s150 = scalar_lea.sflag [#allocation5], 6
    // Predicated region
    $region50: #{tpu_custom_call.1} parent=1 // pred_check
      _
    $region51: #{tpu_custom_call.1} parent=1 // pred_check_branch
      %152 = sbr.rel target = $region53
    $region52: #{tpu_custom_call.1} parent=1 // pred_region
      %153 = sst [smem:[#allocation18]] [#allocation31]
      %154 = sst [smem:[#allocation19]] [#allocation30]
    $region53: #{tpu_custom_call.1} parent=1 // pred_fallthru
      _
    %156 = shalt.err (0)
    %s158 = sshll.u32 %s149, 4
    %s159 = int_to_ptr.vmem [resolvable:$true] %s158
    %161 = dma.hbm_to_vmem [thread:$0]  %s148, 16, %s159, %s150
    %s162 = sld [smem:[#allocation8 + $0x7]]
    %s163 = smul.addr %s162, 16
    %s164 = scalar_lea.hbm %s3, %s163
    %s165 = scalar_lea.vmem [#allocation2], 7
    %s166 = scalar_lea.sflag [#allocation5], 7
    // Predicated region
    $region54: #{tpu_custom_call.1} parent=1 // pred_check
      _
    $region55: #{tpu_custom_call.1} parent=1 // pred_check_branch
      %168 = sbr.rel target = $region57
    $region56: #{tpu_custom_call.1} parent=1 // pred_region
      %169 = sst [smem:[#allocation18]] [#allocation33]
      %170 = sst [smem:[#allocation19]] [#allocation32]
    $region57: #{tpu_custom_call.1} parent=1 // pred_fallthru
      _
    %172 = shalt.err (0)
    %s174 = sshll.u32 %s165, 4
    %s175 = int_to_ptr.vmem [resolvable:$true] %s174
    %177 = dma.hbm_to_vmem [thread:$0]  %s164, 16, %s175, %s166
    %s178 = sld [smem:[#allocation12]]
    %s179 = smul.addr %s178, 16
    %s180 = scalar_lea.hbm %s4, %s179
    // Predicated region
    $region58: #{tpu_custom_call.1} parent=1 // pred_check
      _
    $region59: #{tpu_custom_call.1} parent=1 // pred_check_branch
      %182 = sbr.rel target = $region61
    $region60: #{tpu_custom_call.1} parent=1 // pred_region
      %183 = sst [smem:[#allocation18]] [#allocation35]
      %184 = sst [smem:[#allocation19]] [#allocation34]
    $region61: #{tpu_custom_call.1} parent=1 // pred_fallthru
      _
    %186 = shalt.err (0)
    %s188 = sshll.u32 [#allocation3], 4
    %s189 = int_to_ptr.vmem [resolvable:$true] %s188
    %191 = dma.hbm_to_vmem [thread:$0]  %s180, 16, %s189, [#allocation6]
    %s192 = sld [smem:[#allocation12 + $0x1]]
    %s193 = smul.addr %s192, 16
    %s194 = scalar_lea.hbm %s4, %s193
    %s195 = scalar_lea.vmem [#allocation3], 1
    %s196 = scalar_lea.sflag [#allocation6], 1
    // Predicated region
    $region62: #{tpu_custom_call.1} parent=1 // pred_check
      _
    $region63: #{tpu_custom_call.1} parent=1 // pred_check_branch
      %198 = sbr.rel target = $region65
    $region64: #{tpu_custom_call.1} parent=1 // pred_region
      %199 = sst [smem:[#allocation18]] [#allocation37]
      %200 = sst [smem:[#allocation19]] [#allocation36]
    $region65: #{tpu_custom_call.1} parent=1 // pred_fallthru
      _
    %202 = shalt.err (0)
    %s204 = sshll.u32 %s195, 4
    %s205 = int_to_ptr.vmem [resolvable:$true] %s204
    %207 = dma.hbm_to_vmem [thread:$0]  %s194, 16, %s205, %s196
    %s208 = sld [smem:[#allocation12 + $0x2]]
    %s209 = smul.addr %s208, 16
    %s210 = scalar_lea.hbm %s4, %s209
    %s211 = scalar_lea.vmem [#allocation3], 2
    %s212 = scalar_lea.sflag [#allocation6], 2
    // Predicated region
    $region66: #{tpu_custom_call.1} parent=1 // pred_check
      _
    $region67: #{tpu_custom_call.1} parent=1 // pred_check_branch
      %214 = sbr.rel target = $region69
    $region68: #{tpu_custom_call.1} parent=1 // pred_region
      %215 = sst [smem:[#allocation18]] [#allocation39]
      %216 = sst [smem:[#allocation19]] [#allocation38]
    $region69: #{tpu_custom_call.1} parent=1 // pred_fallthru
      _
    %218 = shalt.err (0)
    %s220 = sshll.u32 %s211, 4
    %s221 = int_to_ptr.vmem [resolvable:$true] %s220
    %223 = dma.hbm_to_vmem [thread:$0]  %s210, 16, %s221, %s212
    %s224 = sld [smem:[#allocation12 + $0x3]]
    %s225 = smul.addr %s224, 16
    %s226 = scalar_lea.hbm %s4, %s225
    %s227 = scalar_lea.vmem [#allocation3], 3
    %s228 = scalar_lea.sflag [#allocation6], 3
    // Predicated region
    $region70: #{tpu_custom_call.1} parent=1 // pred_check
      _
    $region71: #{tpu_custom_call.1} parent=1 // pred_check_branch
      %230 = sbr.rel target = $region73
    $region72: #{tpu_custom_call.1} parent=1 // pred_region
      %231 = sst [smem:[#allocation18]] [#allocation41]
      %232 = sst [smem:[#allocation19]] [#allocation40]
    $region73: #{tpu_custom_call.1} parent=1 // pred_fallthru
      _
    %234 = shalt.err (0)
    %s236 = sshll.u32 %s227, 4
    %s237 = int_to_ptr.vmem [resolvable:$true] %s236
    %239 = dma.hbm_to_vmem [thread:$0]  %s226, 16, %s237, %s228
    %s240 = sld [smem:[#allocation12 + $0x4]]
    %s241 = smul.addr %s240, 16
    %s242 = scalar_lea.hbm %s4, %s241
    %s243 = scalar_lea.vmem [#allocation3], 4
    %s244 = scalar_lea.sflag [#allocation6], 4
    // Predicated region
    $region74: #{tpu_custom_call.1} parent=1 // pred_check
      _
    $region75: #{tpu_custom_call.1} parent=1 // pred_check_branch
      %246 = sbr.rel target = $region77
    $region76: #{tpu_custom_call.1} parent=1 // pred_region
      %247 = sst [smem:[#allocation18]] [#allocation43]
      %248 = sst [smem:[#allocation19]] [#allocation42]
    $region77: #{tpu_custom_call.1} parent=1 // pred_fallthru
      _
    %250 = shalt.err (0)
    %s252 = sshll.u32 %s243, 4
    %s253 = int_to_ptr.vmem [resolvable:$true] %s252
    %255 = dma.hbm_to_vmem [thread:$0]  %s242, 16, %s253, %s244
    %s256 = sld [smem:[#allocation12 + $0x5]]
    %s257 = smul.addr %s256, 16
    %s258 = scalar_lea.hbm %s4, %s257
    %s259 = scalar_lea.vmem [#allocation3], 5
    %s260 = scalar_lea.sflag [#allocation6], 5
    // Predicated region
    $region78: #{tpu_custom_call.1} parent=1 // pred_check
      _
    $region79: #{tpu_custom_call.1} parent=1 // pred_check_branch
      %262 = sbr.rel target = $region81
    $region80: #{tpu_custom_call.1} parent=1 // pred_region
      %263 = sst [smem:[#allocation18]] [#allocation45]
      %264 = sst [smem:[#allocation19]] [#allocation44]
    $region81: #{tpu_custom_call.1} parent=1 // pred_fallthru
      _
    %266 = shalt.err (0)
    %s268 = sshll.u32 %s259, 4
    %s269 = int_to_ptr.vmem [resolvable:$true] %s268
    %271 = dma.hbm_to_vmem [thread:$0]  %s258, 16, %s269, %s260
    %s272 = sld [smem:[#allocation12 + $0x6]]
    %s273 = smul.addr %s272, 16
    %s274 = scalar_lea.hbm %s4, %s273
    %s275 = scalar_lea.vmem [#allocation3], 6
    %s276 = scalar_lea.sflag [#allocation6], 6
    // Predicated region
    $region82: #{tpu_custom_call.1} parent=1 // pred_check
      _
    $region83: #{tpu_custom_call.1} parent=1 // pred_check_branch
      %278 = sbr.rel target = $region85
    $region84: #{tpu_custom_call.1} parent=1 // pred_region
      %279 = sst [smem:[#allocation18]] [#allocation47]
      %280 = sst [smem:[#allocation19]] [#allocation46]
    $region85: #{tpu_custom_call.1} parent=1 // pred_fallthru
      _
    %282 = shalt.err (0)
    %s284 = sshll.u32 %s275, 4
    %s285 = int_to_ptr.vmem [resolvable:$true] %s284
    %287 = dma.hbm_to_vmem [thread:$0]  %s274, 16, %s285, %s276
    %s288 = sld [smem:[#allocation12 + $0x7]]
    %s289 = smul.addr %s288, 16
    %s290 = scalar_lea.hbm %s4, %s289
    %s291 = scalar_lea.vmem [#allocation3], 7
    %s292 = scalar_lea.sflag [#allocation6], 7
    // Predicated region
    $region86: #{tpu_custom_call.1} parent=1 // pred_check
      _
    $region87: #{tpu_custom_call.1} parent=1 // pred_check_branch
      %294 = sbr.rel target = $region89
    $region88: #{tpu_custom_call.1} parent=1 // pred_region
      %295 = sst [smem:[#allocation18]] [#allocation49]
      %296 = sst [smem:[#allocation19]] [#allocation48]
    $region89: #{tpu_custom_call.1} parent=1 // pred_fallthru
      _
    %298 = shalt.err (0)
    %s300 = sshll.u32 %s291, 4
    %s301 = int_to_ptr.vmem [resolvable:$true] %s300
    %303 = dma.hbm_to_vmem [thread:$0]  %s290, 16, %s301, %s292
    %s304 = sld [smem:[#allocation13]]
    %s305 = smul.addr %s304, 16
    %s306 = scalar_lea.hbm %s4, %s305
    // Predicated region
    $region90: #{tpu_custom_call.1} parent=1 // pred_check
      _
    $region91: #{tpu_custom_call.1} parent=1 // pred_check_branch
      %308 = sbr.rel target = $region93
    $region92: #{tpu_custom_call.1} parent=1 // pred_region
      %309 = sst [smem:[#allocation18]] [#allocation51]
      %310 = sst [smem:[#allocation19]] [#allocation50]
    $region93: #{tpu_custom_call.1} parent=1 // pred_fallthru
      _
    %312 = shalt.err (0)
    %s314 = sshll.u32 [#allocation4], 4
    %s315 = int_to_ptr.vmem [resolvable:$true] %s314
    %317 = dma.hbm_to_vmem [thread:$0]  %s306, 16, %s315, [#allocation7]
    %s318 = sld [smem:[#allocation13 + $0x1]]
    %s319 = smul.addr %s318, 16
    %s320 = scalar_lea.hbm %s4, %s319
    %s321 = scalar_lea.vmem [#allocation4], 8
    %s322 = scalar_lea.sflag [#allocation7], 1
    // Predicated region
    $region94: #{tpu_custom_call.1} parent=1 // pred_check
      _
    $region95: #{tpu_custom_call.1} parent=1 // pred_check_branch
      %324 = sbr.rel target = $region97
    $region96: #{tpu_custom_call.1} parent=1 // pred_region
      %325 = sst [smem:[#allocation18]] [#allocation53]
      %326 = sst [smem:[#allocation19]] [#allocation52]
    $region97: #{tpu_custom_call.1} parent=1 // pred_fallthru
      _
    %328 = shalt.err (0)
    %s330 = sshll.u32 %s321, 4
    %s331 = int_to_ptr.vmem [resolvable:$true] %s330
    %333 = dma.hbm_to_vmem [thread:$0]  %s320, 16, %s331, %s322
    %s334 = sld [smem:[#allocation13 + $0x2]]
    %s335 = smul.addr %s334, 16
    %s336 = scalar_lea.hbm %s4, %s335
    %s337 = scalar_lea.vmem [#allocation4], 16
    %s338 = scalar_lea.sflag [#allocation7], 2
    // Predicated region
    $region98: #{tpu_custom_call.1} parent=1 // pred_check
      _
    $region99: #{tpu_custom_call.1} parent=1 // pred_check_branch
      %340 = sbr.rel target = $region101
    $region100: #{tpu_custom_call.1} parent=1 // pred_region
      %341 = sst [smem:[#allocation18]] [#allocation55]
      %342 = sst [smem:[#allocation19]] [#allocation54]
    $region101: #{tpu_custom_call.1} parent=1 // pred_fallthru
      _
    %344 = shalt.err (0)
    %s346 = sshll.u32 %s337, 4
    %s347 = int_to_ptr.vmem [resolvable:$true] %s346
    %349 = dma.hbm_to_vmem [thread:$0]  %s336, 16, %s347, %s338
    %s350 = sld [smem:[#allocation13 + $0x3]]
    %s351 = smul.addr %s350, 16
    %s352 = scalar_lea.hbm %s4, %s351
    %s353 = scalar_lea.vmem [#allocation4], 24
    %s354 = scalar_lea.sflag [#allocation7], 3
    // Predicated region
    $region102: #{tpu_custom_call.1} parent=1 // pred_check
      _
    $region103: #{tpu_custom_call.1} parent=1 // pred_check_branch
      %356 = sbr.rel target = $region105
    $region104: #{tpu_custom_call.1} parent=1 // pred_region
      %357 = sst [smem:[#allocation18]] [#allocation57]
      %358 = sst [smem:[#allocation19]] [#allocation56]
    $region105: #{tpu_custom_call.1} parent=1 // pred_fallthru
      _
    %360 = shalt.err (0)
    %s362 = sshll.u32 %s353, 4
    %s363 = int_to_ptr.vmem [resolvable:$true] %s362
    %365 = dma.hbm_to_vmem [thread:$0]  %s352, 16, %s363, %s354
    %s366 = sld [smem:[#allocation13 + $0x4]]
    %s367 = smul.addr %s366, 16
    %s368 = scalar_lea.hbm %s4, %s367
    %s369 = scalar_lea.vmem [#allocation4], 1
    %s370 = scalar_lea.sflag [#allocation7], 4
    // Predicated region
    $region106: #{tpu_custom_call.1} parent=1 // pred_check
      _
    $region107: #{tpu_custom_call.1} parent=1 // pred_check_branch
      %372 = sbr.rel target = $region109
    $region108: #{tpu_custom_call.1} parent=1 // pred_region
      %373 = sst [smem:[#allocation18]] [#allocation59]
      %374 = sst [smem:[#allocation19]] [#allocation58]
    $region109: #{tpu_custom_call.1} parent=1 // pred_fallthru
      _
    %376 = shalt.err (0)
    %s378 = sshll.u32 %s369, 4
    %s379 = int_to_ptr.vmem [resolvable:$true] %s378
    %381 = dma.hbm_to_vmem [thread:$0]  %s368, 16, %s379, %s370
    %s382 = sld [smem:[#allocation13 + $0x5]]
    %s383 = smul.addr %s382, 16
    %s384 = scalar_lea.hbm %s4, %s383
    %s385 = scalar_lea.vmem [#allocation4], 9
    %s386 = scalar_lea.sflag [#allocation7], 5
    // Predicated region
    $region110: #{tpu_custom_call.1} parent=1 // pred_check
      _
    $region111: #{tpu_custom_call.1} parent=1 // pred_check_branch
      %388 = sbr.rel target = $region113
    $region112: #{tpu_custom_call.1} parent=1 // pred_region
      %389 = sst [smem:[#allocation18]] [#allocation61]
      %390 = sst [smem:[#allocation19]] [#allocation60]
    $region113: #{tpu_custom_call.1} parent=1 // pred_fallthru
      _
    %392 = shalt.err (0)
    %s394 = sshll.u32 %s385, 4
    %s395 = int_to_ptr.vmem [resolvable:$true] %s394
    %397 = dma.hbm_to_vmem [thread:$0]  %s384, 16, %s395, %s386
    %s398 = sld [smem:[#allocation13 + $0x6]]
    %s399 = smul.addr %s398, 16
    %s400 = scalar_lea.hbm %s4, %s399
    %s401 = scalar_lea.vmem [#allocation4], 17
    %s402 = scalar_lea.sflag [#allocation7], 6
    // Predicated region
    $region114: #{tpu_custom_call.1} parent=1 // pred_check
      _
    $region115: #{tpu_custom_call.1} parent=1 // pred_check_branch
      %404 = sbr.rel target = $region117
    $region116: #{tpu_custom_call.1} parent=1 // pred_region
      %405 = sst [smem:[#allocation18]] [#allocation63]
      %406 = sst [smem:[#allocation19]] [#allocation62]
    $region117: #{tpu_custom_call.1} parent=1 // pred_fallthru
      _
    %408 = shalt.err (0)
    %s410 = sshll.u32 %s401, 4
    %s411 = int_to_ptr.vmem [resolvable:$true] %s410
    %413 = dma.hbm_to_vmem [thread:$0]  %s400, 16, %s411, %s402
    %s414 = sld [smem:[#allocation13 + $0x7]]
    %s415 = smul.addr %s414, 16
    %s416 = scalar_lea.hbm %s4, %s415
    %s417 = scalar_lea.vmem [#allocation4], 25
    %s418 = scalar_lea.sflag [#allocation7], 7
    // Predicated region
    $region118: #{tpu_custom_call.1} parent=1 // pred_check
      _
    $region119: #{tpu_custom_call.1} parent=1 // pred_check_branch
      %420 = sbr.rel target = $region121
    $region120: #{tpu_custom_call.1} parent=1 // pred_region
      %421 = sst [smem:[#allocation18]] [#allocation65]
      %422 = sst [smem:[#allocation19]] [#allocation64]
    $region121: #{tpu_custom_call.1} parent=1 // pred_fallthru
      _
    %424 = shalt.err (0)
    %s426 = sshll.u32 %s417, 4
    %s427 = int_to_ptr.vmem [resolvable:$true] %s426
    %429 = dma.hbm_to_vmem [thread:$0]  %s416, 16, %s427, %s418
    %s430 = sld [smem:[#allocation13 + $0x8]]
    %s431 = smul.addr %s430, 16
    %s432 = scalar_lea.hbm %s4, %s431
    %s433 = scalar_lea.vmem [#allocation4], 2
    %s434 = scalar_lea.sflag [#allocation7], 8
    // Predicated region
    $region122: #{tpu_custom_call.1} parent=1 // pred_check
      _
    $region123: #{tpu_custom_call.1} parent=1 // pred_check_branch
      %436 = sbr.rel target = $region125
    $region124: #{tpu_custom_call.1} parent=1 // pred_region
      %437 = sst [smem:[#allocation18]] [#allocation67]
      %438 = sst [smem:[#allocation19]] [#allocation66]
    $region125: #{tpu_custom_call.1} parent=1 // pred_fallthru
      _
    %440 = shalt.err (0)
    %s442 = sshll.u32 %s433, 4
    %s443 = int_to_ptr.vmem [resolvable:$true] %s442
    %445 = dma.hbm_to_vmem [thread:$0]  %s432, 16, %s443, %s434
    %s446 = sld [smem:[#allocation13 + $0x9]]
    %s447 = smul.addr %s446, 16
    %s448 = scalar_lea.hbm %s4, %s447
    %s449 = scalar_lea.vmem [#allocation4], 10
    %s450 = scalar_lea.sflag [#allocation7], 9
    // Predicated region
    $region126: #{tpu_custom_call.1} parent=1 // pred_check
      _
    $region127: #{tpu_custom_call.1} parent=1 // pred_check_branch
      %452 = sbr.rel target = $region129
    $region128: #{tpu_custom_call.1} parent=1 // pred_region
      %453 = sst [smem:[#allocation18]] [#allocation69]
      %454 = sst [smem:[#allocation19]] [#allocation68]
    $region129: #{tpu_custom_call.1} parent=1 // pred_fallthru
      _
    %456 = shalt.err (0)
    %s458 = sshll.u32 %s449, 4
    %s459 = int_to_ptr.vmem [resolvable:$true] %s458
    %461 = dma.hbm_to_vmem [thread:$0]  %s448, 16, %s459, %s450
    %s462 = sld [smem:[#allocation13 + $0xa]]
    %s463 = smul.addr %s462, 16
    %s464 = scalar_lea.hbm %s4, %s463
    %s465 = scalar_lea.vmem [#allocation4], 18
    %s466 = scalar_lea.sflag [#allocation7], 10
    // Predicated region
    $region130: #{tpu_custom_call.1} parent=1 // pred_check
      _
    $region131: #{tpu_custom_call.1} parent=1 // pred_check_branch
      %468 = sbr.rel target = $region133
    $region132: #{tpu_custom_call.1} parent=1 // pred_region
      %469 = sst [smem:[#allocation18]] [#allocation71]
      %470 = sst [smem:[#allocation19]] [#allocation70]
    $region133: #{tpu_custom_call.1} parent=1 // pred_fallthru
      _
    %472 = shalt.err (0)
    %s474 = sshll.u32 %s465, 4
    %s475 = int_to_ptr.vmem [resolvable:$true] %s474
    %477 = dma.hbm_to_vmem [thread:$0]  %s464, 16, %s475, %s466
    %s478 = sld [smem:[#allocation13 + $0xb]]
    %s479 = smul.addr %s478, 16
    %s480 = scalar_lea.hbm %s4, %s479
    %s481 = scalar_lea.vmem [#allocation4], 26
    %s482 = scalar_lea.sflag [#allocation7], 11
    // Predicated region
    $region134: #{tpu_custom_call.1} parent=1 // pred_check
      _
    $region135: #{tpu_custom_call.1} parent=1 // pred_check_branch
      %484 = sbr.rel target = $region137
    $region136: #{tpu_custom_call.1} parent=1 // pred_region
      %485 = sst [smem:[#allocation18]] [#allocation73]
      %486 = sst [smem:[#allocation19]] [#allocation72]
    $region137: #{tpu_custom_call.1} parent=1 // pred_fallthru
      _
    %488 = shalt.err (0)
    %s490 = sshll.u32 %s481, 4
    %s491 = int_to_ptr.vmem [resolvable:$true] %s490
    %493 = dma.hbm_to_vmem [thread:$0]  %s480, 16, %s491, %s482
    %s494 = sld [smem:[#allocation13 + $0xc]]
    %s495 = smul.addr %s494, 16
    %s496 = scalar_lea.hbm %s4, %s495
    %s497 = scalar_lea.vmem [#allocation4], 3
    %s498 = scalar_lea.sflag [#allocation7], 12
    // Predicated region
    $region138: #{tpu_custom_call.1} parent=1 // pred_check
      _
    $region139: #{tpu_custom_call.1} parent=1 // pred_check_branch
      %500 = sbr.rel target = $region141
    $region140: #{tpu_custom_call.1} parent=1 // pred_region
      %501 = sst [smem:[#allocation18]] [#allocation75]
      %502 = sst [smem:[#allocation19]] [#allocation74]
    $region141: #{tpu_custom_call.1} parent=1 // pred_fallthru
      _
    %504 = shalt.err (0)
    %s506 = sshll.u32 %s497, 4
    %s507 = int_to_ptr.vmem [resolvable:$true] %s506
    %509 = dma.hbm_to_vmem [thread:$0]  %s496, 16, %s507, %s498
    %s510 = sld [smem:[#allocation13 + $0xd]]
    %s511 = smul.addr %s510, 16
    %s512 = scalar_lea.hbm %s4, %s511
    %s513 = scalar_lea.vmem [#allocation4], 11
    %s514 = scalar_lea.sflag [#allocation7], 13
    // Predicated region
    $region142: #{tpu_custom_call.1} parent=1 // pred_check
      _
    $region143: #{tpu_custom_call.1} parent=1 // pred_check_branch
      %516 = sbr.rel target = $region145
    $region144: #{tpu_custom_call.1} parent=1 // pred_region
      %517 = sst [smem:[#allocation18]] [#allocation77]
      %518 = sst [smem:[#allocation19]] [#allocation76]
    $region145: #{tpu_custom_call.1} parent=1 // pred_fallthru
      _
    %520 = shalt.err (0)
    %s522 = sshll.u32 %s513, 4
    %s523 = int_to_ptr.vmem [resolvable:$true] %s522
    %525 = dma.hbm_to_vmem [thread:$0]  %s512, 16, %s523, %s514
    %s526 = sld [smem:[#allocation13 + $0xe]]
    %s527 = smul.addr %s526, 16
    %s528 = scalar_lea.hbm %s4, %s527
    %s529 = scalar_lea.vmem [#allocation4], 19
    %s530 = scalar_lea.sflag [#allocation7], 14
    // Predicated region
    $region146: #{tpu_custom_call.1} parent=1 // pred_check
      _
    $region147: #{tpu_custom_call.1} parent=1 // pred_check_branch
      %532 = sbr.rel target = $region149
    $region148: #{tpu_custom_call.1} parent=1 // pred_region
      %533 = sst [smem:[#allocation18]] [#allocation79]
      %534 = sst [smem:[#allocation19]] [#allocation78]
    $region149: #{tpu_custom_call.1} parent=1 // pred_fallthru
      _
    %536 = shalt.err (0)
    %s538 = sshll.u32 %s529, 4
    %s539 = int_to_ptr.vmem [resolvable:$true] %s538
    %541 = dma.hbm_to_vmem [thread:$0]  %s528, 16, %s539, %s530
    %s542 = sld [smem:[#allocation13 + $0xf]]
    %s543 = smul.addr %s542, 16
    %s544 = scalar_lea.hbm %s4, %s543
    %s545 = scalar_lea.vmem [#allocation4], 27
    %s546 = scalar_lea.sflag [#allocation7], 15
    // Predicated region
    $region150: #{tpu_custom_call.1} parent=1 // pred_check
      _
    $region151: #{tpu_custom_call.1} parent=1 // pred_check_branch
      %548 = sbr.rel target = $region153
    $region152: #{tpu_custom_call.1} parent=1 // pred_region
      %549 = sst [smem:[#allocation18]] [#allocation81]
      %550 = sst [smem:[#allocation19]] [#allocation80]
    $region153: #{tpu_custom_call.1} parent=1 // pred_fallthru
      _
    %552 = shalt.err (0)
    %s554 = sshll.u32 %s545, 4
    %s555 = int_to_ptr.vmem [resolvable:$true] %s554
    %557 = dma.hbm_to_vmem [thread:$0]  %s544, 16, %s555, %s546
    %s558 = sld [smem:[#allocation13 + $0x10]]
    %s559 = smul.addr %s558, 16
    %s560 = scalar_lea.hbm %s4, %s559
    %s561 = scalar_lea.vmem [#allocation4], 4
    %s562 = scalar_lea.sflag [#allocation7], 16
    // Predicated region
    $region154: #{tpu_custom_call.1} parent=1 // pred_check
      _
    $region155: #{tpu_custom_call.1} parent=1 // pred_check_branch
      %564 = sbr.rel target = $region157
    $region156: #{tpu_custom_call.1} parent=1 // pred_region
      %565 = sst [smem:[#allocation18]] [#allocation83]
      %566 = sst [smem:[#allocation19]] [#allocation82]
    $region157: #{tpu_custom_call.1} parent=1 // pred_fallthru
      _
    %568 = shalt.err (0)
    %s570 = sshll.u32 %s561, 4
    %s571 = int_to_ptr.vmem [resolvable:$true] %s570
    %573 = dma.hbm_to_vmem [thread:$0]  %s560, 16, %s571, %s562
    %s574 = sld [smem:[#allocation13 + $0x11]]
    %s575 = smul.addr %s574, 16
    %s576 = scalar_lea.hbm %s4, %s575
    %s577 = scalar_lea.vmem [#allocation4], 12
    %s578 = scalar_lea.sflag [#allocation7], 17
    // Predicated region
    $region158: #{tpu_custom_call.1} parent=1 // pred_check
      _
    $region159: #{tpu_custom_call.1} parent=1 // pred_check_branch
      %580 = sbr.rel target = $region161
    $region160: #{tpu_custom_call.1} parent=1 // pred_region
      %581 = sst [smem:[#allocation18]] [#allocation85]
      %582 = sst [smem:[#allocation19]] [#allocation84]
    $region161: #{tpu_custom_call.1} parent=1 // pred_fallthru
      _
    %584 = shalt.err (0)
    %s586 = sshll.u32 %s577, 4
    %s587 = int_to_ptr.vmem [resolvable:$true] %s586
    %589 = dma.hbm_to_vmem [thread:$0]  %s576, 16, %s587, %s578
    %s590 = sld [smem:[#allocation13 + $0x12]]
    %s591 = smul.addr %s590, 16
    %s592 = scalar_lea.hbm %s4, %s591
    %s593 = scalar_lea.vmem [#allocation4], 20
    %s594 = scalar_lea.sflag [#allocation7], 18
    // Predicated region
    $region162: #{tpu_custom_call.1} parent=1 // pred_check
      _
    $region163: #{tpu_custom_call.1} parent=1 // pred_check_branch
      %596 = sbr.rel target = $region165
    $region164: #{tpu_custom_call.1} parent=1 // pred_region
      %597 = sst [smem:[#allocation18]] [#allocation87]
      %598 = sst [smem:[#allocation19]] [#allocation86]
    $region165: #{tpu_custom_call.1} parent=1 // pred_fallthru
      _
    %600 = shalt.err (0)
    %s602 = sshll.u32 %s593, 4
    %s603 = int_to_ptr.vmem [resolvable:$true] %s602
    %605 = dma.hbm_to_vmem [thread:$0]  %s592, 16, %s603, %s594
    %s606 = sld [smem:[#allocation13 + $0x13]]
    %s607 = smul.addr %s606, 16
    %s608 = scalar_lea.hbm %s4, %s607
    %s609 = scalar_lea.vmem [#allocation4], 28
    %s610 = scalar_lea.sflag [#allocation7], 19
    // Predicated region
    $region166: #{tpu_custom_call.1} parent=1 // pred_check
      _
    $region167: #{tpu_custom_call.1} parent=1 // pred_check_branch
      %612 = sbr.rel target = $region169
    $region168: #{tpu_custom_call.1} parent=1 // pred_region
      %613 = sst [smem:[#allocation18]] [#allocation89]
      %614 = sst [smem:[#allocation19]] [#allocation88]
    $region169: #{tpu_custom_call.1} parent=1 // pred_fallthru
      _
    %616 = shalt.err (0)
    %s618 = sshll.u32 %s609, 4
    %s619 = int_to_ptr.vmem [resolvable:$true] %s618
    %621 = dma.hbm_to_vmem [thread:$0]  %s608, 16, %s619, %s610
    %s622 = sld [smem:[#allocation13 + $0x14]]
    %s623 = smul.addr %s622, 16
    %s624 = scalar_lea.hbm %s4, %s623
    %s625 = scalar_lea.vmem [#allocation4], 5
    %s626 = scalar_lea.sflag [#allocation7], 20
    // Predicated region
    $region170: #{tpu_custom_call.1} parent=1 // pred_check
      _
    $region171: #{tpu_custom_call.1} parent=1 // pred_check_branch
      %628 = sbr.rel target = $region173
    $region172: #{tpu_custom_call.1} parent=1 // pred_region
      %629 = sst [smem:[#allocation18]] [#allocation91]
      %630 = sst [smem:[#allocation19]] [#allocation90]
    $region173: #{tpu_custom_call.1} parent=1 // pred_fallthru
      _
    %632 = shalt.err (0)
    %s634 = sshll.u32 %s625, 4
    %s635 = int_to_ptr.vmem [resolvable:$true] %s634
    %637 = dma.hbm_to_vmem [thread:$0]  %s624, 16, %s635, %s626
    %s638 = sld [smem:[#allocation13 + $0x15]]
    %s639 = smul.addr %s638, 16
    %s640 = scalar_lea.hbm %s4, %s639
    %s641 = scalar_lea.vmem [#allocation4], 13
    %s642 = scalar_lea.sflag [#allocation7], 21
    // Predicated region
    $region174: #{tpu_custom_call.1} parent=1 // pred_check
      _
    $region175: #{tpu_custom_call.1} parent=1 // pred_check_branch
      %644 = sbr.rel target = $region177
    $region176: #{tpu_custom_call.1} parent=1 // pred_region
      %645 = sst [smem:[#allocation18]] [#allocation93]
      %646 = sst [smem:[#allocation19]] [#allocation92]
    $region177: #{tpu_custom_call.1} parent=1 // pred_fallthru
      _
    %648 = shalt.err (0)
    %s650 = sshll.u32 %s641, 4
    %s651 = int_to_ptr.vmem [resolvable:$true] %s650
    %653 = dma.hbm_to_vmem [thread:$0]  %s640, 16, %s651, %s642
    %s654 = sld [smem:[#allocation13 + $0x16]]
    %s655 = smul.addr %s654, 16
    %s656 = scalar_lea.hbm %s4, %s655
    %s657 = scalar_lea.vmem [#allocation4], 21
    %s658 = scalar_lea.sflag [#allocation7], 22
    // Predicated region
    $region178: #{tpu_custom_call.1} parent=1 // pred_check
      _
    $region179: #{tpu_custom_call.1} parent=1 // pred_check_branch
      %660 = sbr.rel target = $region181
    $region180: #{tpu_custom_call.1} parent=1 // pred_region
      %661 = sst [smem:[#allocation18]] [#allocation95]
      %662 = sst [smem:[#allocation19]] [#allocation94]
    $region181: #{tpu_custom_call.1} parent=1 // pred_fallthru
      _
    %664 = shalt.err (0)
    %s666 = sshll.u32 %s657, 4
    %s667 = int_to_ptr.vmem [resolvable:$true] %s666
    %669 = dma.hbm_to_vmem [thread:$0]  %s656, 16, %s667, %s658
    %s670 = sld [smem:[#allocation13 + $0x17]]
    %s671 = smul.addr %s670, 16
    %s672 = scalar_lea.hbm %s4, %s671
    %s673 = scalar_lea.vmem [#allocation4], 29
    %s674 = scalar_lea.sflag [#allocation7], 23
    // Predicated region
    $region182: #{tpu_custom_call.1} parent=1 // pred_check
      _
    $region183: #{tpu_custom_call.1} parent=1 // pred_check_branch
      %676 = sbr.rel target = $region185
    $region184: #{tpu_custom_call.1} parent=1 // pred_region
      %677 = sst [smem:[#allocation18]] [#allocation97]
      %678 = sst [smem:[#allocation19]] [#allocation96]
    $region185: #{tpu_custom_call.1} parent=1 // pred_fallthru
      _
    %680 = shalt.err (0)
    %s682 = sshll.u32 %s673, 4
    %s683 = int_to_ptr.vmem [resolvable:$true] %s682
    %685 = dma.hbm_to_vmem [thread:$0]  %s672, 16, %s683, %s674
    %s686 = sld [smem:[#allocation13 + $0x18]]
    %s687 = smul.addr %s686, 16
    %s688 = scalar_lea.hbm %s4, %s687
    %s689 = scalar_lea.vmem [#allocation4], 6
    %s690 = scalar_lea.sflag [#allocation7], 24
    // Predicated region
    $region186: #{tpu_custom_call.1} parent=1 // pred_check
      _
    $region187: #{tpu_custom_call.1} parent=1 // pred_check_branch
      %692 = sbr.rel target = $region189
    $region188: #{tpu_custom_call.1} parent=1 // pred_region
      %693 = sst [smem:[#allocation18]] [#allocation99]
      %694 = sst [smem:[#allocation19]] [#allocation98]
    $region189: #{tpu_custom_call.1} parent=1 // pred_fallthru
      _
    %696 = shalt.err (0)
    %s698 = sshll.u32 %s689, 4
    %s699 = int_to_ptr.vmem [resolvable:$true] %s698
    %701 = dma.hbm_to_vmem [thread:$0]  %s688, 16, %s699, %s690
    %s702 = sld [smem:[#allocation13 + $0x19]]
    %s703 = smul.addr %s702, 16
    %s704 = scalar_lea.hbm %s4, %s703
    %s705 = scalar_lea.vmem [#allocation4], 14
    %s706 = scalar_lea.sflag [#allocation7], 25
    // Predicated region
    $region190: #{tpu_custom_call.1} parent=1 // pred_check
      _
    $region191: #{tpu_custom_call.1} parent=1 // pred_check_branch
      %708 = sbr.rel target = $region193
    $region192: #{tpu_custom_call.1} parent=1 // pred_region
      %709 = sst [smem:[#allocation18]] [#allocation101]
      %710 = sst [smem:[#allocation19]] [#allocation100]
    $region193: #{tpu_custom_call.1} parent=1 // pred_fallthru
      _
    %712 = shalt.err (0)
    %s714 = sshll.u32 %s705, 4
    %s715 = int_to_ptr.vmem [resolvable:$true] %s714
    %717 = dma.hbm_to_vmem [thread:$0]  %s704, 16, %s715, %s706
    %s718 = sld [smem:[#allocation13 + $0x1a]]
    %s719 = smul.addr %s718, 16
    %s720 = scalar_lea.hbm %s4, %s719
    %s721 = scalar_lea.vmem [#allocation4], 22
    %s722 = scalar_lea.sflag [#allocation7], 26
    // Predicated region
    $region194: #{tpu_custom_call.1} parent=1 // pred_check
      _
    $region195: #{tpu_custom_call.1} parent=1 // pred_check_branch
      %724 = sbr.rel target = $region197
    $region196: #{tpu_custom_call.1} parent=1 // pred_region
      %725 = sst [smem:[#allocation18]] [#allocation103]
      %726 = sst [smem:[#allocation19]] [#allocation102]
    $region197: #{tpu_custom_call.1} parent=1 // pred_fallthru
      _
    %728 = shalt.err (0)
    %s730 = sshll.u32 %s721, 4
    %s731 = int_to_ptr.vmem [resolvable:$true] %s730
    %733 = dma.hbm_to_vmem [thread:$0]  %s720, 16, %s731, %s722
    %s734 = sld [smem:[#allocation13 + $0x1b]]
    %s735 = smul.addr %s734, 16
    %s736 = scalar_lea.hbm %s4, %s735
    %s737 = scalar_lea.vmem [#allocation4], 30
    %s738 = scalar_lea.sflag [#allocation7], 27
    // Predicated region
    $region198: #{tpu_custom_call.1} parent=1 // pred_check
      _
    $region199: #{tpu_custom_call.1} parent=1 // pred_check_branch
      %740 = sbr.rel target = $region201
    $region200: #{tpu_custom_call.1} parent=1 // pred_region
      %741 = sst [smem:[#allocation18]] [#allocation105]
      %742 = sst [smem:[#allocation19]] [#allocation104]
    $region201: #{tpu_custom_call.1} parent=1 // pred_fallthru
      _
    %744 = shalt.err (0)
    %s746 = sshll.u32 %s737, 4
    %s747 = int_to_ptr.vmem [resolvable:$true] %s746
    %749 = dma.hbm_to_vmem [thread:$0]  %s736, 16, %s747, %s738
    %s750 = sld [smem:[#allocation13 + $0x1c]]
    %s751 = smul.addr %s750, 16
    %s752 = scalar_lea.hbm %s4, %s751
    %s753 = scalar_lea.vmem [#allocation4], 7
    %s754 = scalar_lea.sflag [#allocation7], 28
    // Predicated region
    $region202: #{tpu_custom_call.1} parent=1 // pred_check
      _
    $region203: #{tpu_custom_call.1} parent=1 // pred_check_branch
      %756 = sbr.rel target = $region205
    $region204: #{tpu_custom_call.1} parent=1 // pred_region
      %757 = sst [smem:[#allocation18]] [#allocation107]
      %758 = sst [smem:[#allocation19]] [#allocation106]
    $region205: #{tpu_custom_call.1} parent=1 // pred_fallthru
      _
    %760 = shalt.err (0)
    %s762 = sshll.u32 %s753, 4
    %s763 = int_to_ptr.vmem [resolvable:$true] %s762
    %765 = dma.hbm_to_vmem [thread:$0]  %s752, 16, %s763, %s754
    %s766 = sld [smem:[#allocation13 + $0x1d]]
    %s767 = smul.addr %s766, 16
    %s768 = scalar_lea.hbm %s4, %s767
    %s769 = scalar_lea.vmem [#allocation4], 15
    %s770 = scalar_lea.sflag [#allocation7], 29
    // Predicated region
    $region206: #{tpu_custom_call.1} parent=1 // pred_check
      _
    $region207: #{tpu_custom_call.1} parent=1 // pred_check_branch
      %772 = sbr.rel target = $region209
    $region208: #{tpu_custom_call.1} parent=1 // pred_region
      %773 = sst [smem:[#allocation18]] [#allocation109]
      %774 = sst [smem:[#allocation19]] [#allocation108]
    $region209: #{tpu_custom_call.1} parent=1 // pred_fallthru
      _
    %776 = shalt.err (0)
    %s778 = sshll.u32 %s769, 4
    %s779 = int_to_ptr.vmem [resolvable:$true] %s778
    %781 = dma.hbm_to_vmem [thread:$0]  %s768, 16, %s779, %s770
    %s782 = sld [smem:[#allocation13 + $0x1e]]
    %s783 = smul.addr %s782, 16
    %s784 = scalar_lea.hbm %s4, %s783
    %s785 = scalar_lea.vmem [#allocation4], 23
    %s786 = scalar_lea.sflag [#allocation7], 30
    // Predicated region
    $region210: #{tpu_custom_call.1} parent=1 // pred_check
      _
    $region211: #{tpu_custom_call.1} parent=1 // pred_check_branch
      %788 = sbr.rel target = $region213
    $region212: #{tpu_custom_call.1} parent=1 // pred_region
      %789 = sst [smem:[#allocation18]] [#allocation111]
      %790 = sst [smem:[#allocation19]] [#allocation110]
    $region213: #{tpu_custom_call.1} parent=1 // pred_fallthru
      _
    %792 = shalt.err (0)
    %s794 = sshll.u32 %s785, 4
    %s795 = int_to_ptr.vmem [resolvable:$true] %s794
    %797 = dma.hbm_to_vmem [thread:$0]  %s784, 16, %s795, %s786
    %s798 = sld [smem:[#allocation13 + $0x1f]]
    %s799 = smul.addr %s798, 16
    %s800 = scalar_lea.hbm %s4, %s799
    %s801 = scalar_lea.vmem [#allocation4], 31
    %s802 = scalar_lea.sflag [#allocation7], 31
    // Predicated region
    $region214: #{tpu_custom_call.1} parent=1 // pred_check
      _
    $region215: #{tpu_custom_call.1} parent=1 // pred_check_branch
      %804 = sbr.rel target = $region217
    $region216: #{tpu_custom_call.1} parent=1 // pred_region
      %805 = sst [smem:[#allocation18]] [#allocation113]
      %806 = sst [smem:[#allocation19]] [#allocation112]
    $region217: #{tpu_custom_call.1} parent=1 // pred_fallthru
      _
    %808 = shalt.err (0)
    %s810 = sshll.u32 %s801, 4
    %s811 = int_to_ptr.vmem [resolvable:$true] %s810
    %813 = dma.hbm_to_vmem [thread:$0]  %s800, 16, %s811, %s802
    %s814 = smul.u32 1, 1
    %s815 = sshll.u32 %s814, 4
    %816 = dma.done [#allocation5], %s815
    %s817 = sshll.u32 %s814, 4
    %818 = dma.done %s70, %s817
    %s819 = sshll.u32 %s814, 4
    %820 = dma.done %s86, %s819
    %s821 = sshll.u32 %s814, 4
    %822 = dma.done %s102, %s821
    %s823 = sshll.u32 %s814, 4
    %824 = dma.done %s118, %s823
    %s825 = sshll.u32 %s814, 4
    %826 = dma.done %s134, %s825
    %s827 = sshll.u32 %s814, 4
    %828 = dma.done %s150, %s827
    %s829 = sshll.u32 %s814, 4
    %830 = dma.done %s166, %s829
    %s831 = sshll.u32 %s814, 4
    %832 = dma.done [#allocation6], %s831
    %s833 = sshll.u32 %s814, 4
    %834 = dma.done %s196, %s833
    %s835 = sshll.u32 %s814, 4
    %836 = dma.done %s212, %s835
    %s837 = sshll.u32 %s814, 4
    %838 = dma.done %s228, %s837
    %s839 = sshll.u32 %s814, 4
    %840 = dma.done %s244, %s839
    %s841 = sshll.u32 %s814, 4
    %842 = dma.done %s260, %s841
    %s843 = sshll.u32 %s814, 4
    %844 = dma.done %s276, %s843
    %s845 = sshll.u32 %s814, 4
    %846 = dma.done %s292, %s845
    %s847 = sshll.u32 %s814, 4
    %848 = dma.done [#allocation7], %s847
    %s849 = sshll.u32 %s814, 4
    %850 = dma.done %s322, %s849
    %s851 = sshll.u32 %s814, 4
    %852 = dma.done %s338, %s851
    %s853 = sshll.u32 %s814, 4
    %854 = dma.done %s354, %s853
    %s855 = sshll.u32 %s814, 4
    %856 = dma.done %s370, %s855
    %s857 = sshll.u32 %s814, 4
    %858 = dma.done %s386, %s857
    %s859 = sshll.u32 %s814, 4
    %860 = dma.done %s402, %s859
    %s861 = sshll.u32 %s814, 4
    %862 = dma.done %s418, %s861
    %s863 = sshll.u32 %s814, 4
    %864 = dma.done %s434, %s863
    %s865 = sshll.u32 %s814, 4
    %866 = dma.done %s450, %s865
    %s867 = sshll.u32 %s814, 4
    %868 = dma.done %s466, %s867
    %s869 = sshll.u32 %s814, 4
    %870 = dma.done %s482, %s869
    %s871 = sshll.u32 %s814, 4
    %872 = dma.done %s498, %s871
    %s873 = sshll.u32 %s814, 4
    %874 = dma.done %s514, %s873
    %s875 = sshll.u32 %s814, 4
    %876 = dma.done %s530, %s875
    %s877 = sshll.u32 %s814, 4
    %878 = dma.done %s546, %s877
    %s879 = sshll.u32 %s814, 4
    %880 = dma.done %s562, %s879
    %s881 = sshll.u32 %s814, 4
    %882 = dma.done %s578, %s881
    %s883 = sshll.u32 %s814, 4
    %884 = dma.done %s594, %s883
    %s885 = sshll.u32 %s814, 4
    %886 = dma.done %s610, %s885
    %s887 = sshll.u32 %s814, 4
    %888 = dma.done %s626, %s887
    %s889 = sshll.u32 %s814, 4
    %890 = dma.done %s642, %s889
    %s891 = sshll.u32 %s814, 4
    %892 = dma.done %s658, %s891
    %s893 = sshll.u32 %s814, 4
    %894 = dma.done %s674, %s893
    %s895 = sshll.u32 %s814, 4
    %896 = dma.done %s690, %s895
    %s897 = sshll.u32 %s814, 4
    %898 = dma.done %s706, %s897
    %s899 = sshll.u32 %s814, 4
    %900 = dma.done %s722, %s899
    %s901 = sshll.u32 %s814, 4
    %902 = dma.done %s738, %s901
    %s903 = sshll.u32 %s814, 4
    %904 = dma.done %s754, %s903
    %s905 = sshll.u32 %s814, 4
    %906 = dma.done %s770, %s905
    %s907 = sshll.u32 %s814, 4
    %908 = dma.done %s786, %s907
    %s909 = sshll.u32 %s814, 4
    %910 = dma.done %s802, %s909
    %v911 = vld [vmem:[#allocation2] sm:$0xff]
    %v912 = vld [vmem:[#allocation3] sm:$0xff]
    %v913 = vld [vmem:[#allocation4] sm:$0xff]
    %v914 = vld [vmem:[#allocation4 + $0x8] sm:$0xff]
    %v915 = vld [vmem:[#allocation4 + $0x10] sm:$0xff]
    %v916 = vld [vmem:[#allocation4 + $0x18] sm:$0xff]
    %v917 = vmul.f32 %v911, %v912
    %918 = vadd.xlane.f32.xlu0 %v917
    %v919 = vpop.xlane.xlu0 %918
    %v920 = vmin.f32 %v919, 0.0
    %v921 = vand.u32 2147483647, %v919
    %v922 = vsub.f32 0.0, %v921
    %v923 = vmul.f32 %v922, 1.442695
    %v924 = vpow.pop %v923
    %v925 = vadd.f32 %v924, 1.0
    %v926 = vlog2.pop %v925
    %v927 = vmul.f32 %v926, 0.6931472
    %v928 = vmul.f32 -0.5, %v924
    %v929 = vadd.f32 %v928, 1.0
    %v930 = vmul.f32 %v929, %v924
    %v931 = vand.u32 2147483647, %v924
    %vm932 = vcmp.lt.f32.partialorder %v931, 0.0004427343
    %v933 = vsel %vm932, %v930, %v927
    %v934 = vsub.f32 %v920, %v933
    %vm935 = vcmask 7168
    %v936 = vsel %vm935, %v934, 0.0
    %937 = vadd.xlane.f32.xlu0 %v936
    %v938 = vpop.xlane.xlu0 %937
    %v939 = vrot.slane %v938, 4
    %v940 = vadd.f32 %v938, %v939
    %v941 = vrot.slane %v940, 2
    %v942 = vadd.f32 %v940, %v941
    %v943 = vrot.slane %v942, 1
    %v944 = vadd.f32 %v942, %v943
    %s945 = vtos %v944
    %v946 = vadd.f32 %v913, %v914
    %v947 = vadd.f32 %v946, %v915
    %v948 = vadd.f32 %v947, %v916
    %v949 = vmul.f32 %v948, %v911
    %950 = vadd.xlane.f32.xlu0 %v949
    %v951 = vpop.xlane.xlu0 %950
    %v952 = vsub.f32 0.0, %v951
    %v953 = vmin.f32 %v952, 0.0
    %v954 = vand.u32 2147483647, %v952
    %v955 = vsub.f32 0.0, %v954
    %v956 = vmul.f32 %v955, 1.442695
    %v957 = vpow.pop %v956
    %v958 = vadd.f32 %v957, 1.0
    %v959 = vlog2.pop %v958
    %v960 = vmul.f32 %v959, 0.6931472
    %v961 = vmul.f32 -0.5, %v957
    %v962 = vadd.f32 %v961, 1.0
    %v963 = vmul.f32 %v962, %v957
    %v964 = vand.u32 2147483647, %v957
    %vm965 = vcmp.lt.f32.partialorder %v964, 0.0004427343
    %v966 = vsel %vm965, %v963, %v960
    %v967 = vsub.f32 %v953, %v966
    %v968 = vsel %vm935, %v967, 0.0
    %969 = vadd.xlane.f32.xlu0 %v968
    %v970 = vpop.xlane.xlu0 %969
    %v971 = vrot.slane %v970, 4
    %v972 = vadd.f32 %v970, %v971
    %v973 = vrot.slane %v972, 2
    %v974 = vadd.f32 %v972, %v973
    %v975 = vrot.slane %v974, 1
    %v976 = vadd.f32 %v974, %v975
    %s977 = vtos %v976
    %s978 = sadd.f32 %s945, %s977
    %s979 = ssub.f32 0.0, %s978
    %v980 = vstv %s979
    %vm981 = vcmask 0
    %982 = vst.msk [vmem:[#allocation15] sm:$0x1] %vm981, %v980
    // Predicated region
    $region218: #{tpu_custom_call.1} parent=1 // pred_check
      _
    $region219: #{tpu_custom_call.1} parent=1 // pred_check_branch
      %984 = sbr.rel (0) target = $region221
    $region220: #{tpu_custom_call.1} parent=1 // pred_region
      %s986 = ssub.s32 16, 16
      %987 = vsyncadd [#allocation9], %s986
      %s989 = sshll.u32 [#allocation15], 4
      %s990 = int_to_ptr.vmem [resolvable:$true] %s989
      %992 = dma.vmem_to_hbm [thread:$0]  %s990, 16, %s5, [#allocation9]
    $region221: #{tpu_custom_call.1} parent=1 // pred_fallthru
      _
    // Predicated region
    $region222: #{tpu_custom_call.1} parent=1 // pred_check
      _
    $region223: #{tpu_custom_call.1} parent=1 // pred_check_branch
      %994 = sbr.rel (0) target = $region225
    $region224: #{tpu_custom_call.1} parent=1 // pred_region
      %995 = dma.done [#allocation9], 16
    $region225: #{tpu_custom_call.1} parent=1 // pred_fallthru
      _
    %996 = vsyncpa [#allocation9], 1
    %997 = vsyncpa [#allocation10], 1
    %998 = vsyncpa [#allocation11], 1
    %999 = vsyncpa [#allocation14], 1
  %1000 = vsyncmov [#allocation5]
  %s1001 = vpop.sfrf %1000
  %p1002 = scmp.eq.s32.totalorder %s1001, 0
  %p1003 = pneg %p1002
  %1005 = shalt.err (%p1003)
  %s1006 = scalar_lea.sflag [#allocation5], 1
  %1007 = vsyncmov %s1006
  %s1008 = vpop.sfrf %1007
  %p1009 = scmp.eq.s32.totalorder %s1008, 0
  %p1010 = pneg %p1009
  %1012 = shalt.err (%p1010)
  %s1013 = scalar_lea.sflag [#allocation5], 2
  %1014 = vsyncmov %s1013
  %s1015 = vpop.sfrf %1014
  %p1016 = scmp.eq.s32.totalorder %s1015, 0
  %p1017 = pneg %p1016
  %1019 = shalt.err (%p1017)
  %s1020 = scalar_lea.sflag [#allocation5], 3
  %1021 = vsyncmov %s1020
  %s1022 = vpop.sfrf %1021
  %p1023 = scmp.eq.s32.totalorder %s1022, 0
  %p1024 = pneg %p1023
  %1026 = shalt.err (%p1024)
  %s1027 = scalar_lea.sflag [#allocation5], 4
  %1028 = vsyncmov %s1027
  %s1029 = vpop.sfrf %1028
  %p1030 = scmp.eq.s32.totalorder %s1029, 0
  %p1031 = pneg %p1030
  %1033 = shalt.err (%p1031)
  %s1034 = scalar_lea.sflag [#allocation5], 5
  %1035 = vsyncmov %s1034
  %s1036 = vpop.sfrf %1035
  %p1037 = scmp.eq.s32.totalorder %s1036, 0
  %p1038 = pneg %p1037
  %1040 = shalt.err (%p1038)
  %s1041 = scalar_lea.sflag [#allocation5], 6
  %1042 = vsyncmov %s1041
  %s1043 = vpop.sfrf %1042
  %p1044 = scmp.eq.s32.totalorder %s1043, 0
  %p1045 = pneg %p1044
  %1047 = shalt.err (%p1045)
  %s1048 = scalar_lea.sflag [#allocation5], 7
  %1049 = vsyncmov %s1048
  %s1050 = vpop.sfrf %1049
  %p1051 = scmp.eq.s32.totalorder %s1050, 0
  %p1052 = pneg %p1051
  %1054 = shalt.err (%p1052)
  %1055 = vsyncmov [#allocation6]
  %s1056 = vpop.sfrf %1055
  %p1057 = scmp.eq.s32.totalorder %s1056, 0
  %p1058 = pneg %p1057
  %1060 = shalt.err (%p1058)
  %s1061 = scalar_lea.sflag [#allocation6], 1
  %1062 = vsyncmov %s1061
  %s1063 = vpop.sfrf %1062
  %p1064 = scmp.eq.s32.totalorder %s1063, 0
  %p1065 = pneg %p1064
  %1067 = shalt.err (%p1065)
  %s1068 = scalar_lea.sflag [#allocation6], 2
  %1069 = vsyncmov %s1068
  %s1070 = vpop.sfrf %1069
  %p1071 = scmp.eq.s32.totalorder %s1070, 0
  %p1072 = pneg %p1071
  %1074 = shalt.err (%p1072)
  %s1075 = scalar_lea.sflag [#allocation6], 3
  %1076 = vsyncmov %s1075
  %s1077 = vpop.sfrf %1076
  %p1078 = scmp.eq.s32.totalorder %s1077, 0
  %p1079 = pneg %p1078
  %1081 = shalt.err (%p1079)
  %s1082 = scalar_lea.sflag [#allocation6], 4
  %1083 = vsyncmov %s1082
  %s1084 = vpop.sfrf %1083
  %p1085 = scmp.eq.s32.totalorder %s1084, 0
  %p1086 = pneg %p1085
  %1088 = shalt.err (%p1086)
  %s1089 = scalar_lea.sflag [#allocation6], 5
  %1090 = vsyncmov %s1089
  %s1091 = vpop.sfrf %1090
  %p1092 = scmp.eq.s32.totalorder %s1091, 0
  %p1093 = pneg %p1092
  %1095 = shalt.err (%p1093)
  %s1096 = scalar_lea.sflag [#allocation6], 6
  %1097 = vsyncmov %s1096
  %s1098 = vpop.sfrf %1097
  %p1099 = scmp.eq.s32.totalorder %s1098, 0
  %p1100 = pneg %p1099
  %1102 = shalt.err (%p1100)
  %s1103 = scalar_lea.sflag [#allocation6], 7
  %1104 = vsyncmov %s1103
  %s1105 = vpop.sfrf %1104
  %p1106 = scmp.eq.s32.totalorder %s1105, 0
  %p1107 = pneg %p1106
  %1109 = shalt.err (%p1107)
  %1110 = vsyncmov [#allocation7]
  %s1111 = vpop.sfrf %1110
  %p1112 = scmp.eq.s32.totalorder %s1111, 0
  %p1113 = pneg %p1112
  %1115 = shalt.err (%p1113)
  %s1116 = scalar_lea.sflag [#allocation7], 1
  %1117 = vsyncmov %s1116
  %s1118 = vpop.sfrf %1117
  %p1119 = scmp.eq.s32.totalorder %s1118, 0
  %p1120 = pneg %p1119
  %1122 = shalt.err (%p1120)
  %s1123 = scalar_lea.sflag [#allocation7], 2
  %1124 = vsyncmov %s1123
  %s1125 = vpop.sfrf %1124
  %p1126 = scmp.eq.s32.totalorder %s1125, 0
  %p1127 = pneg %p1126
  %1129 = shalt.err (%p1127)
  %s1130 = scalar_lea.sflag [#allocation7], 3
  %1131 = vsyncmov %s1130
  %s1132 = vpop.sfrf %1131
  %p1133 = scmp.eq.s32.totalorder %s1132, 0
  %p1134 = pneg %p1133
  %1136 = shalt.err (%p1134)
  %s1137 = scalar_lea.sflag [#allocation7], 4
  %1138 = vsyncmov %s1137
  %s1139 = vpop.sfrf %1138
  %p1140 = scmp.eq.s32.totalorder %s1139, 0
  %p1141 = pneg %p1140
  %1143 = shalt.err (%p1141)
  %s1144 = scalar_lea.sflag [#allocation7], 5
  %1145 = vsyncmov %s1144
  %s1146 = vpop.sfrf %1145
  %p1147 = scmp.eq.s32.totalorder %s1146, 0
  %p1148 = pneg %p1147
  %1150 = shalt.err (%p1148)
  %s1151 = scalar_lea.sflag [#allocation7], 6
  %1152 = vsyncmov %s1151
  %s1153 = vpop.sfrf %1152
  %p1154 = scmp.eq.s32.totalorder %s1153, 0
  %p1155 = pneg %p1154
  %1157 = shalt.err (%p1155)
  %s1158 = scalar_lea.sflag [#allocation7], 7
  %1159 = vsyncmov %s1158
  %s1160 = vpop.sfrf %1159
  %p1161 = scmp.eq.s32.totalorder %s1160, 0
  %p1162 = pneg %p1161
  %1164 = shalt.err (%p1162)
  %s1165 = scalar_lea.sflag [#allocation7], 8
  %1166 = vsyncmov %s1165
  %s1167 = vpop.sfrf %1166
  %p1168 = scmp.eq.s32.totalorder %s1167, 0
  %p1169 = pneg %p1168
  %1171 = shalt.err (%p1169)
  %s1172 = scalar_lea.sflag [#allocation7], 9
  %1173 = vsyncmov %s1172
  %s1174 = vpop.sfrf %1173
  %p1175 = scmp.eq.s32.totalorder %s1174, 0
  %p1176 = pneg %p1175
  %1178 = shalt.err (%p1176)
  %s1179 = scalar_lea.sflag [#allocation7], 10
  %1180 = vsyncmov %s1179
  %s1181 = vpop.sfrf %1180
  %p1182 = scmp.eq.s32.totalorder %s1181, 0
  %p1183 = pneg %p1182
  %1185 = shalt.err (%p1183)
  %s1186 = scalar_lea.sflag [#allocation7], 11
  %1187 = vsyncmov %s1186
  %s1188 = vpop.sfrf %1187
  %p1189 = scmp.eq.s32.totalorder %s1188, 0
  %p1190 = pneg %p1189
  %1192 = shalt.err (%p1190)
  %s1193 = scalar_lea.sflag [#allocation7], 12
  %1194 = vsyncmov %s1193
  %s1195 = vpop.sfrf %1194
  %p1196 = scmp.eq.s32.totalorder %s1195, 0
  %p1197 = pneg %p1196
  %1199 = shalt.err (%p1197)
  %s1200 = scalar_lea.sflag [#allocation7], 13
  %1201 = vsyncmov %s1200
  %s1202 = vpop.sfrf %1201
  %p1203 = scmp.eq.s32.totalorder %s1202, 0
  %p1204 = pneg %p1203
  %1206 = shalt.err (%p1204)
  %s1207 = scalar_lea.sflag [#allocation7], 14
  %1208 = vsyncmov %s1207
  %s1209 = vpop.sfrf %1208
  %p1210 = scmp.eq.s32.totalorder %s1209, 0
  %p1211 = pneg %p1210
  %1213 = shalt.err (%p1211)
  %s1214 = scalar_lea.sflag [#allocation7], 15
  %1215 = vsyncmov %s1214
  %s1216 = vpop.sfrf %1215
  %p1217 = scmp.eq.s32.totalorder %s1216, 0
  %p1218 = pneg %p1217
  %1220 = shalt.err (%p1218)
  %s1221 = scalar_lea.sflag [#allocation7], 16
  %1222 = vsyncmov %s1221
  %s1223 = vpop.sfrf %1222
  %p1224 = scmp.eq.s32.totalorder %s1223, 0
  %p1225 = pneg %p1224
  %1227 = shalt.err (%p1225)
  %s1228 = scalar_lea.sflag [#allocation7], 17
  %1229 = vsyncmov %s1228
  %s1230 = vpop.sfrf %1229
  %p1231 = scmp.eq.s32.totalorder %s1230, 0
  %p1232 = pneg %p1231
  %1234 = shalt.err (%p1232)
  %s1235 = scalar_lea.sflag [#allocation7], 18
  %1236 = vsyncmov %s1235
  %s1237 = vpop.sfrf %1236
  %p1238 = scmp.eq.s32.totalorder %s1237, 0
  %p1239 = pneg %p1238
  %1241 = shalt.err (%p1239)
  %s1242 = scalar_lea.sflag [#allocation7], 19
  %1243 = vsyncmov %s1242
  %s1244 = vpop.sfrf %1243
  %p1245 = scmp.eq.s32.totalorder %s1244, 0
  %p1246 = pneg %p1245
  %1248 = shalt.err (%p1246)
  %s1249 = scalar_lea.sflag [#allocation7], 20
  %1250 = vsyncmov %s1249
  %s1251 = vpop.sfrf %1250
  %p1252 = scmp.eq.s32.totalorder %s1251, 0
  %p1253 = pneg %p1252
  %1255 = shalt.err (%p1253)
  %s1256 = scalar_lea.sflag [#allocation7], 21
  %1257 = vsyncmov %s1256
  %s1258 = vpop.sfrf %1257
  %p1259 = scmp.eq.s32.totalorder %s1258, 0
  %p1260 = pneg %p1259
  %1262 = shalt.err (%p1260)
  %s1263 = scalar_lea.sflag [#allocation7], 22
  %1264 = vsyncmov %s1263
  %s1265 = vpop.sfrf %1264
  %p1266 = scmp.eq.s32.totalorder %s1265, 0
  %p1267 = pneg %p1266
  %1269 = shalt.err (%p1267)
  %s1270 = scalar_lea.sflag [#allocation7], 23
  %1271 = vsyncmov %s1270
  %s1272 = vpop.sfrf %1271
  %p1273 = scmp.eq.s32.totalorder %s1272, 0
  %p1274 = pneg %p1273
  %1276 = shalt.err (%p1274)
  %s1277 = scalar_lea.sflag [#allocation7], 24
  %1278 = vsyncmov %s1277
  %s1279 = vpop.sfrf %1278
  %p1280 = scmp.eq.s32.totalorder %s1279, 0
  %p1281 = pneg %p1280
  %1283 = shalt.err (%p1281)
  %s1284 = scalar_lea.sflag [#allocation7], 25
  %1285 = vsyncmov %s1284
  %s1286 = vpop.sfrf %1285
  %p1287 = scmp.eq.s32.totalorder %s1286, 0
  %p1288 = pneg %p1287
  %1290 = shalt.err (%p1288)
  %s1291 = scalar_lea.sflag [#allocation7], 26
  %1292 = vsyncmov %s1291
  %s1293 = vpop.sfrf %1292
  %p1294 = scmp.eq.s32.totalorder %s1293, 0
  %p1295 = pneg %p1294
  %1297 = shalt.err (%p1295)
  %s1298 = scalar_lea.sflag [#allocation7], 27
  %1299 = vsyncmov %s1298
  %s1300 = vpop.sfrf %1299
  %p1301 = scmp.eq.s32.totalorder %s1300, 0
  %p1302 = pneg %p1301
  %1304 = shalt.err (%p1302)
  %s1305 = scalar_lea.sflag [#allocation7], 28
  %1306 = vsyncmov %s1305
  %s1307 = vpop.sfrf %1306
  %p1308 = scmp.eq.s32.totalorder %s1307, 0
  %p1309 = pneg %p1308
  %1311 = shalt.err (%p1309)
  %s1312 = scalar_lea.sflag [#allocation7], 29
  %1313 = vsyncmov %s1312
  %s1314 = vpop.sfrf %1313
  %p1315 = scmp.eq.s32.totalorder %s1314, 0
  %p1316 = pneg %p1315
  %1318 = shalt.err (%p1316)
  %s1319 = scalar_lea.sflag [#allocation7], 30
  %1320 = vsyncmov %s1319
  %s1321 = vpop.sfrf %1320
  %p1322 = scmp.eq.s32.totalorder %s1321, 0
  %p1323 = pneg %p1322
  %1325 = shalt.err (%p1323)
  %s1326 = scalar_lea.sflag [#allocation7], 31
  %1327 = vsyncmov %s1326
  %s1328 = vpop.sfrf %1327
  %p1329 = scmp.eq.s32.totalorder %s1328, 0
  %p1330 = pneg %p1329
  %1332 = shalt.err (%p1330)

</llo_original>
